<compile_context>
chip_gen: v7x
topology: tpu7x:2x2x1
jax: 0.10.0
libtpu: 0.0.40
codegen_flags: <defaults>
</compile_context>

<pallas_src>
import jax
import jax.numpy as jnp
import numpy as np
from jax.experimental import pallas as pl
from jax.experimental.pallas import tpu as pltpu

_MAX_V_BLK = 1024


def _round_up(x, m):
    return (x + m - 1) // m * m


def _gram_kernel(bt_ref, out_ref):
    """Per-vocab Gram M_v = Q_v^H Q_v, vocabulary on the lane axis.

    bt_ref : (d, 2d, V_BLK) f32.  bt[k, j,   v] = Re(Q_v[k, j])  (j < d)
                                  bt[k, d+j, v] = Im(Q_v[k, j])  (j < d)
    out_ref: (2*d*d, V_BLK) f32.  out[i*d+j,     v] = Re(M_v[i, j])
                                  out[d*d+i*d+j, v] = Im(M_v[i, j])
    """
    d = bt_ref.shape[0]
    dd = d * d
    # Fully unrolled (d is tiny).  All math is on (d, V_BLK)/(1, V_BLK) tiles:
    # pure VPU work, no MXU pushes/pops, no tile-crossing relayouts.
    for i in range(d):
        re_i = None
        im_i = None
        for k in range(d):
            b_k = bt_ref[k]                     # (2d, V_BLK)
            qr_k = b_k[:d, :]                   # Re(Q[k, :])   (d, V_BLK)
            qi_k = b_k[d:, :]                   # Im(Q[k, :])   (d, V_BLK)
            a_r = b_k[i:i + 1, :]               # Re(Q[k, i])   (1, V_BLK)
            a_i = b_k[d + i:d + i + 1, :]       # Im(Q[k, i])   (1, V_BLK)
            t_re = a_r * qr_k + a_i * qi_k      # conj(Q[k,i]) * Q[k,:]  (real)
            t_im = a_r * qi_k - a_i * qr_k      #                        (imag)
            re_i = t_re if re_i is None else re_i + t_re
            im_i = t_im if im_i is None else im_i + t_im
        # Aligned 8-sublane, full-lane stores; output stays vocab-on-lanes.
        out_ref[i * d:(i + 1) * d, :] = re_i
        out_ref[dd + i * d:dd + (i + 1) * d, :] = im_i


def quantum_embed_forward(A, token):
    """QuantumEmbed.forward:
       Q = qr(A.reshape(-1, d)).Q.reshape(A.shape);  M = Q^H @ Q;  return M[token]
       A: (voc, d, d) complex64 parameter; token: 1-D int array of token ids."""
    token = jnp.asarray(token, dtype=jnp.int32)
    if token.shape[0] == 0:
        return None   # matches the PyTorch module (returns None for empty input)
    voc, d, _ = A.shape

    # TODO(synk): complex QR factorization has no clean Pallas equivalent; kept in JAX.
    # NOTE: M = Q^H Q is not invariant to the QR column-phase convention, so values
    # may differ from torch.linalg.qr while both remain valid decompositions.
    Q = jnp.linalg.qr(A.reshape(-1, d))[0].reshape(A.shape)          # (voc, d, d) c64

    # Pack [Re | Im] columns and move the vocabulary to the last (lane) axis.
    Bt = jnp.concatenate(
        [jnp.real(Q).astype(jnp.float32), jnp.imag(Q).astype(jnp.float32)],
        axis=-1)                                                      # (voc, d, 2d)
    Bt = jnp.transpose(Bt, (1, 2, 0))                                 # (d, 2d, voc)

    # Block the vocabulary (lane) axis.
    if voc <= _MAX_V_BLK:
        v_blk, voc_pad = voc, voc        # full-extent block: always legal, no pad copy
    else:
        v_blk = _MAX_V_BLK               # multiple of 128; >= 2 grid steps (v7x cores)
        voc_pad = _round_up(voc, v_blk)
        Bt = jnp.pad(Bt, ((0, 0), (0, 0), (0, voc_pad - voc)))

    flat = pl.pallas_call(
        _gram_kernel,
        out_shape=jax.ShapeDtypeStruct((2 * d * d, voc_pad), jnp.float32),
        grid=(voc_pad // v_blk,),
        in_specs=[pl.BlockSpec((d, 2 * d, v_blk), lambda i: (0, 0, i))],
        out_specs=pl.BlockSpec((2 * d * d, v_blk), lambda i: (0, i)),
        compiler_params=pltpu.CompilerParams(
            dimension_semantics=("parallel",),
            vmem_limit_bytes=32 * 1024 * 1024),
    )(Bt)

    # Gather the requested token columns first, then complexify only those rows.
    # (jnp.clip keeps untrusted ids in range; PyTorch indexing would raise instead.)
    token = jnp.clip(token, 0, voc - 1)
    flat_tok = jnp.take(flat, token, axis=1)                          # (2*d*d, n)
    dd = d * d
    mr = flat_tok[:dd, :].T.reshape(-1, d, d)
    mi = flat_tok[dd:, :].T.reshape(-1, d, d)
    return jax.lax.complex(mr, mi).astype(jnp.complex64)


if __name__ == "__main__":
    dim, voc, n_tokens = 8, 16, 8

    key = jax.random.PRNGKey(0)
    kr, ki, kt = jax.random.split(key, 3)
    # torch.randn(..., dtype=cfloat): real/imag each ~ N(0, 1/2)
    A = ((jax.random.normal(kr, (voc, dim, dim), jnp.float32)
          + 1j * jax.random.normal(ki, (voc, dim, dim), jnp.float32))
         / jnp.sqrt(2.0)).astype(jnp.complex64)
    token = jax.random.randint(kt, (n_tokens,), 0, voc, dtype=jnp.int32)
    assert int(jnp.max(token)) < voc, "token out of range"

    out = quantum_embed_forward(A, token)
    out = jax.block_until_ready(out)
    assert out.shape == (n_tokens, dim, dim) and out.dtype == jnp.complex64

    # Pure-JAX reference for correctness.
    Q = jnp.linalg.qr(A.reshape(-1, dim))[0].reshape(A.shape)
    M_ref = jnp.einsum('vki,vkj->vij', jnp.conj(Q), Q)[token]
    np.testing.assert_allclose(np.asarray(out), np.asarray(M_ref),
                               rtol=1e-4, atol=1e-4)

    print("KERNEL_OK")
</pallas_src>

<mosaic_0001>
module attributes {stable_mosaic.version = 11 : i64} {
  func.func @_gram_kernel(%arg0: i32, %arg1: memref<8x16x16xf32, #tpu.memory_space<vmem>>, %arg2: memref<128x16xf32, #tpu.memory_space<vmem>>) attributes {dimension_semantics = [#tpu.dimension_semantics<parallel>], iteration_bounds = array<i64: 1>, scalar_prefetch = 0 : i64, scratch_operands = 0 : i64, tpu.core_type = #tpu.core_type<tc>, window_params = [{transform_indices = @transform_0, window_bounds = array<i64: 8, 16, 16>}, {transform_indices = @transform_1, window_bounds = array<i64: 128, 16>}]} {
    %c0 = arith.constant 0 : index
    %c0_0 = arith.constant 0 : index
    %c0_1 = arith.constant 0 : index
    %0 = vector.load %arg1[%c0, %c0_0, %c0_1] : memref<8x16x16xf32, #tpu.memory_space<vmem>>, vector<1x16x16xf32>
    %1 = vector.shape_cast %0 : vector<1x16x16xf32> to vector<16x16xf32>
    %2 = vector.extract_strided_slice %1 {offsets = [0, 0], sizes = [8, 16], strides = [1, 1]} : vector<16x16xf32> to vector<8x16xf32>
    %3 = vector.extract_strided_slice %1 {offsets = [8, 0], sizes = [8, 16], strides = [1, 1]} : vector<16x16xf32> to vector<8x16xf32>
    %4 = vector.extract_strided_slice %1 {offsets = [0, 0], sizes = [1, 16], strides = [1, 1]} : vector<16x16xf32> to vector<1x16xf32>
    %5 = vector.extract_strided_slice %1 {offsets = [8, 0], sizes = [1, 16], strides = [1, 1]} : vector<16x16xf32> to vector<1x16xf32>
    %6 = vector.broadcast %4 : vector<1x16xf32> to vector<8x16xf32>
    %7 = arith.mulf %6, %2 : vector<8x16xf32>
    %8 = vector.broadcast %5 : vector<1x16xf32> to vector<8x16xf32>
    %9 = arith.mulf %8, %3 : vector<8x16xf32>
    %10 = arith.addf %7, %9 : vector<8x16xf32>
    %11 = vector.broadcast %4 : vector<1x16xf32> to vector<8x16xf32>
    %12 = arith.mulf %11, %3 : vector<8x16xf32>
    %13 = vector.broadcast %5 : vector<1x16xf32> to vector<8x16xf32>
    %14 = arith.mulf %13, %2 : vector<8x16xf32>
    %15 = arith.subf %12, %14 : vector<8x16xf32>
    %c1 = arith.constant 1 : index
    %c0_2 = arith.constant 0 : index
    %c0_3 = arith.constant 0 : index
    %16 = vector.load %arg1[%c1, %c0_2, %c0_3] : memref<8x16x16xf32, #tpu.memory_space<vmem>>, vector<1x16x16xf32>
    %17 = vector.shape_cast %16 : vector<1x16x16xf32> to vector<16x16xf32>
    %18 = vector.extract_strided_slice %17 {offsets = [0, 0], sizes = [8, 16], strides = [1, 1]} : vector<16x16xf32> to vector<8x16xf32>
    %19 = vector.extract_strided_slice %17 {offsets = [8, 0], sizes = [8, 16], strides = [1, 1]} : vector<16x16xf32> to vector<8x16xf32>
    %20 = vector.extract_strided_slice %17 {offsets = [0, 0], sizes = [1, 16], strides = [1, 1]} : vector<16x16xf32> to vector<1x16xf32>
    %21 = vector.extract_strided_slice %17 {offsets = [8, 0], sizes = [1, 16], strides = [1, 1]} : vector<16x16xf32> to vector<1x16xf32>
    %22 = vector.broadcast %20 : vector<1x16xf32> to vector<8x16xf32>
    %23 = arith.mulf %22, %18 : vector<8x16xf32>
    %24 = vector.broadcast %21 : vector<1x16xf32> to vector<8x16xf32>
    %25 = arith.mulf %24, %19 : vector<8x16xf32>
    %26 = arith.addf %23, %25 : vector<8x16xf32>
    %27 = vector.broadcast %20 : vector<1x16xf32> to vector<8x16xf32>
    %28 = arith.mulf %27, %19 : vector<8x16xf32>
    %29 = vector.broadcast %21 : vector<1x16xf32> to vector<8x16xf32>
    %30 = arith.mulf %29, %18 : vector<8x16xf32>
    %31 = arith.subf %28, %30 : vector<8x16xf32>
    %32 = arith.addf %10, %26 : vector<8x16xf32>
    %33 = arith.addf %15, %31 : vector<8x16xf32>
    %c2 = arith.constant 2 : index
    %c0_4 = arith.constant 0 : index
    %c0_5 = arith.constant 0 : index
    %34 = vector.load %arg1[%c2, %c0_4, %c0_5] : memref<8x16x16xf32, #tpu.memory_space<vmem>>, vector<1x16x16xf32>
    %35 = vector.shape_cast %34 : vector<1x16x16xf32> to vector<16x16xf32>
    %36 = vector.extract_strided_slice %35 {offsets = [0, 0], sizes = [8, 16], strides = [1, 1]} : vector<16x16xf32> to vector<8x16xf32>
    %37 = vector.extract_strided_slice %35 {offsets = [8, 0], sizes = [8, 16], strides = [1, 1]} : vector<16x16xf32> to vector<8x16xf32>
    %38 = vector.extract_strided_slice %35 {offsets = [0, 0], sizes = [1, 16], strides = [1, 1]} : vector<16x16xf32> to vector<1x16xf32>
    %39 = vector.extract_strided_slice %35 {offsets = [8, 0], sizes = [1, 16], strides = [1, 1]} : vector<16x16xf32> to vector<1x16xf32>
    %40 = vector.broadcast %38 : vector<1x16xf32> to vector<8x16xf32>
    %41 = arith.mulf %40, %36 : vector<8x16xf32>
    %42 = vector.broadcast %39 : vector<1x16xf32> to vector<8x16xf32>
    %43 = arith.mulf %42, %37 : vector<8x16xf32>
    %44 = arith.addf %41, %43 : vector<8x16xf32>
    %45 = vector.broadcast %38 : vector<1x16xf32> to vector<8x16xf32>
    %46 = arith.mulf %45, %37 : vector<8x16xf32>
    %47 = vector.broadcast %39 : vector<1x16xf32> to vector<8x16xf32>
    %48 = arith.mulf %47, %36 : vector<8x16xf32>
    %49 = arith.subf %46, %48 : vector<8x16xf32>
    %50 = arith.addf %32, %44 : vector<8x16xf32>
    %51 = arith.addf %33, %49 : vector<8x16xf32>
    %c3 = arith.constant 3 : index
    %c0_6 = arith.constant 0 : index
    %c0_7 = arith.constant 0 : index
    %52 = vector.load %arg1[%c3, %c0_6, %c0_7] : memref<8x16x16xf32, #tpu.memory_space<vmem>>, vector<1x16x16xf32>
    %53 = vector.shape_cast %52 : vector<1x16x16xf32> to vector<16x16xf32>
    %54 = vector.extract_strided_slice %53 {offsets = [0, 0], sizes = [8, 16], strides = [1, 1]} : vector<16x16xf32> to vector<8x16xf32>
    %55 = vector.extract_strided_slice %53 {offsets = [8, 0], sizes = [8, 16], strides = [1, 1]} : vector<16x16xf32> to vector<8x16xf32>
    %56 = vector.extract_strided_slice %53 {offsets = [0, 0], sizes = [1, 16], strides = [1, 1]} : vector<16x16xf32> to vector<1x16xf32>
    %57 = vector.extract_strided_slice %53 {offsets = [8, 0], sizes = [1, 16], strides = [1, 1]} : vector<16x16xf32> to vector<1x16xf32>
    %58 = vector.broadcast %56 : vector<1x16xf32> to vector<8x16xf32>
    %59 = arith.mulf %58, %54 : vector<8x16xf32>
    %60 = vector.broadcast %57 : vector<1x16xf32> to vector<8x16xf32>
    %61 = arith.mulf %60, %55 : vector<8x16xf32>
    %62 = arith.addf %59, %61 : vector<8x16xf32>
    %63 = vector.broadcast %56 : vector<1x16xf32> to vector<8x16xf32>
    %64 = arith.mulf %63, %55 : vector<8x16xf32>
    %65 = vector.broadcast %57 : vector<1x16xf32> to vector<8x16xf32>
    %66 = arith.mulf %65, %54 : vector<8x16xf32>
    %67 = arith.subf %64, %66 : vector<8x16xf32>
    %68 = arith.addf %50, %62 : vector<8x16xf32>
    %69 = arith.addf %51, %67 : vector<8x16xf32>
    %c4 = arith.constant 4 : index
    %c0_8 = arith.constant 0 : index
    %c0_9 = arith.constant 0 : index
    %70 = vector.load %arg1[%c4, %c0_8, %c0_9] : memref<8x16x16xf32, #tpu.memory_space<vmem>>, vector<1x16x16xf32>
    %71 = vector.shape_cast %70 : vector<1x16x16xf32> to vector<16x16xf32>
    %72 = vector.extract_strided_slice %71 {offsets = [0, 0], sizes = [8, 16], strides = [1, 1]} : vector<16x16xf32> to vector<8x16xf32>
    %73 = vector.extract_strided_slice %71 {offsets = [8, 0], sizes = [8, 16], strides = [1, 1]} : vector<16x16xf32> to vector<8x16xf32>
    %74 = vector.extract_strided_slice %71 {offsets = [0, 0], sizes = [1, 16], strides = [1, 1]} : vector<16x16xf32> to vector<1x16xf32>
    %75 = vector.extract_strided_slice %71 {offsets = [8, 0], sizes = [1, 16], strides = [1, 1]} : vector<16x16xf32> to vector<1x16xf32>
    %76 = vector.broadcast %74 : vector<1x16xf32> to vector<8x16xf32>
    %77 = arith.mulf %76, %72 : vector<8x16xf32>
    %78 = vector.broadcast %75 : vector<1x16xf32> to vector<8x16xf32>
    %79 = arith.mulf %78, %73 : vector<8x16xf32>
    %80 = arith.addf %77, %79 : vector<8x16xf32>
    %81 = vector.broadcast %74 : vector<1x16xf32> to vector<8x16xf32>
    %82 = arith.mulf %81, %73 : vector<8x16xf32>
    %83 = vector.broadcast %75 : vector<1x16xf32> to vector<8x16xf32>
    %84 = arith.mulf %83, %72 : vector<8x16xf32>
    %85 = arith.subf %82, %84 : vector<8x16xf32>
    %86 = arith.addf %68, %80 : vector<8x16xf32>
    %87 = arith.addf %69, %85 : vector<8x16xf32>
    %c5 = arith.constant 5 : index
    %c0_10 = arith.constant 0 : index
    %c0_11 = arith.constant 0 : index
    %88 = vector.load %arg1[%c5, %c0_10, %c0_11] : memref<8x16x16xf32, #tpu.memory_space<vmem>>, vector<1x16x16xf32>
    %89 = vector.shape_cast %88 : vector<1x16x16xf32> to vector<16x16xf32>
    %90 = vector.extract_strided_slice %89 {offsets = [0, 0], sizes = [8, 16], strides = [1, 1]} : vector<16x16xf32> to vector<8x16xf32>
    %91 = vector.extract_strided_slice %89 {offsets = [8, 0], sizes = [8, 16], strides = [1, 1]} : vector<16x16xf32> to vector<8x16xf32>
    %92 = vector.extract_strided_slice %89 {offsets = [0, 0], sizes = [1, 16], strides = [1, 1]} : vector<16x16xf32> to vector<1x16xf32>
    %93 = vector.extract_strided_slice %89 {offsets = [8, 0], sizes = [1, 16], strides = [1, 1]} : vector<16x16xf32> to vector<1x16xf32>
    %94 = vector.broadcast %92 : vector<1x16xf32> to vector<8x16xf32>
    %95 = arith.mulf %94, %90 : vector<8x16xf32>
    %96 = vector.broadcast %93 : vector<1x16xf32> to vector<8x16xf32>
    %97 = arith.mulf %96, %91 : vector<8x16xf32>
    %98 = arith.addf %95, %97 : vector<8x16xf32>
    %99 = vector.broadcast %92 : vector<1x16xf32> to vector<8x16xf32>
    %100 = arith.mulf %99, %91 : vector<8x16xf32>
    %101 = vector.broadcast %93 : vector<1x16xf32> to vector<8x16xf32>
    %102 = arith.mulf %101, %90 : vector<8x16xf32>
    %103 = arith.subf %100, %102 : vector<8x16xf32>
    %104 = arith.addf %86, %98 : vector<8x16xf32>
    %105 = arith.addf %87, %103 : vector<8x16xf32>
    %c6 = arith.constant 6 : index
    %c0_12 = arith.constant 0 : index
    %c0_13 = arith.constant 0 : index
    %106 = vector.load %arg1[%c6, %c0_12, %c0_13] : memref<8x16x16xf32, #tpu.memory_space<vmem>>, vector<1x16x16xf32>
    %107 = vector.shape_cast %106 : vector<1x16x16xf32> to vector<16x16xf32>
    %108 = vector.extract_strided_slice %107 {offsets = [0, 0], sizes = [8, 16], strides = [1, 1]} : vector<16x16xf32> to vector<8x16xf32>
    %109 = vector.extract_strided_slice %107 {offsets = [8, 0], sizes = [8, 16], strides = [1, 1]} : vector<16x16xf32> to vector<8x16xf32>
    %110 = vector.extract_strided_slice %107 {offsets = [0, 0], sizes = [1, 16], strides = [1, 1]} : vector<16x16xf32> to vector<1x16xf32>
    %111 = vector.extract_strided_slice %107 {offsets = [8, 0], sizes = [1, 16], strides = [1, 1]} : vector<16x16xf32> to vector<1x16xf32>
    %112 = vector.broadcast %110 : vector<1x16xf32> to vector<8x16xf32>
    %113 = arith.mulf %112, %108 : vector<8x16xf32>
    %114 = vector.broadcast %111 : vector<1x16xf32> to vector<8x16xf32>
    %115 = arith.mulf %114, %109 : vector<8x16xf32>
    %116 = arith.addf %113, %115 : vector<8x16xf32>
    %117 = vector.broadcast %110 : vector<1x16xf32> to vector<8x16xf32>
    %118 = arith.mulf %117, %109 : vector<8x16xf32>
    %119 = vector.broadcast %111 : vector<1x16xf32> to vector<8x16xf32>
    %120 = arith.mulf %119, %108 : vector<8x16xf32>
    %121 = arith.subf %118, %120 : vector<8x16xf32>
    %122 = arith.addf %104, %116 : vector<8x16xf32>
    %123 = arith.addf %105, %121 : vector<8x16xf32>
    %c7 = arith.constant 7 : index
    %c0_14 = arith.constant 0 : index
    %c0_15 = arith.constant 0 : index
    %124 = vector.load %arg1[%c7, %c0_14, %c0_15] : memref<8x16x16xf32, #tpu.memory_space<vmem>>, vector<1x16x16xf32>
    %125 = vector.shape_cast %124 : vector<1x16x16xf32> to vector<16x16xf32>
    %126 = vector.extract_strided_slice %125 {offsets = [0, 0], sizes = [8, 16], strides = [1, 1]} : vector<16x16xf32> to vector<8x16xf32>
    %127 = vector.extract_strided_slice %125 {offsets = [8, 0], sizes = [8, 16], strides = [1, 1]} : vector<16x16xf32> to vector<8x16xf32>
    %128 = vector.extract_strided_slice %125 {offsets = [0, 0], sizes = [1, 16], strides = [1, 1]} : vector<16x16xf32> to vector<1x16xf32>
    %129 = vector.extract_strided_slice %125 {offsets = [8, 0], sizes = [1, 16], strides = [1, 1]} : vector<16x16xf32> to vector<1x16xf32>
    %130 = vector.broadcast %128 : vector<1x16xf32> to vector<8x16xf32>
    %131 = arith.mulf %130, %126 : vector<8x16xf32>
    %132 = vector.broadcast %129 : vector<1x16xf32> to vector<8x16xf32>
    %133 = arith.mulf %132, %127 : vector<8x16xf32>
    %134 = arith.addf %131, %133 : vector<8x16xf32>
    %135 = vector.broadcast %128 : vector<1x16xf32> to vector<8x16xf32>
    %136 = arith.mulf %135, %127 : vector<8x16xf32>
    %137 = vector.broadcast %129 : vector<1x16xf32> to vector<8x16xf32>
    %138 = arith.mulf %137, %126 : vector<8x16xf32>
    %139 = arith.subf %136, %138 : vector<8x16xf32>
    %140 = arith.addf %122, %134 : vector<8x16xf32>
    %141 = arith.addf %123, %139 : vector<8x16xf32>
    %c0_16 = arith.constant 0 : index
    %c0_17 = arith.constant 0 : index
    %142 = vector.load %arg2[%c0_16, %c0_17] : memref<128x16xf32, #tpu.memory_space<vmem>>, vector<8x16xf32>
    tpu.vector_store %arg2[%c0_16, %c0_17], %140 {strides = array<i32>} : memref<128x16xf32, #tpu.memory_space<vmem>>, vector<8x16xf32>,
    %c64 = arith.constant 64 : index
    %c0_18 = arith.constant 0 : index
    %143 = vector.load %arg2[%c64, %c0_18] : memref<128x16xf32, #tpu.memory_space<vmem>>, vector<8x16xf32>
    tpu.vector_store %arg2[%c64, %c0_18], %141 {strides = array<i32>} : memref<128x16xf32, #tpu.memory_space<vmem>>, vector<8x16xf32>,
    %c0_19 = arith.constant 0 : index
    %c0_20 = arith.constant 0 : index
    %c0_21 = arith.constant 0 : index
    %144 = vector.load %arg1[%c0_19, %c0_20, %c0_21] : memref<8x16x16xf32, #tpu.memory_space<vmem>>, vector<1x16x16xf32>
    %145 = vector.shape_cast %144 : vector<1x16x16xf32> to vector<16x16xf32>
    %146 = vector.extract_strided_slice %145 {offsets = [0, 0], sizes = [8, 16], strides = [1, 1]} : vector<16x16xf32> to vector<8x16xf32>
    %147 = vector.extract_strided_slice %145 {offsets = [8, 0], sizes = [8, 16], strides = [1, 1]} : vector<16x16xf32> to vector<8x16xf32>
    %148 = vector.extract_strided_slice %145 {offsets = [1, 0], sizes = [1, 16], strides = [1, 1]} : vector<16x16xf32> to vector<1x16xf32>
    %149 = vector.extract_strided_slice %145 {offsets = [9, 0], sizes = [1, 16], strides = [1, 1]} : vector<16x16xf32> to vector<1x16xf32>
    %150 = vector.broadcast %148 : vector<1x16xf32> to vector<8x16xf32>
    %151 = arith.mulf %150, %146 : vector<8x16xf32>
    %152 = vector.broadcast %149 : vector<1x16xf32> to vector<8x16xf32>
    %153 = arith.mulf %152, %147 : vector<8x16xf32>
    %154 = arith.addf %151, %153 : vector<8x16xf32>
    %155 = vector.broadcast %148 : vector<1x16xf32> to vector<8x16xf32>
    %156 = arith.mulf %155, %147 : vector<8x16xf32>
    %157 = vector.broadcast %149 : vector<1x16xf32> to vector<8x16xf32>
    %158 = arith.mulf %157, %146 : vector<8x16xf32>
    %159 = arith.subf %156, %158 : vector<8x16xf32>
    %c1_22 = arith.constant 1 : index
    %c0_23 = arith.constant 0 : index
    %c0_24 = arith.constant 0 : index
    %160 = vector.load %arg1[%c1_22, %c0_23, %c0_24] : memref<8x16x16xf32, #tpu.memory_space<vmem>>, vector<1x16x16xf32>
    %161 = vector.shape_cast %160 : vector<1x16x16xf32> to vector<16x16xf32>
    %162 = vector.extract_strided_slice %161 {offsets = [0, 0], sizes = [8, 16], strides = [1, 1]} : vector<16x16xf32> to vector<8x16xf32>
    %163 = vector.extract_strided_slice %161 {offsets = [8, 0], sizes = [8, 16], strides = [1, 1]} : vector<16x16xf32> to vector<8x16xf32>
    %164 = vector.extract_strided_slice %161 {offsets = [1, 0], sizes = [1, 16], strides = [1, 1]} : vector<16x16xf32> to vector<1x16xf32>
    %165 = vector.extract_strided_slice %161 {offsets = [9, 0], sizes = [1, 16], strides = [1, 1]} : vector<16x16xf32> to vector<1x16xf32>
    %166 = vector.broadcast %164 : vector<1x16xf32> to vector<8x16xf32>
    %167 = arith.mulf %166, %162 : vector<8x16xf32>
    %168 = vector.broadcast %165 : vector<1x16xf32> to vector<8x16xf32>
    %169 = arith.mulf %168, %163 : vector<8x16xf32>
    %170 = arith.addf %167, %169 : vector<8x16xf32>
    %171 = vector.broadcast %164 : vector<1x16xf32> to vector<8x16xf32>
    %172 = arith.mulf %171, %163 : vector<8x16xf32>
    %173 = vector.broadcast %165 : vector<1x16xf32> to vector<8x16xf32>
    %174 = arith.mulf %173, %162 : vector<8x16xf32>
    %175 = arith.subf %172, %174 : vector<8x16xf32>
    %176 = arith.addf %154, %170 : vector<8x16xf32>
    %177 = arith.addf %159, %175 : vector<8x16xf32>
    %c2_25 = arith.constant 2 : index
    %c0_26 = arith.constant 0 : index
    %c0_27 = arith.constant 0 : index
    %178 = vector.load %arg1[%c2_25, %c0_26, %c0_27] : memref<8x16x16xf32, #tpu.memory_space<vmem>>, vector<1x16x16xf32>
    %179 = vector.shape_cast %178 : vector<1x16x16xf32> to vector<16x16xf32>
    %180 = vector.extract_strided_slice %179 {offsets = [0, 0], sizes = [8, 16], strides = [1, 1]} : vector<16x16xf32> to vector<8x16xf32>
    %181 = vector.extract_strided_slice %179 {offsets = [8, 0], sizes = [8, 16], strides = [1, 1]} : vector<16x16xf32> to vector<8x16xf32>
    %182 = vector.extract_strided_slice %179 {offsets = [1, 0], sizes = [1, 16], strides = [1, 1]} : vector<16x16xf32> to vector<1x16xf32>
    %183 = vector.extract_strided_slice %179 {offsets = [9, 0], sizes = [1, 16], strides = [1, 1]} : vector<16x16xf32> to vector<1x16xf32>
    %184 = vector.broadcast %182 : vector<1x16xf32> to vector<8x16xf32>
    %185 = arith.mulf %184, %180 : vector<8x16xf32>
    %186 = vector.broadcast %183 : vector<1x16xf32> to vector<8x16xf32>
    %187 = arith.mulf %186, %181 : vector<8x16xf32>
    %188 = arith.addf %185, %187 : vector<8x16xf32>
    %189 = vector.broadcast %182 : vector<1x16xf32> to vector<8x16xf32>
    %190 = arith.mulf %189, %181 : vector<8x16xf32>
    %191 = vector.broadcast %183 : vector<1x16xf32> to vector<8x16xf32>
    %192 = arith.mulf %191, %180 : vector<8x16xf32>
    %193 = arith.subf %190, %192 : vector<8x16xf32>
    %194 = arith.addf %176, %188 : vector<8x16xf32>
    %195 = arith.addf %177, %193 : vector<8x16xf32>
    %c3_28 = arith.constant 3 : index
    %c0_29 = arith.constant 0 : index
    %c0_30 = arith.constant 0 : index
    %196 = vector.load %arg1[%c3_28, %c0_29, %c0_30] : memref<8x16x16xf32, #tpu.memory_space<vmem>>, vector<1x16x16xf32>
    %197 = vector.shape_cast %196 : vector<1x16x16xf32> to vector<16x16xf32>
    %198 = vector.extract_strided_slice %197 {offsets = [0, 0], sizes = [8, 16], strides = [1, 1]} : vector<16x16xf32> to vector<8x16xf32>
    %199 = vector.extract_strided_slice %197 {offsets = [8, 0], sizes = [8, 16], strides = [1, 1]} : vector<16x16xf32> to vector<8x16xf32>
    %200 = vector.extract_strided_slice %197 {offsets = [1, 0], sizes = [1, 16], strides = [1, 1]} : vector<16x16xf32> to vector<1x16xf32>
    %201 = vector.extract_strided_slice %197 {offsets = [9, 0], sizes = [1, 16], strides = [1, 1]} : vector<16x16xf32> to vector<1x16xf32>
    %202 = vector.broadcast %200 : vector<1x16xf32> to vector<8x16xf32>
    %203 = arith.mulf %202, %198 : vector<8x16xf32>
    %204 = vector.broadcast %201 : vector<1x16xf32> to vector<8x16xf32>
    %205 = arith.mulf %204, %199 : vector<8x16xf32>
    %206 = arith.addf %203, %205 : vector<8x16xf32>
    %207 = vector.broadcast %200 : vector<1x16xf32> to vector<8x16xf32>
    %208 = arith.mulf %207, %199 : vector<8x16xf32>
    %209 = vector.broadcast %201 : vector<1x16xf32> to vector<8x16xf32>
    %210 = arith.mulf %209, %198 : vector<8x16xf32>
    %211 = arith.subf %208, %210 : vector<8x16xf32>
    %212 = arith.addf %194, %206 : vector<8x16xf32>
    %213 = arith.addf %195, %211 : vector<8x16xf32>
    %c4_31 = arith.constant 4 : index
    %c0_32 = arith.constant 0 : index
    %c0_33 = arith.constant 0 : index
    %214 = vector.load %arg1[%c4_31, %c0_32, %c0_33] : memref<8x16x16xf32, #tpu.memory_space<vmem>>, vector<1x16x16xf32>
    %215 = vector.shape_cast %214 : vector<1x16x16xf32> to vector<16x16xf32>
    %216 = vector.extract_strided_slice %215 {offsets = [0, 0], sizes = [8, 16], strides = [1, 1]} : vector<16x16xf32> to vector<8x16xf32>
    %217 = vector.extract_strided_slice %215 {offsets = [8, 0], sizes = [8, 16], strides = [1, 1]} : vector<16x16xf32> to vector<8x16xf32>
    %218 = vector.extract_strided_slice %215 {offsets = [1, 0], sizes = [1, 16], strides = [1, 1]} : vector<16x16xf32> to vector<1x16xf32>
    %219 = vector.extract_strided_slice %215 {offsets = [9, 0], sizes = [1, 16], strides = [1, 1]} : vector<16x16xf32> to vector<1x16xf32>
    %220 = vector.broadcast %218 : vector<1x16xf32> to vector<8x16xf32>
    %221 = arith.mulf %220, %216 : vector<8x16xf32>
    %222 = vector.broadcast %219 : vector<1x16xf32> to vector<8x16xf32>
    %223 = arith.mulf %222, %217 : vector<8x16xf32>
    %224 = arith.addf %221, %223 : vector<8x16xf32>
    %225 = vector.broadcast %218 : vector<1x16xf32> to vector<8x16xf32>
    %226 = arith.mulf %225, %217 : vector<8x16xf32>
    %227 = vector.broadcast %219 : vector<1x16xf32> to vector<8x16xf32>
    %228 = arith.mulf %227, %216 : vector<8x16xf32>
    %229 = arith.subf %226, %228 : vector<8x16xf32>
    %230 = arith.addf %212, %224 : vector<8x16xf32>
    %231 = arith.addf %213, %229 : vector<8x16xf32>
    %c5_34 = arith.constant 5 : index
    %c0_35 = arith.constant 0 : index
    %c0_36 = arith.constant 0 : index
    %232 = vector.load %arg1[%c5_34, %c0_35, %c0_36] : memref<8x16x16xf32, #tpu.memory_space<vmem>>, vector<1x16x16xf32>
    %233 = vector.shape_cast %232 : vector<1x16x16xf32> to vector<16x16xf32>
    %234 = vector.extract_strided_slice %233 {offsets = [0, 0], sizes = [8, 16], strides = [1, 1]} : vector<16x16xf32> to vector<8x16xf32>
    %235 = vector.extract_strided_slice %233 {offsets = [8, 0], sizes = [8, 16], strides = [1, 1]} : vector<16x16xf32> to vector<8x16xf32>
    %236 = vector.extract_strided_slice %233 {offsets = [1, 0], sizes = [1, 16], strides = [1, 1]} : vector<16x16xf32> to vector<1x16xf32>
    %237 = vector.extract_strided_slice %233 {offsets = [9, 0], sizes = [1, 16], strides = [1, 1]} : vector<16x16xf32> to vector<1x16xf32>
    %238 = vector.broadcast %236 : vector<1x16xf32> to vector<8x16xf32>
    %239 = arith.mulf %238, %234 : vector<8x16xf32>
    %240 = vector.broadcast %237 : vector<1x16xf32> to vector<8x16xf32>
    %241 = arith.mulf %240, %235 : vector<8x16xf32>
    %242 = arith.addf %239, %241 : vector<8x16xf32>
    %243 = vector.broadcast %236 : vector<1x16xf32> to vector<8x16xf32>
    %244 = arith.mulf %243, %235 : vector<8x16xf32>
    %245 = vector.broadcast %237 : vector<1x16xf32> to vector<8x16xf32>
    %246 = arith.mulf %245, %234 : vector<8x16xf32>
    %247 = arith.subf %244, %246 : vector<8x16xf32>
    %248 = arith.addf %230, %242 : vector<8x16xf32>
    %249 = arith.addf %231, %247 : vector<8x16xf32>
    %c6_37 = arith.constant 6 : index
    %c0_38 = arith.constant 0 : index
    %c0_39 = arith.constant 0 : index
    %250 = vector.load %arg1[%c6_37, %c0_38, %c0_39] : memref<8x16x16xf32, #tpu.memory_space<vmem>>, vector<1x16x16xf32>
    %251 = vector.shape_cast %250 : vector<1x16x16xf32> to vector<16x16xf32>
    %252 = vector.extract_strided_slice %251 {offsets = [0, 0], sizes = [8, 16], strides = [1, 1]} : vector<16x16xf32> to vector<8x16xf32>
    %253 = vector.extract_strided_slice %251 {offsets = [8, 0], sizes = [8, 16], strides = [1, 1]} : vector<16x16xf32> to vector<8x16xf32>
    %254 = vector.extract_strided_slice %251 {offsets = [1, 0], sizes = [1, 16], strides = [1, 1]} : vector<16x16xf32> to vector<1x16xf32>
    %255 = vector.extract_strided_slice %251 {offsets = [9, 0], sizes = [1, 16], strides = [1, 1]} : vector<16x16xf32> to vector<1x16xf32>
    %256 = vector.broadcast %254 : vector<1x16xf32> to vector<8x16xf32>
    %257 = arith.mulf %256, %252 : vector<8x16xf32>
    %258 = vector.broadcast %255 : vector<1x16xf32> to vector<8x16xf32>
    %259 = arith.mulf %258, %253 : vector<8x16xf32>
    %260 = arith.addf %257, %259 : vector<8x16xf32>
    %261 = vector.broadcast %254 : vector<1x16xf32> to vector<8x16xf32>
    %262 = arith.mulf %261, %253 : vector<8x16xf32>
    %263 = vector.broadcast %255 : vector<1x16xf32> to vector<8x16xf32>
    %264 = arith.mulf %263, %252 : vector<8x16xf32>
    %265 = arith.subf %262, %264 : vector<8x16xf32>
    %266 = arith.addf %248, %260 : vector<8x16xf32>
    %267 = arith.addf %249, %265 : vector<8x16xf32>
    %c7_40 = arith.constant 7 : index
    %c0_41 = arith.constant 0 : index
    %c0_42 = arith.constant 0 : index
    %268 = vector.load %arg1[%c7_40, %c0_41, %c0_42] : memref<8x16x16xf32, #tpu.memory_space<vmem>>, vector<1x16x16xf32>
    %269 = vector.shape_cast %268 : vector<1x16x16xf32> to vector<16x16xf32>
    %270 = vector.extract_strided_slice %269 {offsets = [0, 0], sizes = [8, 16], strides = [1, 1]} : vector<16x16xf32> to vector<8x16xf32>
    %271 = vector.extract_strided_slice %269 {offsets = [8, 0], sizes = [8, 16], strides = [1, 1]} : vector<16x16xf32> to vector<8x16xf32>
    %272 = vector.extract_strided_slice %269 {offsets = [1, 0], sizes = [1, 16], strides = [1, 1]} : vector<16x16xf32> to vector<1x16xf32>
    %273 = vector.extract_strided_slice %269 {offsets = [9, 0], sizes = [1, 16], strides = [1, 1]} : vector<16x16xf32> to vector<1x16xf32>
    %274 = vector.broadcast %272 : vector<1x16xf32> to vector<8x16xf32>
    %275 = arith.mulf %274, %270 : vector<8x16xf32>
    %276 = vector.broadcast %273 : vector<1x16xf32> to vector<8x16xf32>
    %277 = arith.mulf %276, %271 : vector<8x16xf32>
    %278 = arith.addf %275, %277 : vector<8x16xf32>
    %279 = vector.broadcast %272 : vector<1x16xf32> to vector<8x16xf32>
    %280 = arith.mulf %279, %271 : vector<8x16xf32>
    %281 = vector.broadcast %273 : vector<1x16xf32> to vector<8x16xf32>
    %282 = arith.mulf %281, %270 : vector<8x16xf32>
    %283 = arith.subf %280, %282 : vector<8x16xf32>
    %284 = arith.addf %266, %278 : vector<8x16xf32>
    %285 = arith.addf %267, %283 : vector<8x16xf32>
    %c8 = arith.constant 8 : index
    %c0_43 = arith.constant 0 : index
    %286 = vector.load %arg2[%c8, %c0_43] : memref<128x16xf32, #tpu.memory_space<vmem>>, vector<8x16xf32>
    tpu.vector_store %arg2[%c8, %c0_43], %284 {strides = array<i32>} : memref<128x16xf32, #tpu.memory_space<vmem>>, vector<8x16xf32>,
    %c72 = arith.constant 72 : index
    %c0_44 = arith.constant 0 : index
    %287 = vector.load %arg2[%c72, %c0_44] : memref<128x16xf32, #tpu.memory_space<vmem>>, vector<8x16xf32>
    tpu.vector_store %arg2[%c72, %c0_44], %285 {strides = array<i32>} : memref<128x16xf32, #tpu.memory_space<vmem>>, vector<8x16xf32>,
    %c0_45 = arith.constant 0 : index
    %c0_46 = arith.constant 0 : index
    %c0_47 = arith.constant 0 : index
    %288 = vector.load %arg1[%c0_45, %c0_46, %c0_47] : memref<8x16x16xf32, #tpu.memory_space<vmem>>, vector<1x16x16xf32>
    %289 = vector.shape_cast %288 : vector<1x16x16xf32> to vector<16x16xf32>
    %290 = vector.extract_strided_slice %289 {offsets = [0, 0], sizes = [8, 16], strides = [1, 1]} : vector<16x16xf32> to vector<8x16xf32>
    %291 = vector.extract_strided_slice %289 {offsets = [8, 0], sizes = [8, 16], strides = [1, 1]} : vector<16x16xf32> to vector<8x16xf32>
    %292 = vector.extract_strided_slice %289 {offsets = [2, 0], sizes = [1, 16], strides = [1, 1]} : vector<16x16xf32> to vector<1x16xf32>
    %293 = vector.extract_strided_slice %289 {offsets = [10, 0], sizes = [1, 16], strides = [1, 1]} : vector<16x16xf32> to vector<1x16xf32>
    %294 = vector.broadcast %292 : vector<1x16xf32> to vector<8x16xf32>
    %295 = arith.mulf %294, %290 : vector<8x16xf32>
    %296 = vector.broadcast %293 : vector<1x16xf32> to vector<8x16xf32>
    %297 = arith.mulf %296, %291 : vector<8x16xf32>
    %298 = arith.addf %295, %297 : vector<8x16xf32>
    %299 = vector.broadcast %292 : vector<1x16xf32> to vector<8x16xf32>
    %300 = arith.mulf %299, %291 : vector<8x16xf32>
    %301 = vector.broadcast %293 : vector<1x16xf32> to vector<8x16xf32>
    %302 = arith.mulf %301, %290 : vector<8x16xf32>
    %303 = arith.subf %300, %302 : vector<8x16xf32>
    %c1_48 = arith.constant 1 : index
    %c0_49 = arith.constant 0 : index
    %c0_50 = arith.constant 0 : index
    %304 = vector.load %arg1[%c1_48, %c0_49, %c0_50] : memref<8x16x16xf32, #tpu.memory_space<vmem>>, vector<1x16x16xf32>
    %305 = vector.shape_cast %304 : vector<1x16x16xf32> to vector<16x16xf32>
    %306 = vector.extract_strided_slice %305 {offsets = [0, 0], sizes = [8, 16], strides = [1, 1]} : vector<16x16xf32> to vector<8x16xf32>
    %307 = vector.extract_strided_slice %305 {offsets = [8, 0], sizes = [8, 16], strides = [1, 1]} : vector<16x16xf32> to vector<8x16xf32>
    %308 = vector.extract_strided_slice %305 {offsets = [2, 0], sizes = [1, 16], strides = [1, 1]} : vector<16x16xf32> to vector<1x16xf32>
    %309 = vector.extract_strided_slice %305 {offsets = [10, 0], sizes = [1, 16], strides = [1, 1]} : vector<16x16xf32> to vector<1x16xf32>
    %310 = vector.broadcast %308 : vector<1x16xf32> to vector<8x16xf32>
    %311 = arith.mulf %310, %306 : vector<8x16xf32>
    %312 = vector.broadcast %309 : vector<1x16xf32> to vector<8x16xf32>
    %313 = arith.mulf %312, %307 : vector<8x16xf32>
    %314 = arith.addf %311, %313 : vector<8x16xf32>
    %315 = vector.broadcast %308 : vector<1x16xf32> to vector<8x16xf32>
    %316 = arith.mulf %315, %307 : vector<8x16xf32>
    %317 = vector.broadcast %309 : vector<1x16xf32> to vector<8x16xf32>
    %318 = arith.mulf %317, %306 : vector<8x16xf32>
    %319 = arith.subf %316, %318 : vector<8x16xf32>
    %320 = arith.addf %298, %314 : vector<8x16xf32>
    %321 = arith.addf %303, %319 : vector<8x16xf32>
    %c2_51 = arith.constant 2 : index
    %c0_52 = arith.constant 0 : index
    %c0_53 = arith.constant 0 : index
    %322 = vector.load %arg1[%c2_51, %c0_52, %c0_53] : memref<8x16x16xf32, #tpu.memory_space<vmem>>, vector<1x16x16xf32>
    %323 = vector.shape_cast %322 : vector<1x16x16xf32> to vector<16x16xf32>
    %324 = vector.extract_strided_slice %323 {offsets = [0, 0], sizes = [8, 16], strides = [1, 1]} : vector<16x16xf32> to vector<8x16xf32>
    %325 = vector.extract_strided_slice %323 {offsets = [8, 0], sizes = [8, 16], strides = [1, 1]} : vector<16x16xf32> to vector<8x16xf32>
    %326 = vector.extract_strided_slice %323 {offsets = [2, 0], sizes = [1, 16], strides = [1, 1]} : vector<16x16xf32> to vector<1x16xf32>
    %327 = vector.extract_strided_slice %323 {offsets = [10, 0], sizes = [1, 16], strides = [1, 1]} : vector<16x16xf32> to vector<1x16xf32>
    %328 = vector.broadcast %326 : vector<1x16xf32> to vector<8x16xf32>
    %329 = arith.mulf %328, %324 : vector<8x16xf32>
    %330 = vector.broadcast %327 : vector<1x16xf32> to vector<8x16xf32>
    %331 = arith.mulf %330, %325 : vector<8x16xf32>
    %332 = arith.addf %329, %331 : vector<8x16xf32>
    %333 = vector.broadcast %326 : vector<1x16xf32> to vector<8x16xf32>
    %334 = arith.mulf %333, %325 : vector<8x16xf32>
    %335 = vector.broadcast %327 : vector<1x16xf32> to vector<8x16xf32>
    %336 = arith.mulf %335, %324 : vector<8x16xf32>
    %337 = arith.subf %334, %336 : vector<8x16xf32>
    %338 = arith.addf %320, %332 : vector<8x16xf32>
    %339 = arith.addf %321, %337 : vector<8x16xf32>
    %c3_54 = arith.constant 3 : index
    %c0_55 = arith.constant 0 : index
    %c0_56 = arith.constant 0 : index
    %340 = vector.load %arg1[%c3_54, %c0_55, %c0_56] : memref<8x16x16xf32, #tpu.memory_space<vmem>>, vector<1x16x16xf32>
    %341 = vector.shape_cast %340 : vector<1x16x16xf32> to vector<16x16xf32>
    %342 = vector.extract_strided_slice %341 {offsets = [0, 0], sizes = [8, 16], strides = [1, 1]} : vector<16x16xf32> to vector<8x16xf32>
    %343 = vector.extract_strided_slice %341 {offsets = [8, 0], sizes = [8, 16], strides = [1, 1]} : vector<16x16xf32> to vector<8x16xf32>
    %344 = vector.extract_strided_slice %341 {offsets = [2, 0], sizes = [1, 16], strides = [1, 1]} : vector<16x16xf32> to vector<1x16xf32>
    %345 = vector.extract_strided_slice %341 {offsets = [10, 0], sizes = [1, 16], strides = [1, 1]} : vector<16x16xf32> to vector<1x16xf32>
    %346 = vector.broadcast %344 : vector<1x16xf32> to vector<8x16xf32>
    %347 = arith.mulf %346, %342 : vector<8x16xf32>
    %348 = vector.broadcast %345 : vector<1x16xf32> to vector<8x16xf32>
    %349 = arith.mulf %348, %343 : vector<8x16xf32>
    %350 = arith.addf %347, %349 : vector<8x16xf32>
    %351 = vector.broadcast %344 : vector<1x16xf32> to vector<8x16xf32>
    %352 = arith.mulf %351, %343 : vector<8x16xf32>
    %353 = vector.broadcast %345 : vector<1x16xf32> to vector<8x16xf32>
    %354 = arith.mulf %353, %342 : vector<8x16xf32>
    %355 = arith.subf %352, %354 : vector<8x16xf32>
    %356 = arith.addf %338, %350 : vector<8x16xf32>
    %357 = arith.addf %339, %355 : vector<8x16xf32>
    %c4_57 = arith.constant 4 : index
    %c0_58 = arith.constant 0 : index
    %c0_59 = arith.constant 0 : index
    %358 = vector.load %arg1[%c4_57, %c0_58, %c0_59] : memref<8x16x16xf32, #tpu.memory_space<vmem>>, vector<1x16x16xf32>
    %359 = vector.shape_cast %358 : vector<1x16x16xf32> to vector<16x16xf32>
    %360 = vector.extract_strided_slice %359 {offsets = [0, 0], sizes = [8, 16], strides = [1, 1]} : vector<16x16xf32> to vector<8x16xf32>
    %361 = vector.extract_strided_slice %359 {offsets = [8, 0], sizes = [8, 16], strides = [1, 1]} : vector<16x16xf32> to vector<8x16xf32>
    %362 = vector.extract_strided_slice %359 {offsets = [2, 0], sizes = [1, 16], strides = [1, 1]} : vector<16x16xf32> to vector<1x16xf32>
    %363 = vector.extract_strided_slice %359 {offsets = [10, 0], sizes = [1, 16], strides = [1, 1]} : vector<16x16xf32> to vector<1x16xf32>
    %364 = vector.broadcast %362 : vector<1x16xf32> to vector<8x16xf32>
    %365 = arith.mulf %364, %360 : vector<8x16xf32>
    %366 = vector.broadcast %363 : vector<1x16xf32> to vector<8x16xf32>
    %367 = arith.mulf %366, %361 : vector<8x16xf32>
    %368 = arith.addf %365, %367 : vector<8x16xf32>
    %369 = vector.broadcast %362 : vector<1x16xf32> to vector<8x16xf32>
    %370 = arith.mulf %369, %361 : vector<8x16xf32>
    %371 = vector.broadcast %363 : vector<1x16xf32> to vector<8x16xf32>
    %372 = arith.mulf %371, %360 : vector<8x16xf32>
    %373 = arith.subf %370, %372 : vector<8x16xf32>
    %374 = arith.addf %356, %368 : vector<8x16xf32>
    %375 = arith.addf %357, %373 : vector<8x16xf32>
    %c5_60 = arith.constant 5 : index
    %c0_61 = arith.constant 0 : index
    %c0_62 = arith.constant 0 : index
    %376 = vector.load %arg1[%c5_60, %c0_61, %c0_62] : memref<8x16x16xf32, #tpu.memory_space<vmem>>, vector<1x16x16xf32>
    %377 = vector.shape_cast %376 : vector<1x16x16xf32> to vector<16x16xf32>
    %378 = vector.extract_strided_slice %377 {offsets = [0, 0], sizes = [8, 16], strides = [1, 1]} : vector<16x16xf32> to vector<8x16xf32>
    %379 = vector.extract_strided_slice %377 {offsets = [8, 0], sizes = [8, 16], strides = [1, 1]} : vector<16x16xf32> to vector<8x16xf32>
    %380 = vector.extract_strided_slice %377 {offsets = [2, 0], sizes = [1, 16], strides = [1, 1]} : vector<16x16xf32> to vector<1x16xf32>
    %381 = vector.extract_strided_slice %377 {offsets = [10, 0], sizes = [1, 16], strides = [1, 1]} : vector<16x16xf32> to vector<1x16xf32>
    %382 = vector.broadcast %380 : vector<1x16xf32> to vector<8x16xf32>
    %383 = arith.mulf %382, %378 : vector<8x16xf32>
    %384 = vector.broadcast %381 : vector<1x16xf32> to vector<8x16xf32>
    %385 = arith.mulf %384, %379 : vector<8x16xf32>
    %386 = arith.addf %383, %385 : vector<8x16xf32>
    %387 = vector.broadcast %380 : vector<1x16xf32> to vector<8x16xf32>
    %388 = arith.mulf %387, %379 : vector<8x16xf32>
    %389 = vector.broadcast %381 : vector<1x16xf32> to vector<8x16xf32>
    %390 = arith.mulf %389, %378 : vector<8x16xf32>
    %391 = arith.subf %388, %390 : vector<8x16xf32>
    %392 = arith.addf %374, %386 : vector<8x16xf32>
    %393 = arith.addf %375, %391 : vector<8x16xf32>
    %c6_63 = arith.constant 6 : index
    %c0_64 = arith.constant 0 : index
    %c0_65 = arith.constant 0 : index
    %394 = vector.load %arg1[%c6_63, %c0_64, %c0_65] : memref<8x16x16xf32, #tpu.memory_space<vmem>>, vector<1x16x16xf32>
    %395 = vector.shape_cast %394 : vector<1x16x16xf32> to vector<16x16xf32>
    %396 = vector.extract_strided_slice %395 {offsets = [0, 0], sizes = [8, 16], strides = [1, 1]} : vector<16x16xf32> to vector<8x16xf32>
    %397 = vector.extract_strided_slice %395 {offsets = [8, 0], sizes = [8, 16], strides = [1, 1]} : vector<16x16xf32> to vector<8x16xf32>
    %398 = vector.extract_strided_slice %395 {offsets = [2, 0], sizes = [1, 16], strides = [1, 1]} : vector<16x16xf32> to vector<1x16xf32>
    %399 = vector.extract_strided_slice %395 {offsets = [10, 0], sizes = [1, 16], strides = [1, 1]} : vector<16x16xf32> to vector<1x16xf32>
    %400 = vector.broadcast %398 : vector<1x16xf32> to vector<8x16xf32>
    %401 = arith.mulf %400, %396 : vector<8x16xf32>
    %402 = vector.broadcast %399 : vector<1x16xf32> to vector<8x16xf32>
    %403 = arith.mulf %402, %397 : vector<8x16xf32>
    %404 = arith.addf %401, %403 : vector<8x16xf32>
    %405 = vector.broadcast %398 : vector<1x16xf32> to vector<8x16xf32>
    %406 = arith.mulf %405, %397 : vector<8x16xf32>
    %407 = vector.broadcast %399 : vector<1x16xf32> to vector<8x16xf32>
    %408 = arith.mulf %407, %396 : vector<8x16xf32>
    %409 = arith.subf %406, %408 : vector<8x16xf32>
    %410 = arith.addf %392, %404 : vector<8x16xf32>
    %411 = arith.addf %393, %409 : vector<8x16xf32>
    %c7_66 = arith.constant 7 : index
    %c0_67 = arith.constant 0 : index
    %c0_68 = arith.constant 0 : index
    %412 = vector.load %arg1[%c7_66, %c0_67, %c0_68] : memref<8x16x16xf32, #tpu.memory_space<vmem>>, vector<1x16x16xf32>
    %413 = vector.shape_cast %412 : vector<1x16x16xf32> to vector<16x16xf32>
    %414 = vector.extract_strided_slice %413 {offsets = [0, 0], sizes = [8, 16], strides = [1, 1]} : vector<16x16xf32> to vector<8x16xf32>
    %415 = vector.extract_strided_slice %413 {offsets = [8, 0], sizes = [8, 16], strides = [1, 1]} : vector<16x16xf32> to vector<8x16xf32>
    %416 = vector.extract_strided_slice %413 {offsets = [2, 0], sizes = [1, 16], strides = [1, 1]} : vector<16x16xf32> to vector<1x16xf32>
    %417 = vector.extract_strided_slice %413 {offsets = [10, 0], sizes = [1, 16], strides = [1, 1]} : vector<16x16xf32> to vector<1x16xf32>
    %418 = vector.broadcast %416 : vector<1x16xf32> to vector<8x16xf32>
    %419 = arith.mulf %418, %414 : vector<8x16xf32>
    %420 = vector.broadcast %417 : vector<1x16xf32> to vector<8x16xf32>
    %421 = arith.mulf %420, %415 : vector<8x16xf32>
    %422 = arith.addf %419, %421 : vector<8x16xf32>
    %423 = vector.broadcast %416 : vector<1x16xf32> to vector<8x16xf32>
    %424 = arith.mulf %423, %415 : vector<8x16xf32>
    %425 = vector.broadcast %417 : vector<1x16xf32> to vector<8x16xf32>
    %426 = arith.mulf %425, %414 : vector<8x16xf32>
    %427 = arith.subf %424, %426 : vector<8x16xf32>
    %428 = arith.addf %410, %422 : vector<8x16xf32>
    %429 = arith.addf %411, %427 : vector<8x16xf32>
    %c16 = arith.constant 16 : index
    %c0_69 = arith.constant 0 : index
    %430 = vector.load %arg2[%c16, %c0_69] : memref<128x16xf32, #tpu.memory_space<vmem>>, vector<8x16xf32>
    tpu.vector_store %arg2[%c16, %c0_69], %428 {strides = array<i32>} : memref<128x16xf32, #tpu.memory_space<vmem>>, vector<8x16xf32>,
    %c80 = arith.constant 80 : index
    %c0_70 = arith.constant 0 : index
    %431 = vector.load %arg2[%c80, %c0_70] : memref<128x16xf32, #tpu.memory_space<vmem>>, vector<8x16xf32>
    tpu.vector_store %arg2[%c80, %c0_70], %429 {strides = array<i32>} : memref<128x16xf32, #tpu.memory_space<vmem>>, vector<8x16xf32>,
    %c0_71 = arith.constant 0 : index
    %c0_72 = arith.constant 0 : index
    %c0_73 = arith.constant 0 : index
    %432 = vector.load %arg1[%c0_71, %c0_72, %c0_73] : memref<8x16x16xf32, #tpu.memory_space<vmem>>, vector<1x16x16xf32>
    %433 = vector.shape_cast %432 : vector<1x16x16xf32> to vector<16x16xf32>
    %434 = vector.extract_strided_slice %433 {offsets = [0, 0], sizes = [8, 16], strides = [1, 1]} : vector<16x16xf32> to vector<8x16xf32>
    %435 = vector.extract_strided_slice %433 {offsets = [8, 0], sizes = [8, 16], strides = [1, 1]} : vector<16x16xf32> to vector<8x16xf32>
    %436 = vector.extract_strided_slice %433 {offsets = [3, 0], sizes = [1, 16], strides = [1, 1]} : vector<16x16xf32> to vector<1x16xf32>
    %437 = vector.extract_strided_slice %433 {offsets = [11, 0], sizes = [1, 16], strides = [1, 1]} : vector<16x16xf32> to vector<1x16xf32>
    %438 = vector.broadcast %436 : vector<1x16xf32> to vector<8x16xf32>
    %439 = arith.mulf %438, %434 : vector<8x16xf32>
    %440 = vector.broadcast %437 : vector<1x16xf32> to vector<8x16xf32>
    %441 = arith.mulf %440, %435 : vector<8x16xf32>
    %442 = arith.addf %439, %441 : vector<8x16xf32>
    %443 = vector.broadcast %436 : vector<1x16xf32> to vector<8x16xf32>
    %444 = arith.mulf %443, %435 : vector<8x16xf32>
    %445 = vector.broadcast %437 : vector<1x16xf32> to vector<8x16xf32>
    %446 = arith.mulf %445, %434 : vector<8x16xf32>
    %447 = arith.subf %444, %446 : vector<8x16xf32>
    %c1_74 = arith.constant 1 : index
    %c0_75 = arith.constant 0 : index
    %c0_76 = arith.constant 0 : index
    %448 = vector.load %arg1[%c1_74, %c0_75, %c0_76] : memref<8x16x16xf32, #tpu.memory_space<vmem>>, vector<1x16x16xf32>
    %449 = vector.shape_cast %448 : vector<1x16x16xf32> to vector<16x16xf32>
    %450 = vector.extract_strided_slice %449 {offsets = [0, 0], sizes = [8, 16], strides = [1, 1]} : vector<16x16xf32> to vector<8x16xf32>
    %451 = vector.extract_strided_slice %449 {offsets = [8, 0], sizes = [8, 16], strides = [1, 1]} : vector<16x16xf32> to vector<8x16xf32>
    %452 = vector.extract_strided_slice %449 {offsets = [3, 0], sizes = [1, 16], strides = [1, 1]} : vector<16x16xf32> to vector<1x16xf32>
    %453 = vector.extract_strided_slice %449 {offsets = [11, 0], sizes = [1, 16], strides = [1, 1]} : vector<16x16xf32> to vector<1x16xf32>
    %454 = vector.broadcast %452 : vector<1x16xf32> to vector<8x16xf32>
    %455 = arith.mulf %454, %450 : vector<8x16xf32>
    %456 = vector.broadcast %453 : vector<1x16xf32> to vector<8x16xf32>
    %457 = arith.mulf %456, %451 : vector<8x16xf32>
    %458 = arith.addf %455, %457 : vector<8x16xf32>
    %459 = vector.broadcast %452 : vector<1x16xf32> to vector<8x16xf32>
    %460 = arith.mulf %459, %451 : vector<8x16xf32>
    %461 = vector.broadcast %453 : vector<1x16xf32> to vector<8x16xf32>
    %462 = arith.mulf %461, %450 : vector<8x16xf32>
    %463 = arith.subf %460, %462 : vector<8x16xf32>
    %464 = arith.addf %442, %458 : vector<8x16xf32>
    %465 = arith.addf %447, %463 : vector<8x16xf32>
    %c2_77 = arith.constant 2 : index
    %c0_78 = arith.constant 0 : index
    %c0_79 = arith.constant 0 : index
    %466 = vector.load %arg1[%c2_77, %c0_78, %c0_79] : memref<8x16x16xf32, #tpu.memory_space<vmem>>, vector<1x16x16xf32>
    %467 = vector.shape_cast %466 : vector<1x16x16xf32> to vector<16x16xf32>
    %468 = vector.extract_strided_slice %467 {offsets = [0, 0], sizes = [8, 16], strides = [1, 1]} : vector<16x16xf32> to vector<8x16xf32>
    %469 = vector.extract_strided_slice %467 {offsets = [8, 0], sizes = [8, 16], strides = [1, 1]} : vector<16x16xf32> to vector<8x16xf32>
    %470 = vector.extract_strided_slice %467 {offsets = [3, 0], sizes = [1, 16], strides = [1, 1]} : vector<16x16xf32> to vector<1x16xf32>
    %471 = vector.extract_strided_slice %467 {offsets = [11, 0], sizes = [1, 16], strides = [1, 1]} : vector<16x16xf32> to vector<1x16xf32>
    %472 = vector.broadcast %470 : vector<1x16xf32> to vector<8x16xf32>
    %473 = arith.mulf %472, %468 : vector<8x16xf32>
    %474 = vector.broadcast %471 : vector<1x16xf32> to vector<8x16xf32>
    %475 = arith.mulf %474, %469 : vector<8x16xf32>
    %476 = arith.addf %473, %475 : vector<8x16xf32>
    %477 = vector.broadcast %470 : vector<1x16xf32> to vector<8x16xf32>
    %478 = arith.mulf %477, %469 : vector<8x16xf32>
    %479 = vector.broadcast %471 : vector<1x16xf32> to vector<8x16xf32>
    %480 = arith.mulf %479, %468 : vector<8x16xf32>
    %481 = arith.subf %478, %480 : vector<8x16xf32>
    %482 = arith.addf %464, %476 : vector<8x16xf32>
    %483 = arith.addf %465, %481 : vector<8x16xf32>
    %c3_80 = arith.constant 3 : index
    %c0_81 = arith.constant 0 : index
    %c0_82 = arith.constant 0 : index
    %484 = vector.load %arg1[%c3_80, %c0_81, %c0_82] : memref<8x16x16xf32, #tpu.memory_space<vmem>>, vector<1x16x16xf32>
    %485 = vector.shape_cast %484 : vector<1x16x16xf32> to vector<16x16xf32>
    %486 = vector.extract_strided_slice %485 {offsets = [0, 0], sizes = [8, 16], strides = [1, 1]} : vector<16x16xf32> to vector<8x16xf32>
    %487 = vector.extract_strided_slice %485 {offsets = [8, 0], sizes = [8, 16], strides = [1, 1]} : vector<16x16xf32> to vector<8x16xf32>
    %488 = vector.extract_strided_slice %485 {offsets = [3, 0], sizes = [1, 16], strides = [1, 1]} : vector<16x16xf32> to vector<1x16xf32>
    %489 = vector.extract_strided_slice %485 {offsets = [11, 0], sizes = [1, 16], strides = [1, 1]} : vector<16x16xf32> to vector<1x16xf32>
    %490 = vector.broadcast %488 : vector<1x16xf32> to vector<8x16xf32>
    %491 = arith.mulf %490, %486 : vector<8x16xf32>
    %492 = vector.broadcast %489 : vector<1x16xf32> to vector<8x16xf32>
    %493 = arith.mulf %492, %487 : vector<8x16xf32>
    %494 = arith.addf %491, %493 : vector<8x16xf32>
    %495 = vector.broadcast %488 : vector<1x16xf32> to vector<8x16xf32>
    %496 = arith.mulf %495, %487 : vector<8x16xf32>
    %497 = vector.broadcast %489 : vector<1x16xf32> to vector<8x16xf32>
    %498 = arith.mulf %497, %486 : vector<8x16xf32>
    %499 = arith.subf %496, %498 : vector<8x16xf32>
    %500 = arith.addf %482, %494 : vector<8x16xf32>
    %501 = arith.addf %483, %499 : vector<8x16xf32>
    %c4_83 = arith.constant 4 : index
    %c0_84 = arith.constant 0 : index
    %c0_85 = arith.constant 0 : index
    %502 = vector.load %arg1[%c4_83, %c0_84, %c0_85] : memref<8x16x16xf32, #tpu.memory_space<vmem>>, vector<1x16x16xf32>
    %503 = vector.shape_cast %502 : vector<1x16x16xf32> to vector<16x16xf32>
    %504 = vector.extract_strided_slice %503 {offsets = [0, 0], sizes = [8, 16], strides = [1, 1]} : vector<16x16xf32> to vector<8x16xf32>
    %505 = vector.extract_strided_slice %503 {offsets = [8, 0], sizes = [8, 16], strides = [1, 1]} : vector<16x16xf32> to vector<8x16xf32>
    %506 = vector.extract_strided_slice %503 {offsets = [3, 0], sizes = [1, 16], strides = [1, 1]} : vector<16x16xf32> to vector<1x16xf32>
    %507 = vector.extract_strided_slice %503 {offsets = [11, 0], sizes = [1, 16], strides = [1, 1]} : vector<16x16xf32> to vector<1x16xf32>
    %508 = vector.broadcast %506 : vector<1x16xf32> to vector<8x16xf32>
    %509 = arith.mulf %508, %504 : vector<8x16xf32>
    %510 = vector.broadcast %507 : vector<1x16xf32> to vector<8x16xf32>
    %511 = arith.mulf %510, %505 : vector<8x16xf32>
    %512 = arith.addf %509, %511 : vector<8x16xf32>
    %513 = vector.broadcast %506 : vector<1x16xf32> to vector<8x16xf32>
    %514 = arith.mulf %513, %505 : vector<8x16xf32>
    %515 = vector.broadcast %507 : vector<1x16xf32> to vector<8x16xf32>
    %516 = arith.mulf %515, %504 : vector<8x16xf32>
    %517 = arith.subf %514, %516 : vector<8x16xf32>
    %518 = arith.addf %500, %512 : vector<8x16xf32>
    %519 = arith.addf %501, %517 : vector<8x16xf32>
    %c5_86 = arith.constant 5 : index
    %c0_87 = arith.constant 0 : index
    %c0_88 = arith.constant 0 : index
    %520 = vector.load %arg1[%c5_86, %c0_87, %c0_88] : memref<8x16x16xf32, #tpu.memory_space<vmem>>, vector<1x16x16xf32>
    %521 = vector.shape_cast %520 : vector<1x16x16xf32> to vector<16x16xf32>
    %522 = vector.extract_strided_slice %521 {offsets = [0, 0], sizes = [8, 16], strides = [1, 1]} : vector<16x16xf32> to vector<8x16xf32>
    %523 = vector.extract_strided_slice %521 {offsets = [8, 0], sizes = [8, 16], strides = [1, 1]} : vector<16x16xf32> to vector<8x16xf32>
    %524 = vector.extract_strided_slice %521 {offsets = [3, 0], sizes = [1, 16], strides = [1, 1]} : vector<16x16xf32> to vector<1x16xf32>
    %525 = vector.extract_strided_slice %521 {offsets = [11, 0], sizes = [1, 16], strides = [1, 1]} : vector<16x16xf32> to vector<1x16xf32>
    %526 = vector.broadcast %524 : vector<1x16xf32> to vector<8x16xf32>
    %527 = arith.mulf %526, %522 : vector<8x16xf32>
    %528 = vector.broadcast %525 : vector<1x16xf32> to vector<8x16xf32>
    %529 = arith.mulf %528, %523 : vector<8x16xf32>
    %530 = arith.addf %527, %529 : vector<8x16xf32>
    %531 = vector.broadcast %524 : vector<1x16xf32> to vector<8x16xf32>
    %532 = arith.mulf %531, %523 : vector<8x16xf32>
    %533 = vector.broadcast %525 : vector<1x16xf32> to vector<8x16xf32>
    %534 = arith.mulf %533, %522 : vector<8x16xf32>
    %535 = arith.subf %532, %534 : vector<8x16xf32>
    %536 = arith.addf %518, %530 : vector<8x16xf32>
    %537 = arith.addf %519, %535 : vector<8x16xf32>
    %c6_89 = arith.constant 6 : index
    %c0_90 = arith.constant 0 : index
    %c0_91 = arith.constant 0 : index
    %538 = vector.load %arg1[%c6_89, %c0_90, %c0_91] : memref<8x16x16xf32, #tpu.memory_space<vmem>>, vector<1x16x16xf32>
    %539 = vector.shape_cast %538 : vector<1x16x16xf32> to vector<16x16xf32>
    %540 = vector.extract_strided_slice %539 {offsets = [0, 0], sizes = [8, 16], strides = [1, 1]} : vector<16x16xf32> to vector<8x16xf32>
    %541 = vector.extract_strided_slice %539 {offsets = [8, 0], sizes = [8, 16], strides = [1, 1]} : vector<16x16xf32> to vector<8x16xf32>
    %542 = vector.extract_strided_slice %539 {offsets = [3, 0], sizes = [1, 16], strides = [1, 1]} : vector<16x16xf32> to vector<1x16xf32>
    %543 = vector.extract_strided_slice %539 {offsets = [11, 0], sizes = [1, 16], strides = [1, 1]} : vector<16x16xf32> to vector<1x16xf32>
    %544 = vector.broadcast %542 : vector<1x16xf32> to vector<8x16xf32>
    %545 = arith.mulf %544, %540 : vector<8x16xf32>
    %546 = vector.broadcast %543 : vector<1x16xf32> to vector<8x16xf32>
    %547 = arith.mulf %546, %541 : vector<8x16xf32>
    %548 = arith.addf %545, %547 : vector<8x16xf32>
    %549 = vector.broadcast %542 : vector<1x16xf32> to vector<8x16xf32>
    %550 = arith.mulf %549, %541 : vector<8x16xf32>
    %551 = vector.broadcast %543 : vector<1x16xf32> to vector<8x16xf32>
    %552 = arith.mulf %551, %540 : vector<8x16xf32>
    %553 = arith.subf %550, %552 : vector<8x16xf32>
    %554 = arith.addf %536, %548 : vector<8x16xf32>
    %555 = arith.addf %537, %553 : vector<8x16xf32>
    %c7_92 = arith.constant 7 : index
    %c0_93 = arith.constant 0 : index
    %c0_94 = arith.constant 0 : index
    %556 = vector.load %arg1[%c7_92, %c0_93, %c0_94] : memref<8x16x16xf32, #tpu.memory_space<vmem>>, vector<1x16x16xf32>
    %557 = vector.shape_cast %556 : vector<1x16x16xf32> to vector<16x16xf32>
    %558 = vector.extract_strided_slice %557 {offsets = [0, 0], sizes = [8, 16], strides = [1, 1]} : vector<16x16xf32> to vector<8x16xf32>
    %559 = vector.extract_strided_slice %557 {offsets = [8, 0], sizes = [8, 16], strides = [1, 1]} : vector<16x16xf32> to vector<8x16xf32>
    %560 = vector.extract_strided_slice %557 {offsets = [3, 0], sizes = [1, 16], strides = [1, 1]} : vector<16x16xf32> to vector<1x16xf32>
    %561 = vector.extract_strided_slice %557 {offsets = [11, 0], sizes = [1, 16], strides = [1, 1]} : vector<16x16xf32> to vector<1x16xf32>
    %562 = vector.broadcast %560 : vector<1x16xf32> to vector<8x16xf32>
    %563 = arith.mulf %562, %558 : vector<8x16xf32>
    %564 = vector.broadcast %561 : vector<1x16xf32> to vector<8x16xf32>
    %565 = arith.mulf %564, %559 : vector<8x16xf32>
    %566 = arith.addf %563, %565 : vector<8x16xf32>
    %567 = vector.broadcast %560 : vector<1x16xf32> to vector<8x16xf32>
    %568 = arith.mulf %567, %559 : vector<8x16xf32>
    %569 = vector.broadcast %561 : vector<1x16xf32> to vector<8x16xf32>
    %570 = arith.mulf %569, %558 : vector<8x16xf32>
    %571 = arith.subf %568, %570 : vector<8x16xf32>
    %572 = arith.addf %554, %566 : vector<8x16xf32>
    %573 = arith.addf %555, %571 : vector<8x16xf32>
    %c24 = arith.constant 24 : index
    %c0_95 = arith.constant 0 : index
    %574 = vector.load %arg2[%c24, %c0_95] : memref<128x16xf32, #tpu.memory_space<vmem>>, vector<8x16xf32>
    tpu.vector_store %arg2[%c24, %c0_95], %572 {strides = array<i32>} : memref<128x16xf32, #tpu.memory_space<vmem>>, vector<8x16xf32>,
    %c88 = arith.constant 88 : index
    %c0_96 = arith.constant 0 : index
    %575 = vector.load %arg2[%c88, %c0_96] : memref<128x16xf32, #tpu.memory_space<vmem>>, vector<8x16xf32>
    tpu.vector_store %arg2[%c88, %c0_96], %573 {strides = array<i32>} : memref<128x16xf32, #tpu.memory_space<vmem>>, vector<8x16xf32>,
    %c0_97 = arith.constant 0 : index
    %c0_98 = arith.constant 0 : index
    %c0_99 = arith.constant 0 : index
    %576 = vector.load %arg1[%c0_97, %c0_98, %c0_99] : memref<8x16x16xf32, #tpu.memory_space<vmem>>, vector<1x16x16xf32>
    %577 = vector.shape_cast %576 : vector<1x16x16xf32> to vector<16x16xf32>
    %578 = vector.extract_strided_slice %577 {offsets = [0, 0], sizes = [8, 16], strides = [1, 1]} : vector<16x16xf32> to vector<8x16xf32>
    %579 = vector.extract_strided_slice %577 {offsets = [8, 0], sizes = [8, 16], strides = [1, 1]} : vector<16x16xf32> to vector<8x16xf32>
    %580 = vector.extract_strided_slice %577 {offsets = [4, 0], sizes = [1, 16], strides = [1, 1]} : vector<16x16xf32> to vector<1x16xf32>
    %581 = vector.extract_strided_slice %577 {offsets = [12, 0], sizes = [1, 16], strides = [1, 1]} : vector<16x16xf32> to vector<1x16xf32>
    %582 = vector.broadcast %580 : vector<1x16xf32> to vector<8x16xf32>
    %583 = arith.mulf %582, %578 : vector<8x16xf32>
    %584 = vector.broadcast %581 : vector<1x16xf32> to vector<8x16xf32>
    %585 = arith.mulf %584, %579 : vector<8x16xf32>
    %586 = arith.addf %583, %585 : vector<8x16xf32>
    %587 = vector.broadcast %580 : vector<1x16xf32> to vector<8x16xf32>
    %588 = arith.mulf %587, %579 : vector<8x16xf32>
    %589 = vector.broadcast %581 : vector<1x16xf32> to vector<8x16xf32>
    %590 = arith.mulf %589, %578 : vector<8x16xf32>
    %591 = arith.subf %588, %590 : vector<8x16xf32>
    %c1_100 = arith.constant 1 : index
    %c0_101 = arith.constant 0 : index
    %c0_102 = arith.constant 0 : index
    %592 = vector.load %arg1[%c1_100, %c0_101, %c0_102] : memref<8x16x16xf32, #tpu.memory_space<vmem>>, vector<1x16x16xf32>
    %593 = vector.shape_cast %592 : vector<1x16x16xf32> to vector<16x16xf32>
    %594 = vector.extract_strided_slice %593 {offsets = [0, 0], sizes = [8, 16], strides = [1, 1]} : vector<16x16xf32> to vector<8x16xf32>
    %595 = vector.extract_strided_slice %593 {offsets = [8, 0], sizes = [8, 16], strides = [1, 1]} : vector<16x16xf32> to vector<8x16xf32>
    %596 = vector.extract_strided_slice %593 {offsets = [4, 0], sizes = [1, 16], strides = [1, 1]} : vector<16x16xf32> to vector<1x16xf32>
    %597 = vector.extract_strided_slice %593 {offsets = [12, 0], sizes = [1, 16], strides = [1, 1]} : vector<16x16xf32> to vector<1x16xf32>
    %598 = vector.broadcast %596 : vector<1x16xf32> to vector<8x16xf32>
    %599 = arith.mulf %598, %594 : vector<8x16xf32>
    %600 = vector.broadcast %597 : vector<1x16xf32> to vector<8x16xf32>
    %601 = arith.mulf %600, %595 : vector<8x16xf32>
    %602 = arith.addf %599, %601 : vector<8x16xf32>
    %603 = vector.broadcast %596 : vector<1x16xf32> to vector<8x16xf32>
    %604 = arith.mulf %603, %595 : vector<8x16xf32>
    %605 = vector.broadcast %597 : vector<1x16xf32> to vector<8x16xf32>
    %606 = arith.mulf %605, %594 : vector<8x16xf32>
    %607 = arith.subf %604, %606 : vector<8x16xf32>
    %608 = arith.addf %586, %602 : vector<8x16xf32>
    %609 = arith.addf %591, %607 : vector<8x16xf32>
    %c2_103 = arith.constant 2 : index
    %c0_104 = arith.constant 0 : index
    %c0_105 = arith.constant 0 : index
    %610 = vector.load %arg1[%c2_103, %c0_104, %c0_105] : memref<8x16x16xf32, #tpu.memory_space<vmem>>, vector<1x16x16xf32>
    %611 = vector.shape_cast %610 : vector<1x16x16xf32> to vector<16x16xf32>
    %612 = vector.extract_strided_slice %611 {offsets = [0, 0], sizes = [8, 16], strides = [1, 1]} : vector<16x16xf32> to vector<8x16xf32>
    %613 = vector.extract_strided_slice %611 {offsets = [8, 0], sizes = [8, 16], strides = [1, 1]} : vector<16x16xf32> to vector<8x16xf32>
    %614 = vector.extract_strided_slice %611 {offsets = [4, 0], sizes = [1, 16], strides = [1, 1]} : vector<16x16xf32> to vector<1x16xf32>
    %615 = vector.extract_strided_slice %611 {offsets = [12, 0], sizes = [1, 16], strides = [1, 1]} : vector<16x16xf32> to vector<1x16xf32>
    %616 = vector.broadcast %614 : vector<1x16xf32> to vector<8x16xf32>
    %617 = arith.mulf %616, %612 : vector<8x16xf32>
    %618 = vector.broadcast %615 : vector<1x16xf32> to vector<8x16xf32>
    %619 = arith.mulf %618, %613 : vector<8x16xf32>
    %620 = arith.addf %617, %619 : vector<8x16xf32>
    %621 = vector.broadcast %614 : vector<1x16xf32> to vector<8x16xf32>
    %622 = arith.mulf %621, %613 : vector<8x16xf32>
    %623 = vector.broadcast %615 : vector<1x16xf32> to vector<8x16xf32>
    %624 = arith.mulf %623, %612 : vector<8x16xf32>
    %625 = arith.subf %622, %624 : vector<8x16xf32>
    %626 = arith.addf %608, %620 : vector<8x16xf32>
    %627 = arith.addf %609, %625 : vector<8x16xf32>
    %c3_106 = arith.constant 3 : index
    %c0_107 = arith.constant 0 : index
    %c0_108 = arith.constant 0 : index
    %628 = vector.load %arg1[%c3_106, %c0_107, %c0_108] : memref<8x16x16xf32, #tpu.memory_space<vmem>>, vector<1x16x16xf32>
    %629 = vector.shape_cast %628 : vector<1x16x16xf32> to vector<16x16xf32>
    %630 = vector.extract_strided_slice %629 {offsets = [0, 0], sizes = [8, 16], strides = [1, 1]} : vector<16x16xf32> to vector<8x16xf32>
    %631 = vector.extract_strided_slice %629 {offsets = [8, 0], sizes = [8, 16], strides = [1, 1]} : vector<16x16xf32> to vector<8x16xf32>
    %632 = vector.extract_strided_slice %629 {offsets = [4, 0], sizes = [1, 16], strides = [1, 1]} : vector<16x16xf32> to vector<1x16xf32>
    %633 = vector.extract_strided_slice %629 {offsets = [12, 0], sizes = [1, 16], strides = [1, 1]} : vector<16x16xf32> to vector<1x16xf32>
    %634 = vector.broadcast %632 : vector<1x16xf32> to vector<8x16xf32>
    %635 = arith.mulf %634, %630 : vector<8x16xf32>
    %636 = vector.broadcast %633 : vector<1x16xf32> to vector<8x16xf32>
    %637 = arith.mulf %636, %631 : vector<8x16xf32>
    %638 = arith.addf %635, %637 : vector<8x16xf32>
    %639 = vector.broadcast %632 : vector<1x16xf32> to vector<8x16xf32>
    %640 = arith.mulf %639, %631 : vector<8x16xf32>
    %641 = vector.broadcast %633 : vector<1x16xf32> to vector<8x16xf32>
    %642 = arith.mulf %641, %630 : vector<8x16xf32>
    %643 = arith.subf %640, %642 : vector<8x16xf32>
    %644 = arith.addf %626, %638 : vector<8x16xf32>
    %645 = arith.addf %627, %643 : vector<8x16xf32>
    %c4_109 = arith.constant 4 : index
    %c0_110 = arith.constant 0 : index
    %c0_111 = arith.constant 0 : index
    %646 = vector.load %arg1[%c4_109, %c0_110, %c0_111] : memref<8x16x16xf32, #tpu.memory_space<vmem>>, vector<1x16x16xf32>
    %647 = vector.shape_cast %646 : vector<1x16x16xf32> to vector<16x16xf32>
    %648 = vector.extract_strided_slice %647 {offsets = [0, 0], sizes = [8, 16], strides = [1, 1]} : vector<16x16xf32> to vector<8x16xf32>
    %649 = vector.extract_strided_slice %647 {offsets = [8, 0], sizes = [8, 16], strides = [1, 1]} : vector<16x16xf32> to vector<8x16xf32>
    %650 = vector.extract_strided_slice %647 {offsets = [4, 0], sizes = [1, 16], strides = [1, 1]} : vector<16x16xf32> to vector<1x16xf32>
    %651 = vector.extract_strided_slice %647 {offsets = [12, 0], sizes = [1, 16], strides = [1, 1]} : vector<16x16xf32> to vector<1x16xf32>
    %652 = vector.broadcast %650 : vector<1x16xf32> to vector<8x16xf32>
    %653 = arith.mulf %652, %648 : vector<8x16xf32>
    %654 = vector.broadcast %651 : vector<1x16xf32> to vector<8x16xf32>
    %655 = arith.mulf %654, %649 : vector<8x16xf32>
    %656 = arith.addf %653, %655 : vector<8x16xf32>
    %657 = vector.broadcast %650 : vector<1x16xf32> to vector<8x16xf32>
    %658 = arith.mulf %657, %649 : vector<8x16xf32>
    %659 = vector.broadcast %651 : vector<1x16xf32> to vector<8x16xf32>
    %660 = arith.mulf %659, %648 : vector<8x16xf32>
    %661 = arith.subf %658, %660 : vector<8x16xf32>
    %662 = arith.addf %644, %656 : vector<8x16xf32>
    %663 = arith.addf %645, %661 : vector<8x16xf32>
    %c5_112 = arith.constant 5 : index
    %c0_113 = arith.constant 0 : index
    %c0_114 = arith.constant 0 : index
    %664 = vector.load %arg1[%c5_112, %c0_113, %c0_114] : memref<8x16x16xf32, #tpu.memory_space<vmem>>, vector<1x16x16xf32>
    %665 = vector.shape_cast %664 : vector<1x16x16xf32> to vector<16x16xf32>
    %666 = vector.extract_strided_slice %665 {offsets = [0, 0], sizes = [8, 16], strides = [1, 1]} : vector<16x16xf32> to vector<8x16xf32>
    %667 = vector.extract_strided_slice %665 {offsets = [8, 0], sizes = [8, 16], strides = [1, 1]} : vector<16x16xf32> to vector<8x16xf32>
    %668 = vector.extract_strided_slice %665 {offsets = [4, 0], sizes = [1, 16], strides = [1, 1]} : vector<16x16xf32> to vector<1x16xf32>
    %669 = vector.extract_strided_slice %665 {offsets = [12, 0], sizes = [1, 16], strides = [1, 1]} : vector<16x16xf32> to vector<1x16xf32>
    %670 = vector.broadcast %668 : vector<1x16xf32> to vector<8x16xf32>
    %671 = arith.mulf %670, %666 : vector<8x16xf32>
    %672 = vector.broadcast %669 : vector<1x16xf32> to vector<8x16xf32>
    %673 = arith.mulf %672, %667 : vector<8x16xf32>
    %674 = arith.addf %671, %673 : vector<8x16xf32>
    %675 = vector.broadcast %668 : vector<1x16xf32> to vector<8x16xf32>
    %676 = arith.mulf %675, %667 : vector<8x16xf32>
    %677 = vector.broadcast %669 : vector<1x16xf32> to vector<8x16xf32>
    %678 = arith.mulf %677, %666 : vector<8x16xf32>
    %679 = arith.subf %676, %678 : vector<8x16xf32>
    %680 = arith.addf %662, %674 : vector<8x16xf32>
    %681 = arith.addf %663, %679 : vector<8x16xf32>
    %c6_115 = arith.constant 6 : index
    %c0_116 = arith.constant 0 : index
    %c0_117 = arith.constant 0 : index
    %682 = vector.load %arg1[%c6_115, %c0_116, %c0_117] : memref<8x16x16xf32, #tpu.memory_space<vmem>>, vector<1x16x16xf32>
    %683 = vector.shape_cast %682 : vector<1x16x16xf32> to vector<16x16xf32>
    %684 = vector.extract_strided_slice %683 {offsets = [0, 0], sizes = [8, 16], strides = [1, 1]} : vector<16x16xf32> to vector<8x16xf32>
    %685 = vector.extract_strided_slice %683 {offsets = [8, 0], sizes = [8, 16], strides = [1, 1]} : vector<16x16xf32> to vector<8x16xf32>
    %686 = vector.extract_strided_slice %683 {offsets = [4, 0], sizes = [1, 16], strides = [1, 1]} : vector<16x16xf32> to vector<1x16xf32>
    %687 = vector.extract_strided_slice %683 {offsets = [12, 0], sizes = [1, 16], strides = [1, 1]} : vector<16x16xf32> to vector<1x16xf32>
    %688 = vector.broadcast %686 : vector<1x16xf32> to vector<8x16xf32>
    %689 = arith.mulf %688, %684 : vector<8x16xf32>
    %690 = vector.broadcast %687 : vector<1x16xf32> to vector<8x16xf32>
    %691 = arith.mulf %690, %685 : vector<8x16xf32>
    %692 = arith.addf %689, %691 : vector<8x16xf32>
    %693 = vector.broadcast %686 : vector<1x16xf32> to vector<8x16xf32>
    %694 = arith.mulf %693, %685 : vector<8x16xf32>
    %695 = vector.broadcast %687 : vector<1x16xf32> to vector<8x16xf32>
    %696 = arith.mulf %695, %684 : vector<8x16xf32>
    %697 = arith.subf %694, %696 : vector<8x16xf32>
    %698 = arith.addf %680, %692 : vector<8x16xf32>
    %699 = arith.addf %681, %697 : vector<8x16xf32>
    %c7_118 = arith.constant 7 : index
    %c0_119 = arith.constant 0 : index
    %c0_120 = arith.constant 0 : index
    %700 = vector.load %arg1[%c7_118, %c0_119, %c0_120] : memref<8x16x16xf32, #tpu.memory_space<vmem>>, vector<1x16x16xf32>
    %701 = vector.shape_cast %700 : vector<1x16x16xf32> to vector<16x16xf32>
    %702 = vector.extract_strided_slice %701 {offsets = [0, 0], sizes = [8, 16], strides = [1, 1]} : vector<16x16xf32> to vector<8x16xf32>
    %703 = vector.extract_strided_slice %701 {offsets = [8, 0], sizes = [8, 16], strides = [1, 1]} : vector<16x16xf32> to vector<8x16xf32>
    %704 = vector.extract_strided_slice %701 {offsets = [4, 0], sizes = [1, 16], strides = [1, 1]} : vector<16x16xf32> to vector<1x16xf32>
    %705 = vector.extract_strided_slice %701 {offsets = [12, 0], sizes = [1, 16], strides = [1, 1]} : vector<16x16xf32> to vector<1x16xf32>
    %706 = vector.broadcast %704 : vector<1x16xf32> to vector<8x16xf32>
    %707 = arith.mulf %706, %702 : vector<8x16xf32>
    %708 = vector.broadcast %705 : vector<1x16xf32> to vector<8x16xf32>
    %709 = arith.mulf %708, %703 : vector<8x16xf32>
    %710 = arith.addf %707, %709 : vector<8x16xf32>
    %711 = vector.broadcast %704 : vector<1x16xf32> to vector<8x16xf32>
    %712 = arith.mulf %711, %703 : vector<8x16xf32>
    %713 = vector.broadcast %705 : vector<1x16xf32> to vector<8x16xf32>
    %714 = arith.mulf %713, %702 : vector<8x16xf32>
    %715 = arith.subf %712, %714 : vector<8x16xf32>
    %716 = arith.addf %698, %710 : vector<8x16xf32>
    %717 = arith.addf %699, %715 : vector<8x16xf32>
    %c32 = arith.constant 32 : index
    %c0_121 = arith.constant 0 : index
    %718 = vector.load %arg2[%c32, %c0_121] : memref<128x16xf32, #tpu.memory_space<vmem>>, vector<8x16xf32>
    tpu.vector_store %arg2[%c32, %c0_121], %716 {strides = array<i32>} : memref<128x16xf32, #tpu.memory_space<vmem>>, vector<8x16xf32>,
    %c96 = arith.constant 96 : index
    %c0_122 = arith.constant 0 : index
    %719 = vector.load %arg2[%c96, %c0_122] : memref<128x16xf32, #tpu.memory_space<vmem>>, vector<8x16xf32>
    tpu.vector_store %arg2[%c96, %c0_122], %717 {strides = array<i32>} : memref<128x16xf32, #tpu.memory_space<vmem>>, vector<8x16xf32>,
    %c0_123 = arith.constant 0 : index
    %c0_124 = arith.constant 0 : index
    %c0_125 = arith.constant 0 : index
    %720 = vector.load %arg1[%c0_123, %c0_124, %c0_125] : memref<8x16x16xf32, #tpu.memory_space<vmem>>, vector<1x16x16xf32>
    %721 = vector.shape_cast %720 : vector<1x16x16xf32> to vector<16x16xf32>
    %722 = vector.extract_strided_slice %721 {offsets = [0, 0], sizes = [8, 16], strides = [1, 1]} : vector<16x16xf32> to vector<8x16xf32>
    %723 = vector.extract_strided_slice %721 {offsets = [8, 0], sizes = [8, 16], strides = [1, 1]} : vector<16x16xf32> to vector<8x16xf32>
    %724 = vector.extract_strided_slice %721 {offsets = [5, 0], sizes = [1, 16], strides = [1, 1]} : vector<16x16xf32> to vector<1x16xf32>
    %725 = vector.extract_strided_slice %721 {offsets = [13, 0], sizes = [1, 16], strides = [1, 1]} : vector<16x16xf32> to vector<1x16xf32>
    %726 = vector.broadcast %724 : vector<1x16xf32> to vector<8x16xf32>
    %727 = arith.mulf %726, %722 : vector<8x16xf32>
    %728 = vector.broadcast %725 : vector<1x16xf32> to vector<8x16xf32>
    %729 = arith.mulf %728, %723 : vector<8x16xf32>
    %730 = arith.addf %727, %729 : vector<8x16xf32>
    %731 = vector.broadcast %724 : vector<1x16xf32> to vector<8x16xf32>
    %732 = arith.mulf %731, %723 : vector<8x16xf32>
    %733 = vector.broadcast %725 : vector<1x16xf32> to vector<8x16xf32>
    %734 = arith.mulf %733, %722 : vector<8x16xf32>
    %735 = arith.subf %732, %734 : vector<8x16xf32>
    %c1_126 = arith.constant 1 : index
    %c0_127 = arith.constant 0 : index
    %c0_128 = arith.constant 0 : index
    %736 = vector.load %arg1[%c1_126, %c0_127, %c0_128] : memref<8x16x16xf32, #tpu.memory_space<vmem>>, vector<1x16x16xf32>
    %737 = vector.shape_cast %736 : vector<1x16x16xf32> to vector<16x16xf32>
    %738 = vector.extract_strided_slice %737 {offsets = [0, 0], sizes = [8, 16], strides = [1, 1]} : vector<16x16xf32> to vector<8x16xf32>
    %739 = vector.extract_strided_slice %737 {offsets = [8, 0], sizes = [8, 16], strides = [1, 1]} : vector<16x16xf32> to vector<8x16xf32>
    %740 = vector.extract_strided_slice %737 {offsets = [5, 0], sizes = [1, 16], strides = [1, 1]} : vector<16x16xf32> to vector<1x16xf32>
    %741 = vector.extract_strided_slice %737 {offsets = [13, 0], sizes = [1, 16], strides = [1, 1]} : vector<16x16xf32> to vector<1x16xf32>
    %742 = vector.broadcast %740 : vector<1x16xf32> to vector<8x16xf32>
    %743 = arith.mulf %742, %738 : vector<8x16xf32>
    %744 = vector.broadcast %741 : vector<1x16xf32> to vector<8x16xf32>
    %745 = arith.mulf %744, %739 : vector<8x16xf32>
    %746 = arith.addf %743, %745 : vector<8x16xf32>
    %747 = vector.broadcast %740 : vector<1x16xf32> to vector<8x16xf32>
    %748 = arith.mulf %747, %739 : vector<8x16xf32>
    %749 = vector.broadcast %741 : vector<1x16xf32> to vector<8x16xf32>
    %750 = arith.mulf %749, %738 : vector<8x16xf32>
    %751 = arith.subf %748, %750 : vector<8x16xf32>
    %752 = arith.addf %730, %746 : vector<8x16xf32>
    %753 = arith.addf %735, %751 : vector<8x16xf32>
    %c2_129 = arith.constant 2 : index
    %c0_130 = arith.constant 0 : index
    %c0_131 = arith.constant 0 : index
    %754 = vector.load %arg1[%c2_129, %c0_130, %c0_131] : memref<8x16x16xf32, #tpu.memory_space<vmem>>, vector<1x16x16xf32>
    %755 = vector.shape_cast %754 : vector<1x16x16xf32> to vector<16x16xf32>
    %756 = vector.extract_strided_slice %755 {offsets = [0, 0], sizes = [8, 16], strides = [1, 1]} : vector<16x16xf32> to vector<8x16xf32>
    %757 = vector.extract_strided_slice %755 {offsets = [8, 0], sizes = [8, 16], strides = [1, 1]} : vector<16x16xf32> to vector<8x16xf32>
    %758 = vector.extract_strided_slice %755 {offsets = [5, 0], sizes = [1, 16], strides = [1, 1]} : vector<16x16xf32> to vector<1x16xf32>
    %759 = vector.extract_strided_slice %755 {offsets = [13, 0], sizes = [1, 16], strides = [1, 1]} : vector<16x16xf32> to vector<1x16xf32>
    %760 = vector.broadcast %758 : vector<1x16xf32> to vector<8x16xf32>
    %761 = arith.mulf %760, %756 : vector<8x16xf32>
    %762 = vector.broadcast %759 : vector<1x16xf32> to vector<8x16xf32>
    %763 = arith.mulf %762, %757 : vector<8x16xf32>
    %764 = arith.addf %761, %763 : vector<8x16xf32>
    %765 = vector.broadcast %758 : vector<1x16xf32> to vector<8x16xf32>
    %766 = arith.mulf %765, %757 : vector<8x16xf32>
    %767 = vector.broadcast %759 : vector<1x16xf32> to vector<8x16xf32>
    %768 = arith.mulf %767, %756 : vector<8x16xf32>
    %769 = arith.subf %766, %768 : vector<8x16xf32>
    %770 = arith.addf %752, %764 : vector<8x16xf32>
    %771 = arith.addf %753, %769 : vector<8x16xf32>
    %c3_132 = arith.constant 3 : index
    %c0_133 = arith.constant 0 : index
    %c0_134 = arith.constant 0 : index
    %772 = vector.load %arg1[%c3_132, %c0_133, %c0_134] : memref<8x16x16xf32, #tpu.memory_space<vmem>>, vector<1x16x16xf32>
    %773 = vector.shape_cast %772 : vector<1x16x16xf32> to vector<16x16xf32>
    %774 = vector.extract_strided_slice %773 {offsets = [0, 0], sizes = [8, 16], strides = [1, 1]} : vector<16x16xf32> to vector<8x16xf32>
    %775 = vector.extract_strided_slice %773 {offsets = [8, 0], sizes = [8, 16], strides = [1, 1]} : vector<16x16xf32> to vector<8x16xf32>
    %776 = vector.extract_strided_slice %773 {offsets = [5, 0], sizes = [1, 16], strides = [1, 1]} : vector<16x16xf32> to vector<1x16xf32>
    %777 = vector.extract_strided_slice %773 {offsets = [13, 0], sizes = [1, 16], strides = [1, 1]} : vector<16x16xf32> to vector<1x16xf32>
    %778 = vector.broadcast %776 : vector<1x16xf32> to vector<8x16xf32>
    %779 = arith.mulf %778, %774 : vector<8x16xf32>
    %780 = vector.broadcast %777 : vector<1x16xf32> to vector<8x16xf32>
    %781 = arith.mulf %780, %775 : vector<8x16xf32>
    %782 = arith.addf %779, %781 : vector<8x16xf32>
    %783 = vector.broadcast %776 : vector<1x16xf32> to vector<8x16xf32>
    %784 = arith.mulf %783, %775 : vector<8x16xf32>
    %785 = vector.broadcast %777 : vector<1x16xf32> to vector<8x16xf32>
    %786 = arith.mulf %785, %774 : vector<8x16xf32>
    %787 = arith.subf %784, %786 : vector<8x16xf32>
    %788 = arith.addf %770, %782 : vector<8x16xf32>
    %789 = arith.addf %771, %787 : vector<8x16xf32>
    %c4_135 = arith.constant 4 : index
    %c0_136 = arith.constant 0 : index
    %c0_137 = arith.constant 0 : index
    %790 = vector.load %arg1[%c4_135, %c0_136, %c0_137] : memref<8x16x16xf32, #tpu.memory_space<vmem>>, vector<1x16x16xf32>
    %791 = vector.shape_cast %790 : vector<1x16x16xf32> to vector<16x16xf32>
    %792 = vector.extract_strided_slice %791 {offsets = [0, 0], sizes = [8, 16], strides = [1, 1]} : vector<16x16xf32> to vector<8x16xf32>
    %793 = vector.extract_strided_slice %791 {offsets = [8, 0], sizes = [8, 16], strides = [1, 1]} : vector<16x16xf32> to vector<8x16xf32>
    %794 = vector.extract_strided_slice %791 {offsets = [5, 0], sizes = [1, 16], strides = [1, 1]} : vector<16x16xf32> to vector<1x16xf32>
    %795 = vector.extract_strided_slice %791 {offsets = [13, 0], sizes = [1, 16], strides = [1, 1]} : vector<16x16xf32> to vector<1x16xf32>
    %796 = vector.broadcast %794 : vector<1x16xf32> to vector<8x16xf32>
    %797 = arith.mulf %796, %792 : vector<8x16xf32>
    %798 = vector.broadcast %795 : vector<1x16xf32> to vector<8x16xf32>
    %799 = arith.mulf %798, %793 : vector<8x16xf32>
    %800 = arith.addf %797, %799 : vector<8x16xf32>
    %801 = vector.broadcast %794 : vector<1x16xf32> to vector<8x16xf32>
    %802 = arith.mulf %801, %793 : vector<8x16xf32>
    %803 = vector.broadcast %795 : vector<1x16xf32> to vector<8x16xf32>
    %804 = arith.mulf %803, %792 : vector<8x16xf32>
    %805 = arith.subf %802, %804 : vector<8x16xf32>
    %806 = arith.addf %788, %800 : vector<8x16xf32>
    %807 = arith.addf %789, %805 : vector<8x16xf32>
    %c5_138 = arith.constant 5 : index
    %c0_139 = arith.constant 0 : index
    %c0_140 = arith.constant 0 : index
    %808 = vector.load %arg1[%c5_138, %c0_139, %c0_140] : memref<8x16x16xf32, #tpu.memory_space<vmem>>, vector<1x16x16xf32>
    %809 = vector.shape_cast %808 : vector<1x16x16xf32> to vector<16x16xf32>
    %810 = vector.extract_strided_slice %809 {offsets = [0, 0], sizes = [8, 16], strides = [1, 1]} : vector<16x16xf32> to vector<8x16xf32>
    %811 = vector.extract_strided_slice %809 {offsets = [8, 0], sizes = [8, 16], strides = [1, 1]} : vector<16x16xf32> to vector<8x16xf32>
    %812 = vector.extract_strided_slice %809 {offsets = [5, 0], sizes = [1, 16], strides = [1, 1]} : vector<16x16xf32> to vector<1x16xf32>
    %813 = vector.extract_strided_slice %809 {offsets = [13, 0], sizes = [1, 16], strides = [1, 1]} : vector<16x16xf32> to vector<1x16xf32>
    %814 = vector.broadcast %812 : vector<1x16xf32> to vector<8x16xf32>
    %815 = arith.mulf %814, %810 : vector<8x16xf32>
    %816 = vector.broadcast %813 : vector<1x16xf32> to vector<8x16xf32>
    %817 = arith.mulf %816, %811 : vector<8x16xf32>
    %818 = arith.addf %815, %817 : vector<8x16xf32>
    %819 = vector.broadcast %812 : vector<1x16xf32> to vector<8x16xf32>
    %820 = arith.mulf %819, %811 : vector<8x16xf32>
    %821 = vector.broadcast %813 : vector<1x16xf32> to vector<8x16xf32>
    %822 = arith.mulf %821, %810 : vector<8x16xf32>
    %823 = arith.subf %820, %822 : vector<8x16xf32>
    %824 = arith.addf %806, %818 : vector<8x16xf32>
    %825 = arith.addf %807, %823 : vector<8x16xf32>
    %c6_141 = arith.constant 6 : index
    %c0_142 = arith.constant 0 : index
    %c0_143 = arith.constant 0 : index
    %826 = vector.load %arg1[%c6_141, %c0_142, %c0_143] : memref<8x16x16xf32, #tpu.memory_space<vmem>>, vector<1x16x16xf32>
    %827 = vector.shape_cast %826 : vector<1x16x16xf32> to vector<16x16xf32>
    %828 = vector.extract_strided_slice %827 {offsets = [0, 0], sizes = [8, 16], strides = [1, 1]} : vector<16x16xf32> to vector<8x16xf32>
    %829 = vector.extract_strided_slice %827 {offsets = [8, 0], sizes = [8, 16], strides = [1, 1]} : vector<16x16xf32> to vector<8x16xf32>
    %830 = vector.extract_strided_slice %827 {offsets = [5, 0], sizes = [1, 16], strides = [1, 1]} : vector<16x16xf32> to vector<1x16xf32>
    %831 = vector.extract_strided_slice %827 {offsets = [13, 0], sizes = [1, 16], strides = [1, 1]} : vector<16x16xf32> to vector<1x16xf32>
    %832 = vector.broadcast %830 : vector<1x16xf32> to vector<8x16xf32>
    %833 = arith.mulf %832, %828 : vector<8x16xf32>
    %834 = vector.broadcast %831 : vector<1x16xf32> to vector<8x16xf32>
    %835 = arith.mulf %834, %829 : vector<8x16xf32>
    %836 = arith.addf %833, %835 : vector<8x16xf32>
    %837 = vector.broadcast %830 : vector<1x16xf32> to vector<8x16xf32>
    %838 = arith.mulf %837, %829 : vector<8x16xf32>
    %839 = vector.broadcast %831 : vector<1x16xf32> to vector<8x16xf32>
    %840 = arith.mulf %839, %828 : vector<8x16xf32>
    %841 = arith.subf %838, %840 : vector<8x16xf32>
    %842 = arith.addf %824, %836 : vector<8x16xf32>
    %843 = arith.addf %825, %841 : vector<8x16xf32>
    %c7_144 = arith.constant 7 : index
    %c0_145 = arith.constant 0 : index
    %c0_146 = arith.constant 0 : index
    %844 = vector.load %arg1[%c7_144, %c0_145, %c0_146] : memref<8x16x16xf32, #tpu.memory_space<vmem>>, vector<1x16x16xf32>
    %845 = vector.shape_cast %844 : vector<1x16x16xf32> to vector<16x16xf32>
    %846 = vector.extract_strided_slice %845 {offsets = [0, 0], sizes = [8, 16], strides = [1, 1]} : vector<16x16xf32> to vector<8x16xf32>
    %847 = vector.extract_strided_slice %845 {offsets = [8, 0], sizes = [8, 16], strides = [1, 1]} : vector<16x16xf32> to vector<8x16xf32>
    %848 = vector.extract_strided_slice %845 {offsets = [5, 0], sizes = [1, 16], strides = [1, 1]} : vector<16x16xf32> to vector<1x16xf32>
    %849 = vector.extract_strided_slice %845 {offsets = [13, 0], sizes = [1, 16], strides = [1, 1]} : vector<16x16xf32> to vector<1x16xf32>
    %850 = vector.broadcast %848 : vector<1x16xf32> to vector<8x16xf32>
    %851 = arith.mulf %850, %846 : vector<8x16xf32>
    %852 = vector.broadcast %849 : vector<1x16xf32> to vector<8x16xf32>
    %853 = arith.mulf %852, %847 : vector<8x16xf32>
    %854 = arith.addf %851, %853 : vector<8x16xf32>
    %855 = vector.broadcast %848 : vector<1x16xf32> to vector<8x16xf32>
    %856 = arith.mulf %855, %847 : vector<8x16xf32>
    %857 = vector.broadcast %849 : vector<1x16xf32> to vector<8x16xf32>
    %858 = arith.mulf %857, %846 : vector<8x16xf32>
    %859 = arith.subf %856, %858 : vector<8x16xf32>
    %860 = arith.addf %842, %854 : vector<8x16xf32>
    %861 = arith.addf %843, %859 : vector<8x16xf32>
    %c40 = arith.constant 40 : index
    %c0_147 = arith.constant 0 : index
    %862 = vector.load %arg2[%c40, %c0_147] : memref<128x16xf32, #tpu.memory_space<vmem>>, vector<8x16xf32>
    tpu.vector_store %arg2[%c40, %c0_147], %860 {strides = array<i32>} : memref<128x16xf32, #tpu.memory_space<vmem>>, vector<8x16xf32>,
    %c104 = arith.constant 104 : index
    %c0_148 = arith.constant 0 : index
    %863 = vector.load %arg2[%c104, %c0_148] : memref<128x16xf32, #tpu.memory_space<vmem>>, vector<8x16xf32>
    tpu.vector_store %arg2[%c104, %c0_148], %861 {strides = array<i32>} : memref<128x16xf32, #tpu.memory_space<vmem>>, vector<8x16xf32>,
    %c0_149 = arith.constant 0 : index
    %c0_150 = arith.constant 0 : index
    %c0_151 = arith.constant 0 : index
    %864 = vector.load %arg1[%c0_149, %c0_150, %c0_151] : memref<8x16x16xf32, #tpu.memory_space<vmem>>, vector<1x16x16xf32>
    %865 = vector.shape_cast %864 : vector<1x16x16xf32> to vector<16x16xf32>
    %866 = vector.extract_strided_slice %865 {offsets = [0, 0], sizes = [8, 16], strides = [1, 1]} : vector<16x16xf32> to vector<8x16xf32>
    %867 = vector.extract_strided_slice %865 {offsets = [8, 0], sizes = [8, 16], strides = [1, 1]} : vector<16x16xf32> to vector<8x16xf32>
    %868 = vector.extract_strided_slice %865 {offsets = [6, 0], sizes = [1, 16], strides = [1, 1]} : vector<16x16xf32> to vector<1x16xf32>
    %869 = vector.extract_strided_slice %865 {offsets = [14, 0], sizes = [1, 16], strides = [1, 1]} : vector<16x16xf32> to vector<1x16xf32>
    %870 = vector.broadcast %868 : vector<1x16xf32> to vector<8x16xf32>
    %871 = arith.mulf %870, %866 : vector<8x16xf32>
    %872 = vector.broadcast %869 : vector<1x16xf32> to vector<8x16xf32>
    %873 = arith.mulf %872, %867 : vector<8x16xf32>
    %874 = arith.addf %871, %873 : vector<8x16xf32>
    %875 = vector.broadcast %868 : vector<1x16xf32> to vector<8x16xf32>
    %876 = arith.mulf %875, %867 : vector<8x16xf32>
    %877 = vector.broadcast %869 : vector<1x16xf32> to vector<8x16xf32>
    %878 = arith.mulf %877, %866 : vector<8x16xf32>
    %879 = arith.subf %876, %878 : vector<8x16xf32>
    %c1_152 = arith.constant 1 : index
    %c0_153 = arith.constant 0 : index
    %c0_154 = arith.constant 0 : index
    %880 = vector.load %arg1[%c1_152, %c0_153, %c0_154] : memref<8x16x16xf32, #tpu.memory_space<vmem>>, vector<1x16x16xf32>
    %881 = vector.shape_cast %880 : vector<1x16x16xf32> to vector<16x16xf32>
    %882 = vector.extract_strided_slice %881 {offsets = [0, 0], sizes = [8, 16], strides = [1, 1]} : vector<16x16xf32> to vector<8x16xf32>
    %883 = vector.extract_strided_slice %881 {offsets = [8, 0], sizes = [8, 16], strides = [1, 1]} : vector<16x16xf32> to vector<8x16xf32>
    %884 = vector.extract_strided_slice %881 {offsets = [6, 0], sizes = [1, 16], strides = [1, 1]} : vector<16x16xf32> to vector<1x16xf32>
    %885 = vector.extract_strided_slice %881 {offsets = [14, 0], sizes = [1, 16], strides = [1, 1]} : vector<16x16xf32> to vector<1x16xf32>
    %886 = vector.broadcast %884 : vector<1x16xf32> to vector<8x16xf32>
    %887 = arith.mulf %886, %882 : vector<8x16xf32>
    %888 = vector.broadcast %885 : vector<1x16xf32> to vector<8x16xf32>
    %889 = arith.mulf %888, %883 : vector<8x16xf32>
    %890 = arith.addf %887, %889 : vector<8x16xf32>
    %891 = vector.broadcast %884 : vector<1x16xf32> to vector<8x16xf32>
    %892 = arith.mulf %891, %883 : vector<8x16xf32>
    %893 = vector.broadcast %885 : vector<1x16xf32> to vector<8x16xf32>
    %894 = arith.mulf %893, %882 : vector<8x16xf32>
    %895 = arith.subf %892, %894 : vector<8x16xf32>
    %896 = arith.addf %874, %890 : vector<8x16xf32>
    %897 = arith.addf %879, %895 : vector<8x16xf32>
    %c2_155 = arith.constant 2 : index
    %c0_156 = arith.constant 0 : index
    %c0_157 = arith.constant 0 : index
    %898 = vector.load %arg1[%c2_155, %c0_156, %c0_157] : memref<8x16x16xf32, #tpu.memory_space<vmem>>, vector<1x16x16xf32>
    %899 = vector.shape_cast %898 : vector<1x16x16xf32> to vector<16x16xf32>
    %900 = vector.extract_strided_slice %899 {offsets = [0, 0], sizes = [8, 16], strides = [1, 1]} : vector<16x16xf32> to vector<8x16xf32>
    %901 = vector.extract_strided_slice %899 {offsets = [8, 0], sizes = [8, 16], strides = [1, 1]} : vector<16x16xf32> to vector<8x16xf32>
    %902 = vector.extract_strided_slice %899 {offsets = [6, 0], sizes = [1, 16], strides = [1, 1]} : vector<16x16xf32> to vector<1x16xf32>
    %903 = vector.extract_strided_slice %899 {offsets = [14, 0], sizes = [1, 16], strides = [1, 1]} : vector<16x16xf32> to vector<1x16xf32>
    %904 = vector.broadcast %902 : vector<1x16xf32> to vector<8x16xf32>
    %905 = arith.mulf %904, %900 : vector<8x16xf32>
    %906 = vector.broadcast %903 : vector<1x16xf32> to vector<8x16xf32>
    %907 = arith.mulf %906, %901 : vector<8x16xf32>
    %908 = arith.addf %905, %907 : vector<8x16xf32>
    %909 = vector.broadcast %902 : vector<1x16xf32> to vector<8x16xf32>
    %910 = arith.mulf %909, %901 : vector<8x16xf32>
    %911 = vector.broadcast %903 : vector<1x16xf32> to vector<8x16xf32>
    %912 = arith.mulf %911, %900 : vector<8x16xf32>
    %913 = arith.subf %910, %912 : vector<8x16xf32>
    %914 = arith.addf %896, %908 : vector<8x16xf32>
    %915 = arith.addf %897, %913 : vector<8x16xf32>
    %c3_158 = arith.constant 3 : index
    %c0_159 = arith.constant 0 : index
    %c0_160 = arith.constant 0 : index
    %916 = vector.load %arg1[%c3_158, %c0_159, %c0_160] : memref<8x16x16xf32, #tpu.memory_space<vmem>>, vector<1x16x16xf32>
    %917 = vector.shape_cast %916 : vector<1x16x16xf32> to vector<16x16xf32>
    %918 = vector.extract_strided_slice %917 {offsets = [0, 0], sizes = [8, 16], strides = [1, 1]} : vector<16x16xf32> to vector<8x16xf32>
    %919 = vector.extract_strided_slice %917 {offsets = [8, 0], sizes = [8, 16], strides = [1, 1]} : vector<16x16xf32> to vector<8x16xf32>
    %920 = vector.extract_strided_slice %917 {offsets = [6, 0], sizes = [1, 16], strides = [1, 1]} : vector<16x16xf32> to vector<1x16xf32>
    %921 = vector.extract_strided_slice %917 {offsets = [14, 0], sizes = [1, 16], strides = [1, 1]} : vector<16x16xf32> to vector<1x16xf32>
    %922 = vector.broadcast %920 : vector<1x16xf32> to vector<8x16xf32>
    %923 = arith.mulf %922, %918 : vector<8x16xf32>
    %924 = vector.broadcast %921 : vector<1x16xf32> to vector<8x16xf32>
    %925 = arith.mulf %924, %919 : vector<8x16xf32>
    %926 = arith.addf %923, %925 : vector<8x16xf32>
    %927 = vector.broadcast %920 : vector<1x16xf32> to vector<8x16xf32>
    %928 = arith.mulf %927, %919 : vector<8x16xf32>
    %929 = vector.broadcast %921 : vector<1x16xf32> to vector<8x16xf32>
    %930 = arith.mulf %929, %918 : vector<8x16xf32>
    %931 = arith.subf %928, %930 : vector<8x16xf32>
    %932 = arith.addf %914, %926 : vector<8x16xf32>
    %933 = arith.addf %915, %931 : vector<8x16xf32>
    %c4_161 = arith.constant 4 : index
    %c0_162 = arith.constant 0 : index
    %c0_163 = arith.constant 0 : index
    %934 = vector.load %arg1[%c4_161, %c0_162, %c0_163] : memref<8x16x16xf32, #tpu.memory_space<vmem>>, vector<1x16x16xf32>
    %935 = vector.shape_cast %934 : vector<1x16x16xf32> to vector<16x16xf32>
    %936 = vector.extract_strided_slice %935 {offsets = [0, 0], sizes = [8, 16], strides = [1, 1]} : vector<16x16xf32> to vector<8x16xf32>
    %937 = vector.extract_strided_slice %935 {offsets = [8, 0], sizes = [8, 16], strides = [1, 1]} : vector<16x16xf32> to vector<8x16xf32>
    %938 = vector.extract_strided_slice %935 {offsets = [6, 0], sizes = [1, 16], strides = [1, 1]} : vector<16x16xf32> to vector<1x16xf32>
    %939 = vector.extract_strided_slice %935 {offsets = [14, 0], sizes = [1, 16], strides = [1, 1]} : vector<16x16xf32> to vector<1x16xf32>
    %940 = vector.broadcast %938 : vector<1x16xf32> to vector<8x16xf32>
    %941 = arith.mulf %940, %936 : vector<8x16xf32>
    %942 = vector.broadcast %939 : vector<1x16xf32> to vector<8x16xf32>
    %943 = arith.mulf %942, %937 : vector<8x16xf32>
    %944 = arith.addf %941, %943 : vector<8x16xf32>
    %945 = vector.broadcast %938 : vector<1x16xf32> to vector<8x16xf32>
    %946 = arith.mulf %945, %937 : vector<8x16xf32>
    %947 = vector.broadcast %939 : vector<1x16xf32> to vector<8x16xf32>
    %948 = arith.mulf %947, %936 : vector<8x16xf32>
    %949 = arith.subf %946, %948 : vector<8x16xf32>
    %950 = arith.addf %932, %944 : vector<8x16xf32>
    %951 = arith.addf %933, %949 : vector<8x16xf32>
    %c5_164 = arith.constant 5 : index
    %c0_165 = arith.constant 0 : index
    %c0_166 = arith.constant 0 : index
    %952 = vector.load %arg1[%c5_164, %c0_165, %c0_166] : memref<8x16x16xf32, #tpu.memory_space<vmem>>, vector<1x16x16xf32>
    %953 = vector.shape_cast %952 : vector<1x16x16xf32> to vector<16x16xf32>
    %954 = vector.extract_strided_slice %953 {offsets = [0, 0], sizes = [8, 16], strides = [1, 1]} : vector<16x16xf32> to vector<8x16xf32>
    %955 = vector.extract_strided_slice %953 {offsets = [8, 0], sizes = [8, 16], strides = [1, 1]} : vector<16x16xf32> to vector<8x16xf32>
    %956 = vector.extract_strided_slice %953 {offsets = [6, 0], sizes = [1, 16], strides = [1, 1]} : vector<16x16xf32> to vector<1x16xf32>
    %957 = vector.extract_strided_slice %953 {offsets = [14, 0], sizes = [1, 16], strides = [1, 1]} : vector<16x16xf32> to vector<1x16xf32>
    %958 = vector.broadcast %956 : vector<1x16xf32> to vector<8x16xf32>
    %959 = arith.mulf %958, %954 : vector<8x16xf32>
    %960 = vector.broadcast %957 : vector<1x16xf32> to vector<8x16xf32>
    %961 = arith.mulf %960, %955 : vector<8x16xf32>
    %962 = arith.addf %959, %961 : vector<8x16xf32>
    %963 = vector.broadcast %956 : vector<1x16xf32> to vector<8x16xf32>
    %964 = arith.mulf %963, %955 : vector<8x16xf32>
    %965 = vector.broadcast %957 : vector<1x16xf32> to vector<8x16xf32>
    %966 = arith.mulf %965, %954 : vector<8x16xf32>
    %967 = arith.subf %964, %966 : vector<8x16xf32>
    %968 = arith.addf %950, %962 : vector<8x16xf32>
    %969 = arith.addf %951, %967 : vector<8x16xf32>
    %c6_167 = arith.constant 6 : index
    %c0_168 = arith.constant 0 : index
    %c0_169 = arith.constant 0 : index
    %970 = vector.load %arg1[%c6_167, %c0_168, %c0_169] : memref<8x16x16xf32, #tpu.memory_space<vmem>>, vector<1x16x16xf32>
    %971 = vector.shape_cast %970 : vector<1x16x16xf32> to vector<16x16xf32>
    %972 = vector.extract_strided_slice %971 {offsets = [0, 0], sizes = [8, 16], strides = [1, 1]} : vector<16x16xf32> to vector<8x16xf32>
    %973 = vector.extract_strided_slice %971 {offsets = [8, 0], sizes = [8, 16], strides = [1, 1]} : vector<16x16xf32> to vector<8x16xf32>
    %974 = vector.extract_strided_slice %971 {offsets = [6, 0], sizes = [1, 16], strides = [1, 1]} : vector<16x16xf32> to vector<1x16xf32>
    %975 = vector.extract_strided_slice %971 {offsets = [14, 0], sizes = [1, 16], strides = [1, 1]} : vector<16x16xf32> to vector<1x16xf32>
    %976 = vector.broadcast %974 : vector<1x16xf32> to vector<8x16xf32>
    %977 = arith.mulf %976, %972 : vector<8x16xf32>
    %978 = vector.broadcast %975 : vector<1x16xf32> to vector<8x16xf32>
    %979 = arith.mulf %978, %973 : vector<8x16xf32>
    %980 = arith.addf %977, %979 : vector<8x16xf32>
    %981 = vector.broadcast %974 : vector<1x16xf32> to vector<8x16xf32>
    %982 = arith.mulf %981, %973 : vector<8x16xf32>
    %983 = vector.broadcast %975 : vector<1x16xf32> to vector<8x16xf32>
    %984 = arith.mulf %983, %972 : vector<8x16xf32>
    %985 = arith.subf %982, %984 : vector<8x16xf32>
    %986 = arith.addf %968, %980 : vector<8x16xf32>
    %987 = arith.addf %969, %985 : vector<8x16xf32>
    %c7_170 = arith.constant 7 : index
    %c0_171 = arith.constant 0 : index
    %c0_172 = arith.constant 0 : index
    %988 = vector.load %arg1[%c7_170, %c0_171, %c0_172] : memref<8x16x16xf32, #tpu.memory_space<vmem>>, vector<1x16x16xf32>
    %989 = vector.shape_cast %988 : vector<1x16x16xf32> to vector<16x16xf32>
    %990 = vector.extract_strided_slice %989 {offsets = [0, 0], sizes = [8, 16], strides = [1, 1]} : vector<16x16xf32> to vector<8x16xf32>
    %991 = vector.extract_strided_slice %989 {offsets = [8, 0], sizes = [8, 16], strides = [1, 1]} : vector<16x16xf32> to vector<8x16xf32>
    %992 = vector.extract_strided_slice %989 {offsets = [6, 0], sizes = [1, 16], strides = [1, 1]} : vector<16x16xf32> to vector<1x16xf32>
    %993 = vector.extract_strided_slice %989 {offsets = [14, 0], sizes = [1, 16], strides = [1, 1]} : vector<16x16xf32> to vector<1x16xf32>
    %994 = vector.broadcast %992 : vector<1x16xf32> to vector<8x16xf32>
    %995 = arith.mulf %994, %990 : vector<8x16xf32>
    %996 = vector.broadcast %993 : vector<1x16xf32> to vector<8x16xf32>
    %997 = arith.mulf %996, %991 : vector<8x16xf32>
    %998 = arith.addf %995, %997 : vector<8x16xf32>
    %999 = vector.broadcast %992 : vector<1x16xf32> to vector<8x16xf32>
    %1000 = arith.mulf %999, %991 : vector<8x16xf32>
    %1001 = vector.broadcast %993 : vector<1x16xf32> to vector<8x16xf32>
    %1002 = arith.mulf %1001, %990 : vector<8x16xf32>
    %1003 = arith.subf %1000, %1002 : vector<8x16xf32>
    %1004 = arith.addf %986, %998 : vector<8x16xf32>
    %1005 = arith.addf %987, %1003 : vector<8x16xf32>
    %c48 = arith.constant 48 : index
    %c0_173 = arith.constant 0 : index
    %1006 = vector.load %arg2[%c48, %c0_173] : memref<128x16xf32, #tpu.memory_space<vmem>>, vector<8x16xf32>
    tpu.vector_store %arg2[%c48, %c0_173], %1004 {strides = array<i32>} : memref<128x16xf32, #tpu.memory_space<vmem>>, vector<8x16xf32>,
    %c112 = arith.constant 112 : index
    %c0_174 = arith.constant 0 : index
    %1007 = vector.load %arg2[%c112, %c0_174] : memref<128x16xf32, #tpu.memory_space<vmem>>, vector<8x16xf32>
    tpu.vector_store %arg2[%c112, %c0_174], %1005 {strides = array<i32>} : memref<128x16xf32, #tpu.memory_space<vmem>>, vector<8x16xf32>,
    %c0_175 = arith.constant 0 : index
    %c0_176 = arith.constant 0 : index
    %c0_177 = arith.constant 0 : index
    %1008 = vector.load %arg1[%c0_175, %c0_176, %c0_177] : memref<8x16x16xf32, #tpu.memory_space<vmem>>, vector<1x16x16xf32>
    %1009 = vector.shape_cast %1008 : vector<1x16x16xf32> to vector<16x16xf32>
    %1010 = vector.extract_strided_slice %1009 {offsets = [0, 0], sizes = [8, 16], strides = [1, 1]} : vector<16x16xf32> to vector<8x16xf32>
    %1011 = vector.extract_strided_slice %1009 {offsets = [8, 0], sizes = [8, 16], strides = [1, 1]} : vector<16x16xf32> to vector<8x16xf32>
    %1012 = vector.extract_strided_slice %1009 {offsets = [7, 0], sizes = [1, 16], strides = [1, 1]} : vector<16x16xf32> to vector<1x16xf32>
    %1013 = vector.extract_strided_slice %1009 {offsets = [15, 0], sizes = [1, 16], strides = [1, 1]} : vector<16x16xf32> to vector<1x16xf32>
    %1014 = vector.broadcast %1012 : vector<1x16xf32> to vector<8x16xf32>
    %1015 = arith.mulf %1014, %1010 : vector<8x16xf32>
    %1016 = vector.broadcast %1013 : vector<1x16xf32> to vector<8x16xf32>
    %1017 = arith.mulf %1016, %1011 : vector<8x16xf32>
    %1018 = arith.addf %1015, %1017 : vector<8x16xf32>
    %1019 = vector.broadcast %1012 : vector<1x16xf32> to vector<8x16xf32>
    %1020 = arith.mulf %1019, %1011 : vector<8x16xf32>
    %1021 = vector.broadcast %1013 : vector<1x16xf32> to vector<8x16xf32>
    %1022 = arith.mulf %1021, %1010 : vector<8x16xf32>
    %1023 = arith.subf %1020, %1022 : vector<8x16xf32>
    %c1_178 = arith.constant 1 : index
    %c0_179 = arith.constant 0 : index
    %c0_180 = arith.constant 0 : index
    %1024 = vector.load %arg1[%c1_178, %c0_179, %c0_180] : memref<8x16x16xf32, #tpu.memory_space<vmem>>, vector<1x16x16xf32>
    %1025 = vector.shape_cast %1024 : vector<1x16x16xf32> to vector<16x16xf32>
    %1026 = vector.extract_strided_slice %1025 {offsets = [0, 0], sizes = [8, 16], strides = [1, 1]} : vector<16x16xf32> to vector<8x16xf32>
    %1027 = vector.extract_strided_slice %1025 {offsets = [8, 0], sizes = [8, 16], strides = [1, 1]} : vector<16x16xf32> to vector<8x16xf32>
    %1028 = vector.extract_strided_slice %1025 {offsets = [7, 0], sizes = [1, 16], strides = [1, 1]} : vector<16x16xf32> to vector<1x16xf32>
    %1029 = vector.extract_strided_slice %1025 {offsets = [15, 0], sizes = [1, 16], strides = [1, 1]} : vector<16x16xf32> to vector<1x16xf32>
    %1030 = vector.broadcast %1028 : vector<1x16xf32> to vector<8x16xf32>
    %1031 = arith.mulf %1030, %1026 : vector<8x16xf32>
    %1032 = vector.broadcast %1029 : vector<1x16xf32> to vector<8x16xf32>
    %1033 = arith.mulf %1032, %1027 : vector<8x16xf32>
    %1034 = arith.addf %1031, %1033 : vector<8x16xf32>
    %1035 = vector.broadcast %1028 : vector<1x16xf32> to vector<8x16xf32>
    %1036 = arith.mulf %1035, %1027 : vector<8x16xf32>
    %1037 = vector.broadcast %1029 : vector<1x16xf32> to vector<8x16xf32>
    %1038 = arith.mulf %1037, %1026 : vector<8x16xf32>
    %1039 = arith.subf %1036, %1038 : vector<8x16xf32>
    %1040 = arith.addf %1018, %1034 : vector<8x16xf32>
    %1041 = arith.addf %1023, %1039 : vector<8x16xf32>
    %c2_181 = arith.constant 2 : index
    %c0_182 = arith.constant 0 : index
    %c0_183 = arith.constant 0 : index
    %1042 = vector.load %arg1[%c2_181, %c0_182, %c0_183] : memref<8x16x16xf32, #tpu.memory_space<vmem>>, vector<1x16x16xf32>
    %1043 = vector.shape_cast %1042 : vector<1x16x16xf32> to vector<16x16xf32>
    %1044 = vector.extract_strided_slice %1043 {offsets = [0, 0], sizes = [8, 16], strides = [1, 1]} : vector<16x16xf32> to vector<8x16xf32>
    %1045 = vector.extract_strided_slice %1043 {offsets = [8, 0], sizes = [8, 16], strides = [1, 1]} : vector<16x16xf32> to vector<8x16xf32>
    %1046 = vector.extract_strided_slice %1043 {offsets = [7, 0], sizes = [1, 16], strides = [1, 1]} : vector<16x16xf32> to vector<1x16xf32>
    %1047 = vector.extract_strided_slice %1043 {offsets = [15, 0], sizes = [1, 16], strides = [1, 1]} : vector<16x16xf32> to vector<1x16xf32>
    %1048 = vector.broadcast %1046 : vector<1x16xf32> to vector<8x16xf32>
    %1049 = arith.mulf %1048, %1044 : vector<8x16xf32>
    %1050 = vector.broadcast %1047 : vector<1x16xf32> to vector<8x16xf32>
    %1051 = arith.mulf %1050, %1045 : vector<8x16xf32>
    %1052 = arith.addf %1049, %1051 : vector<8x16xf32>
    %1053 = vector.broadcast %1046 : vector<1x16xf32> to vector<8x16xf32>
    %1054 = arith.mulf %1053, %1045 : vector<8x16xf32>
    %1055 = vector.broadcast %1047 : vector<1x16xf32> to vector<8x16xf32>
    %1056 = arith.mulf %1055, %1044 : vector<8x16xf32>
    %1057 = arith.subf %1054, %1056 : vector<8x16xf32>
    %1058 = arith.addf %1040, %1052 : vector<8x16xf32>
    %1059 = arith.addf %1041, %1057 : vector<8x16xf32>
    %c3_184 = arith.constant 3 : index
    %c0_185 = arith.constant 0 : index
    %c0_186 = arith.constant 0 : index
    %1060 = vector.load %arg1[%c3_184, %c0_185, %c0_186] : memref<8x16x16xf32, #tpu.memory_space<vmem>>, vector<1x16x16xf32>
    %1061 = vector.shape_cast %1060 : vector<1x16x16xf32> to vector<16x16xf32>
    %1062 = vector.extract_strided_slice %1061 {offsets = [0, 0], sizes = [8, 16], strides = [1, 1]} : vector<16x16xf32> to vector<8x16xf32>
    %1063 = vector.extract_strided_slice %1061 {offsets = [8, 0], sizes = [8, 16], strides = [1, 1]} : vector<16x16xf32> to vector<8x16xf32>
    %1064 = vector.extract_strided_slice %1061 {offsets = [7, 0], sizes = [1, 16], strides = [1, 1]} : vector<16x16xf32> to vector<1x16xf32>
    %1065 = vector.extract_strided_slice %1061 {offsets = [15, 0], sizes = [1, 16], strides = [1, 1]} : vector<16x16xf32> to vector<1x16xf32>
    %1066 = vector.broadcast %1064 : vector<1x16xf32> to vector<8x16xf32>
    %1067 = arith.mulf %1066, %1062 : vector<8x16xf32>
    %1068 = vector.broadcast %1065 : vector<1x16xf32> to vector<8x16xf32>
    %1069 = arith.mulf %1068, %1063 : vector<8x16xf32>
    %1070 = arith.addf %1067, %1069 : vector<8x16xf32>
    %1071 = vector.broadcast %1064 : vector<1x16xf32> to vector<8x16xf32>
    %1072 = arith.mulf %1071, %1063 : vector<8x16xf32>
    %1073 = vector.broadcast %1065 : vector<1x16xf32> to vector<8x16xf32>
    %1074 = arith.mulf %1073, %1062 : vector<8x16xf32>
    %1075 = arith.subf %1072, %1074 : vector<8x16xf32>
    %1076 = arith.addf %1058, %1070 : vector<8x16xf32>
    %1077 = arith.addf %1059, %1075 : vector<8x16xf32>
    %c4_187 = arith.constant 4 : index
    %c0_188 = arith.constant 0 : index
    %c0_189 = arith.constant 0 : index
    %1078 = vector.load %arg1[%c4_187, %c0_188, %c0_189] : memref<8x16x16xf32, #tpu.memory_space<vmem>>, vector<1x16x16xf32>
    %1079 = vector.shape_cast %1078 : vector<1x16x16xf32> to vector<16x16xf32>
    %1080 = vector.extract_strided_slice %1079 {offsets = [0, 0], sizes = [8, 16], strides = [1, 1]} : vector<16x16xf32> to vector<8x16xf32>
    %1081 = vector.extract_strided_slice %1079 {offsets = [8, 0], sizes = [8, 16], strides = [1, 1]} : vector<16x16xf32> to vector<8x16xf32>
    %1082 = vector.extract_strided_slice %1079 {offsets = [7, 0], sizes = [1, 16], strides = [1, 1]} : vector<16x16xf32> to vector<1x16xf32>
    %1083 = vector.extract_strided_slice %1079 {offsets = [15, 0], sizes = [1, 16], strides = [1, 1]} : vector<16x16xf32> to vector<1x16xf32>
    %1084 = vector.broadcast %1082 : vector<1x16xf32> to vector<8x16xf32>
    %1085 = arith.mulf %1084, %1080 : vector<8x16xf32>
    %1086 = vector.broadcast %1083 : vector<1x16xf32> to vector<8x16xf32>
    %1087 = arith.mulf %1086, %1081 : vector<8x16xf32>
    %1088 = arith.addf %1085, %1087 : vector<8x16xf32>
    %1089 = vector.broadcast %1082 : vector<1x16xf32> to vector<8x16xf32>
    %1090 = arith.mulf %1089, %1081 : vector<8x16xf32>
    %1091 = vector.broadcast %1083 : vector<1x16xf32> to vector<8x16xf32>
    %1092 = arith.mulf %1091, %1080 : vector<8x16xf32>
    %1093 = arith.subf %1090, %1092 : vector<8x16xf32>
    %1094 = arith.addf %1076, %1088 : vector<8x16xf32>
    %1095 = arith.addf %1077, %1093 : vector<8x16xf32>
    %c5_190 = arith.constant 5 : index
    %c0_191 = arith.constant 0 : index
    %c0_192 = arith.constant 0 : index
    %1096 = vector.load %arg1[%c5_190, %c0_191, %c0_192] : memref<8x16x16xf32, #tpu.memory_space<vmem>>, vector<1x16x16xf32>
    %1097 = vector.shape_cast %1096 : vector<1x16x16xf32> to vector<16x16xf32>
    %1098 = vector.extract_strided_slice %1097 {offsets = [0, 0], sizes = [8, 16], strides = [1, 1]} : vector<16x16xf32> to vector<8x16xf32>
    %1099 = vector.extract_strided_slice %1097 {offsets = [8, 0], sizes = [8, 16], strides = [1, 1]} : vector<16x16xf32> to vector<8x16xf32>
    %1100 = vector.extract_strided_slice %1097 {offsets = [7, 0], sizes = [1, 16], strides = [1, 1]} : vector<16x16xf32> to vector<1x16xf32>
    %1101 = vector.extract_strided_slice %1097 {offsets = [15, 0], sizes = [1, 16], strides = [1, 1]} : vector<16x16xf32> to vector<1x16xf32>
    %1102 = vector.broadcast %1100 : vector<1x16xf32> to vector<8x16xf32>
    %1103 = arith.mulf %1102, %1098 : vector<8x16xf32>
    %1104 = vector.broadcast %1101 : vector<1x16xf32> to vector<8x16xf32>
    %1105 = arith.mulf %1104, %1099 : vector<8x16xf32>
    %1106 = arith.addf %1103, %1105 : vector<8x16xf32>
    %1107 = vector.broadcast %1100 : vector<1x16xf32> to vector<8x16xf32>
    %1108 = arith.mulf %1107, %1099 : vector<8x16xf32>
    %1109 = vector.broadcast %1101 : vector<1x16xf32> to vector<8x16xf32>
    %1110 = arith.mulf %1109, %1098 : vector<8x16xf32>
    %1111 = arith.subf %1108, %1110 : vector<8x16xf32>
    %1112 = arith.addf %1094, %1106 : vector<8x16xf32>
    %1113 = arith.addf %1095, %1111 : vector<8x16xf32>
    %c6_193 = arith.constant 6 : index
    %c0_194 = arith.constant 0 : index
    %c0_195 = arith.constant 0 : index
    %1114 = vector.load %arg1[%c6_193, %c0_194, %c0_195] : memref<8x16x16xf32, #tpu.memory_space<vmem>>, vector<1x16x16xf32>
    %1115 = vector.shape_cast %1114 : vector<1x16x16xf32> to vector<16x16xf32>
    %1116 = vector.extract_strided_slice %1115 {offsets = [0, 0], sizes = [8, 16], strides = [1, 1]} : vector<16x16xf32> to vector<8x16xf32>
    %1117 = vector.extract_strided_slice %1115 {offsets = [8, 0], sizes = [8, 16], strides = [1, 1]} : vector<16x16xf32> to vector<8x16xf32>
    %1118 = vector.extract_strided_slice %1115 {offsets = [7, 0], sizes = [1, 16], strides = [1, 1]} : vector<16x16xf32> to vector<1x16xf32>
    %1119 = vector.extract_strided_slice %1115 {offsets = [15, 0], sizes = [1, 16], strides = [1, 1]} : vector<16x16xf32> to vector<1x16xf32>
    %1120 = vector.broadcast %1118 : vector<1x16xf32> to vector<8x16xf32>
    %1121 = arith.mulf %1120, %1116 : vector<8x16xf32>
    %1122 = vector.broadcast %1119 : vector<1x16xf32> to vector<8x16xf32>
    %1123 = arith.mulf %1122, %1117 : vector<8x16xf32>
    %1124 = arith.addf %1121, %1123 : vector<8x16xf32>
    %1125 = vector.broadcast %1118 : vector<1x16xf32> to vector<8x16xf32>
    %1126 = arith.mulf %1125, %1117 : vector<8x16xf32>
    %1127 = vector.broadcast %1119 : vector<1x16xf32> to vector<8x16xf32>
    %1128 = arith.mulf %1127, %1116 : vector<8x16xf32>
    %1129 = arith.subf %1126, %1128 : vector<8x16xf32>
    %1130 = arith.addf %1112, %1124 : vector<8x16xf32>
    %1131 = arith.addf %1113, %1129 : vector<8x16xf32>
    %c7_196 = arith.constant 7 : index
    %c0_197 = arith.constant 0 : index
    %c0_198 = arith.constant 0 : index
    %1132 = vector.load %arg1[%c7_196, %c0_197, %c0_198] : memref<8x16x16xf32, #tpu.memory_space<vmem>>, vector<1x16x16xf32>
    %1133 = vector.shape_cast %1132 : vector<1x16x16xf32> to vector<16x16xf32>
    %1134 = vector.extract_strided_slice %1133 {offsets = [0, 0], sizes = [8, 16], strides = [1, 1]} : vector<16x16xf32> to vector<8x16xf32>
    %1135 = vector.extract_strided_slice %1133 {offsets = [8, 0], sizes = [8, 16], strides = [1, 1]} : vector<16x16xf32> to vector<8x16xf32>
    %1136 = vector.extract_strided_slice %1133 {offsets = [7, 0], sizes = [1, 16], strides = [1, 1]} : vector<16x16xf32> to vector<1x16xf32>
    %1137 = vector.extract_strided_slice %1133 {offsets = [15, 0], sizes = [1, 16], strides = [1, 1]} : vector<16x16xf32> to vector<1x16xf32>
    %1138 = vector.broadcast %1136 : vector<1x16xf32> to vector<8x16xf32>
    %1139 = arith.mulf %1138, %1134 : vector<8x16xf32>
    %1140 = vector.broadcast %1137 : vector<1x16xf32> to vector<8x16xf32>
    %1141 = arith.mulf %1140, %1135 : vector<8x16xf32>
    %1142 = arith.addf %1139, %1141 : vector<8x16xf32>
    %1143 = vector.broadcast %1136 : vector<1x16xf32> to vector<8x16xf32>
    %1144 = arith.mulf %1143, %1135 : vector<8x16xf32>
    %1145 = vector.broadcast %1137 : vector<1x16xf32> to vector<8x16xf32>
    %1146 = arith.mulf %1145, %1134 : vector<8x16xf32>
    %1147 = arith.subf %1144, %1146 : vector<8x16xf32>
    %1148 = arith.addf %1130, %1142 : vector<8x16xf32>
    %1149 = arith.addf %1131, %1147 : vector<8x16xf32>
    %c56 = arith.constant 56 : index
    %c0_199 = arith.constant 0 : index
    %1150 = vector.load %arg2[%c56, %c0_199] : memref<128x16xf32, #tpu.memory_space<vmem>>, vector<8x16xf32>
    tpu.vector_store %arg2[%c56, %c0_199], %1148 {strides = array<i32>} : memref<128x16xf32, #tpu.memory_space<vmem>>, vector<8x16xf32>,
    %c120 = arith.constant 120 : index
    %c0_200 = arith.constant 0 : index
    %1151 = vector.load %arg2[%c120, %c0_200] : memref<128x16xf32, #tpu.memory_space<vmem>>, vector<8x16xf32>
    tpu.vector_store %arg2[%c120, %c0_200], %1149 {strides = array<i32>} : memref<128x16xf32, #tpu.memory_space<vmem>>, vector<8x16xf32>,
    return
  }
  func.func @transform_0(%arg0: i32) -> (i32, i32, i32) {
    %c0_i32 = arith.constant 0 : i32
    %c0_i32_0 = arith.constant 0 : i32
    %c0_i32_1 = arith.constant 0 : i32
    return %c0_i32, %c0_i32_0, %arg0 : i32, i32, i32
  }
  func.func @transform_1(%arg0: i32) -> (i32, i32) {
    %c0_i32 = arith.constant 0 : i32
    %c0_i32_0 = arith.constant 0 : i32
    return %c0_i32, %arg0 : i32, i32
  }
}

</mosaic_0001>

<llo_original>
// kernel: tpu_custom_call.1
$region0: #{tpu_custom_call.1}
  #allocation0 [shape = 'u32[]', space=smem, size = 0x4, offset = 0x4, fixed_abs, tag = 'smem constant byte address 0x4 - core index']
  #allocation1 [shape = 'u32[144,128]{1,0:T(1,128)}', space=vmem, size = 0x12000, scoped, tag = 'internal scratch']
  %s0 = inlined_call_operand.hbm [shape: f32[8,16,16], index: 0, kind: input, shape index: {}]
  %s1 = inlined_call_operand.vmem [shape: f32[128,16], index: 1, kind: output, shape index: {}]
  %s2 = sld [smem:[#allocation0]]
  $region18: #{tpu_custom_call.1} parent=0
    _
  %s4 = ssub.s32 1, %s2
  %s5 = scalar_select 0, %s4, %s2
  $region1: #{tpu_custom_call.1} parent=0
    #allocation2 [shape = 'u8[65536]{0}', space=vmem, size = 0x10000, scoped, tag = 'input window, operand 0, single buffered']
    #allocation3 [shape = 's32[1]{0}', space=sflag, size = 0x4, scoped, tag = 'scoped memory for tpu_custom_call.1']
    %6 = vsyncpa [#allocation3], 0
    // Predicated region
    $region2: #{tpu_custom_call.1} parent=1 // pred_check
      _
    $region3: #{tpu_custom_call.1} parent=1 // pred_check_branch
      %8 = sbr.rel (0) target = $region5
    $region4: #{tpu_custom_call.1} parent=1 // pred_region
      %s10 = ssub.s32 2048, 2048
      %11 = vsyncadd [#allocation3], %s10
      %s12 = sshll.u32 [#allocation2], 4
      %s13 = int_to_ptr.vmem [resolvable:$true] %s12
      %18 = dma.hbm_to_vmem [thread:$0]  %s0, 2048, %s13, [#allocation3], 128, 128, 8
    $region5: #{tpu_custom_call.1} parent=1 // pred_fallthru
      _
    // Predicated region
    $region6: #{tpu_custom_call.1} parent=1 // pred_check
      _
    $region7: #{tpu_custom_call.1} parent=1 // pred_check_branch
      %20 = sbr.rel (0) target = $region9
    $region8: #{tpu_custom_call.1} parent=1 // pred_region
      %21 = dma.done [#allocation3], 2048
    $region9: #{tpu_custom_call.1} parent=1 // pred_fallthru
      _
    %v22 = vld [vmem:[#allocation2] sm:$0xff]
    %v23 = vld [vmem:[#allocation2 + $0x8] sm:$0xff]
    %v24 = vlaneseq
    %v25 = vshrl.u32 %v24, 7
    %v26 = vsub.s32 0, %v25
    %v27 = vrot.slane %v22, %v26
    %v28 = vmul.f32 %v27, %v22
    %v29 = vlaneseq
    %v30 = vshrl.u32 %v29, 7
    %v31 = vsub.s32 0, %v30
    %v32 = vrot.slane %v23, %v31
    %v33 = vmul.f32 %v32, %v23
    %v34 = vadd.f32 %v28, %v33
    %v35 = vmul.f32 %v27, %v23
    %v36 = vmul.f32 %v32, %v22
    %v37 = vsub.f32 %v35, %v36
    %s38 = scalar_lea.vmem [#allocation2], 16
    %v39 = vld [vmem:[%s38] sm:$0xff]
    %v40 = vld [vmem:[%s38 + $0x8] sm:$0xff]
    %v41 = vlaneseq
    %v42 = vshrl.u32 %v41, 7
    %v43 = vsub.s32 0, %v42
    %v44 = vrot.slane %v39, %v43
    %v45 = vmul.f32 %v44, %v39
    %v46 = vlaneseq
    %v47 = vshrl.u32 %v46, 7
    %v48 = vsub.s32 0, %v47
    %v49 = vrot.slane %v40, %v48
    %v50 = vmul.f32 %v49, %v40
    %v51 = vadd.f32 %v45, %v50
    %v52 = vmul.f32 %v44, %v40
    %v53 = vmul.f32 %v49, %v39
    %v54 = vsub.f32 %v52, %v53
    %v55 = vadd.f32 %v34, %v51
    %v56 = vadd.f32 %v37, %v54
    %s57 = scalar_lea.vmem [#allocation2], 32
    %v58 = vld [vmem:[%s57] sm:$0xff]
    %v59 = vld [vmem:[%s57 + $0x8] sm:$0xff]
    %v60 = vlaneseq
    %v61 = vshrl.u32 %v60, 7
    %v62 = vsub.s32 0, %v61
    %v63 = vrot.slane %v58, %v62
    %v64 = vmul.f32 %v63, %v58
    %v65 = vlaneseq
    %v66 = vshrl.u32 %v65, 7
    %v67 = vsub.s32 0, %v66
    %v68 = vrot.slane %v59, %v67
    %v69 = vmul.f32 %v68, %v59
    %v70 = vadd.f32 %v64, %v69
    %v71 = vmul.f32 %v63, %v59
    %v72 = vmul.f32 %v68, %v58
    %v73 = vsub.f32 %v71, %v72
    %v74 = vadd.f32 %v55, %v70
    %v75 = vadd.f32 %v56, %v73
    %s76 = scalar_lea.vmem [#allocation2], 48
    %v77 = vld [vmem:[%s76] sm:$0xff]
    %v78 = vld [vmem:[%s76 + $0x8] sm:$0xff]
    %v79 = vlaneseq
    %v80 = vshrl.u32 %v79, 7
    %v81 = vsub.s32 0, %v80
    %v82 = vrot.slane %v77, %v81
    %v83 = vmul.f32 %v82, %v77
    %v84 = vlaneseq
    %v85 = vshrl.u32 %v84, 7
    %v86 = vsub.s32 0, %v85
    %v87 = vrot.slane %v78, %v86
    %v88 = vmul.f32 %v87, %v78
    %v89 = vadd.f32 %v83, %v88
    %v90 = vmul.f32 %v82, %v78
    %v91 = vmul.f32 %v87, %v77
    %v92 = vsub.f32 %v90, %v91
    %v93 = vadd.f32 %v74, %v89
    %v94 = vadd.f32 %v75, %v92
    %s95 = scalar_lea.vmem [#allocation2], 64
    %v96 = vld [vmem:[%s95] sm:$0xff]
    %v97 = vld [vmem:[%s95 + $0x8] sm:$0xff]
    %v98 = vlaneseq
    %v99 = vshrl.u32 %v98, 7
    %v100 = vsub.s32 0, %v99
    %v101 = vrot.slane %v96, %v100
    %v102 = vmul.f32 %v101, %v96
    %v103 = vlaneseq
    %v104 = vshrl.u32 %v103, 7
    %v105 = vsub.s32 0, %v104
    %v106 = vrot.slane %v97, %v105
    %v107 = vmul.f32 %v106, %v97
    %v108 = vadd.f32 %v102, %v107
    %v109 = vmul.f32 %v101, %v97
    %v110 = vmul.f32 %v106, %v96
    %v111 = vsub.f32 %v109, %v110
    %v112 = vadd.f32 %v93, %v108
    %v113 = vadd.f32 %v94, %v111
    %s114 = scalar_lea.vmem [#allocation2], 80
    %v115 = vld [vmem:[%s114] sm:$0xff]
    %v116 = vld [vmem:[%s114 + $0x8] sm:$0xff]
    %v117 = vlaneseq
    %v118 = vshrl.u32 %v117, 7
    %v119 = vsub.s32 0, %v118
    %v120 = vrot.slane %v115, %v119
    %v121 = vmul.f32 %v120, %v115
    %v122 = vlaneseq
    %v123 = vshrl.u32 %v122, 7
    %v124 = vsub.s32 0, %v123
    %v125 = vrot.slane %v116, %v124
    %v126 = vmul.f32 %v125, %v116
    %v127 = vadd.f32 %v121, %v126
    %v128 = vmul.f32 %v120, %v116
    %v129 = vmul.f32 %v125, %v115
    %v130 = vsub.f32 %v128, %v129
    %v131 = vadd.f32 %v112, %v127
    %v132 = vadd.f32 %v113, %v130
    %s133 = scalar_lea.vmem [#allocation2], 96
    %v134 = vld [vmem:[%s133] sm:$0xff]
    %v135 = vld [vmem:[%s133 + $0x8] sm:$0xff]
    %v136 = vlaneseq
    %v137 = vshrl.u32 %v136, 7
    %v138 = vsub.s32 0, %v137
    %v139 = vrot.slane %v134, %v138
    %v140 = vmul.f32 %v139, %v134
    %v141 = vlaneseq
    %v142 = vshrl.u32 %v141, 7
    %v143 = vsub.s32 0, %v142
    %v144 = vrot.slane %v135, %v143
    %v145 = vmul.f32 %v144, %v135
    %v146 = vadd.f32 %v140, %v145
    %v147 = vmul.f32 %v139, %v135
    %v148 = vmul.f32 %v144, %v134
    %v149 = vsub.f32 %v147, %v148
    %v150 = vadd.f32 %v131, %v146
    %v151 = vadd.f32 %v132, %v149
    %s152 = scalar_lea.vmem [#allocation2], 112
    %v153 = vld [vmem:[%s152] sm:$0xff]
    %v154 = vld [vmem:[%s152 + $0x8] sm:$0xff]
    %v155 = vlaneseq
    %v156 = vshrl.u32 %v155, 7
    %v157 = vsub.s32 0, %v156
    %v158 = vrot.slane %v153, %v157
    %v159 = vmul.f32 %v158, %v153
    %v160 = vlaneseq
    %v161 = vshrl.u32 %v160, 7
    %v162 = vsub.s32 0, %v161
    %v163 = vrot.slane %v154, %v162
    %v164 = vmul.f32 %v163, %v154
    %v165 = vadd.f32 %v159, %v164
    %v166 = vmul.f32 %v158, %v154
    %v167 = vmul.f32 %v163, %v153
    %v168 = vsub.f32 %v166, %v167
    %v169 = vadd.f32 %v150, %v165
    %v170 = vadd.f32 %v151, %v168
    %vm171 = vcmask 130048
    %172 = vst.msk [vmem:[%s1] sm:$0xff] %vm171, %v169
    %173 = vst.msk [vmem:[%s1 + $0x40] sm:$0xff] %vm171, %v170
    %v174 = vld [vmem:[#allocation2] sm:$0xff]
    %v175 = vld [vmem:[#allocation2 + $0x8] sm:$0xff]
    %v176 = vlaneseq
    %v177 = vshrl.u32 %v176, 7
    %v178 = vsub.s32 1, %v177
    %v179 = vrot.slane %v174, %v178
    %v180 = vmul.f32 %v179, %v174
    %v181 = vlaneseq
    %v182 = vshrl.u32 %v181, 7
    %v183 = vsub.s32 1, %v182
    %v184 = vrot.slane %v175, %v183
    %v185 = vmul.f32 %v184, %v175
    %v186 = vadd.f32 %v180, %v185
    %v187 = vmul.f32 %v179, %v175
    %v188 = vmul.f32 %v184, %v174
    %v189 = vsub.f32 %v187, %v188
    %v190 = vld [vmem:[%s38] sm:$0xff]
    %v191 = vld [vmem:[%s38 + $0x8] sm:$0xff]
    %v192 = vlaneseq
    %v193 = vshrl.u32 %v192, 7
    %v194 = vsub.s32 1, %v193
    %v195 = vrot.slane %v190, %v194
    %v196 = vmul.f32 %v195, %v190
    %v197 = vlaneseq
    %v198 = vshrl.u32 %v197, 7
    %v199 = vsub.s32 1, %v198
    %v200 = vrot.slane %v191, %v199
    %v201 = vmul.f32 %v200, %v191
    %v202 = vadd.f32 %v196, %v201
    %v203 = vmul.f32 %v195, %v191
    %v204 = vmul.f32 %v200, %v190
    %v205 = vsub.f32 %v203, %v204
    %v206 = vadd.f32 %v186, %v202
    %v207 = vadd.f32 %v189, %v205
    %v208 = vld [vmem:[%s57] sm:$0xff]
    %v209 = vld [vmem:[%s57 + $0x8] sm:$0xff]
    %v210 = vlaneseq
    %v211 = vshrl.u32 %v210, 7
    %v212 = vsub.s32 1, %v211
    %v213 = vrot.slane %v208, %v212
    %v214 = vmul.f32 %v213, %v208
    %v215 = vlaneseq
    %v216 = vshrl.u32 %v215, 7
    %v217 = vsub.s32 1, %v216
    %v218 = vrot.slane %v209, %v217
    %v219 = vmul.f32 %v218, %v209
    %v220 = vadd.f32 %v214, %v219
    %v221 = vmul.f32 %v213, %v209
    %v222 = vmul.f32 %v218, %v208
    %v223 = vsub.f32 %v221, %v222
    %v224 = vadd.f32 %v206, %v220
    %v225 = vadd.f32 %v207, %v223
    %v226 = vld [vmem:[%s76] sm:$0xff]
    %v227 = vld [vmem:[%s76 + $0x8] sm:$0xff]
    %v228 = vlaneseq
    %v229 = vshrl.u32 %v228, 7
    %v230 = vsub.s32 1, %v229
    %v231 = vrot.slane %v226, %v230
    %v232 = vmul.f32 %v231, %v226
    %v233 = vlaneseq
    %v234 = vshrl.u32 %v233, 7
    %v235 = vsub.s32 1, %v234
    %v236 = vrot.slane %v227, %v235
    %v237 = vmul.f32 %v236, %v227
    %v238 = vadd.f32 %v232, %v237
    %v239 = vmul.f32 %v231, %v227
    %v240 = vmul.f32 %v236, %v226
    %v241 = vsub.f32 %v239, %v240
    %v242 = vadd.f32 %v224, %v238
    %v243 = vadd.f32 %v225, %v241
    %v244 = vld [vmem:[%s95] sm:$0xff]
    %v245 = vld [vmem:[%s95 + $0x8] sm:$0xff]
    %v246 = vlaneseq
    %v247 = vshrl.u32 %v246, 7
    %v248 = vsub.s32 1, %v247
    %v249 = vrot.slane %v244, %v248
    %v250 = vmul.f32 %v249, %v244
    %v251 = vlaneseq
    %v252 = vshrl.u32 %v251, 7
    %v253 = vsub.s32 1, %v252
    %v254 = vrot.slane %v245, %v253
    %v255 = vmul.f32 %v254, %v245
    %v256 = vadd.f32 %v250, %v255
    %v257 = vmul.f32 %v249, %v245
    %v258 = vmul.f32 %v254, %v244
    %v259 = vsub.f32 %v257, %v258
    %v260 = vadd.f32 %v242, %v256
    %v261 = vadd.f32 %v243, %v259
    %v262 = vld [vmem:[%s114] sm:$0xff]
    %v263 = vld [vmem:[%s114 + $0x8] sm:$0xff]
    %v264 = vlaneseq
    %v265 = vshrl.u32 %v264, 7
    %v266 = vsub.s32 1, %v265
    %v267 = vrot.slane %v262, %v266
    %v268 = vmul.f32 %v267, %v262
    %v269 = vlaneseq
    %v270 = vshrl.u32 %v269, 7
    %v271 = vsub.s32 1, %v270
    %v272 = vrot.slane %v263, %v271
    %v273 = vmul.f32 %v272, %v263
    %v274 = vadd.f32 %v268, %v273
    %v275 = vmul.f32 %v267, %v263
    %v276 = vmul.f32 %v272, %v262
    %v277 = vsub.f32 %v275, %v276
    %v278 = vadd.f32 %v260, %v274
    %v279 = vadd.f32 %v261, %v277
    %v280 = vld [vmem:[%s133] sm:$0xff]
    %v281 = vld [vmem:[%s133 + $0x8] sm:$0xff]
    %v282 = vlaneseq
    %v283 = vshrl.u32 %v282, 7
    %v284 = vsub.s32 1, %v283
    %v285 = vrot.slane %v280, %v284
    %v286 = vmul.f32 %v285, %v280
    %v287 = vlaneseq
    %v288 = vshrl.u32 %v287, 7
    %v289 = vsub.s32 1, %v288
    %v290 = vrot.slane %v281, %v289
    %v291 = vmul.f32 %v290, %v281
    %v292 = vadd.f32 %v286, %v291
    %v293 = vmul.f32 %v285, %v281
    %v294 = vmul.f32 %v290, %v280
    %v295 = vsub.f32 %v293, %v294
    %v296 = vadd.f32 %v278, %v292
    %v297 = vadd.f32 %v279, %v295
    %v298 = vld [vmem:[%s152] sm:$0xff]
    %v299 = vld [vmem:[%s152 + $0x8] sm:$0xff]
    %v300 = vlaneseq
    %v301 = vshrl.u32 %v300, 7
    %v302 = vsub.s32 1, %v301
    %v303 = vrot.slane %v298, %v302
    %v304 = vmul.f32 %v303, %v298
    %v305 = vlaneseq
    %v306 = vshrl.u32 %v305, 7
    %v307 = vsub.s32 1, %v306
    %v308 = vrot.slane %v299, %v307
    %v309 = vmul.f32 %v308, %v299
    %v310 = vadd.f32 %v304, %v309
    %v311 = vmul.f32 %v303, %v299
    %v312 = vmul.f32 %v308, %v298
    %v313 = vsub.f32 %v311, %v312
    %v314 = vadd.f32 %v296, %v310
    %v315 = vadd.f32 %v297, %v313
    %316 = vst.msk [vmem:[%s1 + $0x8] sm:$0xff] %vm171, %v314
    %317 = vst.msk [vmem:[%s1 + $0x48] sm:$0xff] %vm171, %v315
    %v318 = vld [vmem:[#allocation2] sm:$0xff]
    %v319 = vld [vmem:[#allocation2 + $0x8] sm:$0xff]
    %v320 = vlaneseq
    %v321 = vshrl.u32 %v320, 7
    %v322 = vsub.s32 2, %v321
    %v323 = vrot.slane %v318, %v322
    %v324 = vmul.f32 %v323, %v318
    %v325 = vlaneseq
    %v326 = vshrl.u32 %v325, 7
    %v327 = vsub.s32 2, %v326
    %v328 = vrot.slane %v319, %v327
    %v329 = vmul.f32 %v328, %v319
    %v330 = vadd.f32 %v324, %v329
    %v331 = vmul.f32 %v323, %v319
    %v332 = vmul.f32 %v328, %v318
    %v333 = vsub.f32 %v331, %v332
    %v334 = vld [vmem:[%s38] sm:$0xff]
    %v335 = vld [vmem:[%s38 + $0x8] sm:$0xff]
    %v336 = vlaneseq
    %v337 = vshrl.u32 %v336, 7
    %v338 = vsub.s32 2, %v337
    %v339 = vrot.slane %v334, %v338
    %v340 = vmul.f32 %v339, %v334
    %v341 = vlaneseq
    %v342 = vshrl.u32 %v341, 7
    %v343 = vsub.s32 2, %v342
    %v344 = vrot.slane %v335, %v343
    %v345 = vmul.f32 %v344, %v335
    %v346 = vadd.f32 %v340, %v345
    %v347 = vmul.f32 %v339, %v335
    %v348 = vmul.f32 %v344, %v334
    %v349 = vsub.f32 %v347, %v348
    %v350 = vadd.f32 %v330, %v346
    %v351 = vadd.f32 %v333, %v349
    %v352 = vld [vmem:[%s57] sm:$0xff]
    %v353 = vld [vmem:[%s57 + $0x8] sm:$0xff]
    %v354 = vlaneseq
    %v355 = vshrl.u32 %v354, 7
    %v356 = vsub.s32 2, %v355
    %v357 = vrot.slane %v352, %v356
    %v358 = vmul.f32 %v357, %v352
    %v359 = vlaneseq
    %v360 = vshrl.u32 %v359, 7
    %v361 = vsub.s32 2, %v360
    %v362 = vrot.slane %v353, %v361
    %v363 = vmul.f32 %v362, %v353
    %v364 = vadd.f32 %v358, %v363
    %v365 = vmul.f32 %v357, %v353
    %v366 = vmul.f32 %v362, %v352
    %v367 = vsub.f32 %v365, %v366
    %v368 = vadd.f32 %v350, %v364
    %v369 = vadd.f32 %v351, %v367
    %v370 = vld [vmem:[%s76] sm:$0xff]
    %v371 = vld [vmem:[%s76 + $0x8] sm:$0xff]
    %v372 = vlaneseq
    %v373 = vshrl.u32 %v372, 7
    %v374 = vsub.s32 2, %v373
    %v375 = vrot.slane %v370, %v374
    %v376 = vmul.f32 %v375, %v370
    %v377 = vlaneseq
    %v378 = vshrl.u32 %v377, 7
    %v379 = vsub.s32 2, %v378
    %v380 = vrot.slane %v371, %v379
    %v381 = vmul.f32 %v380, %v371
    %v382 = vadd.f32 %v376, %v381
    %v383 = vmul.f32 %v375, %v371
    %v384 = vmul.f32 %v380, %v370
    %v385 = vsub.f32 %v383, %v384
    %v386 = vadd.f32 %v368, %v382
    %v387 = vadd.f32 %v369, %v385
    %v388 = vld [vmem:[%s95] sm:$0xff]
    %v389 = vld [vmem:[%s95 + $0x8] sm:$0xff]
    %v390 = vlaneseq
    %v391 = vshrl.u32 %v390, 7
    %v392 = vsub.s32 2, %v391
    %v393 = vrot.slane %v388, %v392
    %v394 = vmul.f32 %v393, %v388
    %v395 = vlaneseq
    %v396 = vshrl.u32 %v395, 7
    %v397 = vsub.s32 2, %v396
    %v398 = vrot.slane %v389, %v397
    %v399 = vmul.f32 %v398, %v389
    %v400 = vadd.f32 %v394, %v399
    %v401 = vmul.f32 %v393, %v389
    %v402 = vmul.f32 %v398, %v388
    %v403 = vsub.f32 %v401, %v402
    %v404 = vadd.f32 %v386, %v400
    %v405 = vadd.f32 %v387, %v403
    %v406 = vld [vmem:[%s114] sm:$0xff]
    %v407 = vld [vmem:[%s114 + $0x8] sm:$0xff]
    %v408 = vlaneseq
    %v409 = vshrl.u32 %v408, 7
    %v410 = vsub.s32 2, %v409
    %v411 = vrot.slane %v406, %v410
    %v412 = vmul.f32 %v411, %v406
    %v413 = vlaneseq
    %v414 = vshrl.u32 %v413, 7
    %v415 = vsub.s32 2, %v414
    %v416 = vrot.slane %v407, %v415
    %v417 = vmul.f32 %v416, %v407
    %v418 = vadd.f32 %v412, %v417
    %v419 = vmul.f32 %v411, %v407
    %v420 = vmul.f32 %v416, %v406
    %v421 = vsub.f32 %v419, %v420
    %v422 = vadd.f32 %v404, %v418
    %v423 = vadd.f32 %v405, %v421
    %v424 = vld [vmem:[%s133] sm:$0xff]
    %v425 = vld [vmem:[%s133 + $0x8] sm:$0xff]
    %v426 = vlaneseq
    %v427 = vshrl.u32 %v426, 7
    %v428 = vsub.s32 2, %v427
    %v429 = vrot.slane %v424, %v428
    %v430 = vmul.f32 %v429, %v424
    %v431 = vlaneseq
    %v432 = vshrl.u32 %v431, 7
    %v433 = vsub.s32 2, %v432
    %v434 = vrot.slane %v425, %v433
    %v435 = vmul.f32 %v434, %v425
    %v436 = vadd.f32 %v430, %v435
    %v437 = vmul.f32 %v429, %v425
    %v438 = vmul.f32 %v434, %v424
    %v439 = vsub.f32 %v437, %v438
    %v440 = vadd.f32 %v422, %v436
    %v441 = vadd.f32 %v423, %v439
    %v442 = vld [vmem:[%s152] sm:$0xff]
    %v443 = vld [vmem:[%s152 + $0x8] sm:$0xff]
    %v444 = vlaneseq
    %v445 = vshrl.u32 %v444, 7
    %v446 = vsub.s32 2, %v445
    %v447 = vrot.slane %v442, %v446
    %v448 = vmul.f32 %v447, %v442
    %v449 = vlaneseq
    %v450 = vshrl.u32 %v449, 7
    %v451 = vsub.s32 2, %v450
    %v452 = vrot.slane %v443, %v451
    %v453 = vmul.f32 %v452, %v443
    %v454 = vadd.f32 %v448, %v453
    %v455 = vmul.f32 %v447, %v443
    %v456 = vmul.f32 %v452, %v442
    %v457 = vsub.f32 %v455, %v456
    %v458 = vadd.f32 %v440, %v454
    %v459 = vadd.f32 %v441, %v457
    %460 = vst.msk [vmem:[%s1 + $0x10] sm:$0xff] %vm171, %v458
    %461 = vst.msk [vmem:[%s1 + $0x50] sm:$0xff] %vm171, %v459
    %v462 = vld [vmem:[#allocation2] sm:$0xff]
    %v463 = vld [vmem:[#allocation2 + $0x8] sm:$0xff]
    %v464 = vlaneseq
    %v465 = vshrl.u32 %v464, 7
    %v466 = vsub.s32 3, %v465
    %v467 = vrot.slane %v462, %v466
    %v468 = vmul.f32 %v467, %v462
    %v469 = vlaneseq
    %v470 = vshrl.u32 %v469, 7
    %v471 = vsub.s32 3, %v470
    %v472 = vrot.slane %v463, %v471
    %v473 = vmul.f32 %v472, %v463
    %v474 = vadd.f32 %v468, %v473
    %v475 = vmul.f32 %v467, %v463
    %v476 = vmul.f32 %v472, %v462
    %v477 = vsub.f32 %v475, %v476
    %v478 = vld [vmem:[%s38] sm:$0xff]
    %v479 = vld [vmem:[%s38 + $0x8] sm:$0xff]
    %v480 = vlaneseq
    %v481 = vshrl.u32 %v480, 7
    %v482 = vsub.s32 3, %v481
    %v483 = vrot.slane %v478, %v482
    %v484 = vmul.f32 %v483, %v478
    %v485 = vlaneseq
    %v486 = vshrl.u32 %v485, 7
    %v487 = vsub.s32 3, %v486
    %v488 = vrot.slane %v479, %v487
    %v489 = vmul.f32 %v488, %v479
    %v490 = vadd.f32 %v484, %v489
    %v491 = vmul.f32 %v483, %v479
    %v492 = vmul.f32 %v488, %v478
    %v493 = vsub.f32 %v491, %v492
    %v494 = vadd.f32 %v474, %v490
    %v495 = vadd.f32 %v477, %v493
    %v496 = vld [vmem:[%s57] sm:$0xff]
    %v497 = vld [vmem:[%s57 + $0x8] sm:$0xff]
    %v498 = vlaneseq
    %v499 = vshrl.u32 %v498, 7
    %v500 = vsub.s32 3, %v499
    %v501 = vrot.slane %v496, %v500
    %v502 = vmul.f32 %v501, %v496
    %v503 = vlaneseq
    %v504 = vshrl.u32 %v503, 7
    %v505 = vsub.s32 3, %v504
    %v506 = vrot.slane %v497, %v505
    %v507 = vmul.f32 %v506, %v497
    %v508 = vadd.f32 %v502, %v507
    %v509 = vmul.f32 %v501, %v497
    %v510 = vmul.f32 %v506, %v496
    %v511 = vsub.f32 %v509, %v510
    %v512 = vadd.f32 %v494, %v508
    %v513 = vadd.f32 %v495, %v511
    %v514 = vld [vmem:[%s76] sm:$0xff]
    %v515 = vld [vmem:[%s76 + $0x8] sm:$0xff]
    %v516 = vlaneseq
    %v517 = vshrl.u32 %v516, 7
    %v518 = vsub.s32 3, %v517
    %v519 = vrot.slane %v514, %v518
    %v520 = vmul.f32 %v519, %v514
    %v521 = vlaneseq
    %v522 = vshrl.u32 %v521, 7
    %v523 = vsub.s32 3, %v522
    %v524 = vrot.slane %v515, %v523
    %v525 = vmul.f32 %v524, %v515
    %v526 = vadd.f32 %v520, %v525
    %v527 = vmul.f32 %v519, %v515
    %v528 = vmul.f32 %v524, %v514
    %v529 = vsub.f32 %v527, %v528
    %v530 = vadd.f32 %v512, %v526
    %v531 = vadd.f32 %v513, %v529
    %v532 = vld [vmem:[%s95] sm:$0xff]
    %v533 = vld [vmem:[%s95 + $0x8] sm:$0xff]
    %v534 = vlaneseq
    %v535 = vshrl.u32 %v534, 7
    %v536 = vsub.s32 3, %v535
    %v537 = vrot.slane %v532, %v536
    %v538 = vmul.f32 %v537, %v532
    %v539 = vlaneseq
    %v540 = vshrl.u32 %v539, 7
    %v541 = vsub.s32 3, %v540
    %v542 = vrot.slane %v533, %v541
    %v543 = vmul.f32 %v542, %v533
    %v544 = vadd.f32 %v538, %v543
    %v545 = vmul.f32 %v537, %v533
    %v546 = vmul.f32 %v542, %v532
    %v547 = vsub.f32 %v545, %v546
    %v548 = vadd.f32 %v530, %v544
    %v549 = vadd.f32 %v531, %v547
    %v550 = vld [vmem:[%s114] sm:$0xff]
    %v551 = vld [vmem:[%s114 + $0x8] sm:$0xff]
    %v552 = vlaneseq
    %v553 = vshrl.u32 %v552, 7
    %v554 = vsub.s32 3, %v553
    %v555 = vrot.slane %v550, %v554
    %v556 = vmul.f32 %v555, %v550
    %v557 = vlaneseq
    %v558 = vshrl.u32 %v557, 7
    %v559 = vsub.s32 3, %v558
    %v560 = vrot.slane %v551, %v559
    %v561 = vmul.f32 %v560, %v551
    %v562 = vadd.f32 %v556, %v561
    %v563 = vmul.f32 %v555, %v551
    %v564 = vmul.f32 %v560, %v550
    %v565 = vsub.f32 %v563, %v564
    %v566 = vadd.f32 %v548, %v562
    %v567 = vadd.f32 %v549, %v565
    %v568 = vld [vmem:[%s133] sm:$0xff]
    %v569 = vld [vmem:[%s133 + $0x8] sm:$0xff]
    %v570 = vlaneseq
    %v571 = vshrl.u32 %v570, 7
    %v572 = vsub.s32 3, %v571
    %v573 = vrot.slane %v568, %v572
    %v574 = vmul.f32 %v573, %v568
    %v575 = vlaneseq
    %v576 = vshrl.u32 %v575, 7
    %v577 = vsub.s32 3, %v576
    %v578 = vrot.slane %v569, %v577
    %v579 = vmul.f32 %v578, %v569
    %v580 = vadd.f32 %v574, %v579
    %v581 = vmul.f32 %v573, %v569
    %v582 = vmul.f32 %v578, %v568
    %v583 = vsub.f32 %v581, %v582
    %v584 = vadd.f32 %v566, %v580
    %v585 = vadd.f32 %v567, %v583
    %v586 = vld [vmem:[%s152] sm:$0xff]
    %v587 = vld [vmem:[%s152 + $0x8] sm:$0xff]
    %v588 = vlaneseq
    %v589 = vshrl.u32 %v588, 7
    %v590 = vsub.s32 3, %v589
    %v591 = vrot.slane %v586, %v590
    %v592 = vmul.f32 %v591, %v586
    %v593 = vlaneseq
    %v594 = vshrl.u32 %v593, 7
    %v595 = vsub.s32 3, %v594
    %v596 = vrot.slane %v587, %v595
    %v597 = vmul.f32 %v596, %v587
    %v598 = vadd.f32 %v592, %v597
    %v599 = vmul.f32 %v591, %v587
    %v600 = vmul.f32 %v596, %v586
    %v601 = vsub.f32 %v599, %v600
    %v602 = vadd.f32 %v584, %v598
    %v603 = vadd.f32 %v585, %v601
    %604 = vst.msk [vmem:[%s1 + $0x18] sm:$0xff] %vm171, %v602
    %605 = vst.msk [vmem:[%s1 + $0x58] sm:$0xff] %vm171, %v603
    %v606 = vld [vmem:[#allocation2] sm:$0xff]
    %v607 = vld [vmem:[#allocation2 + $0x8] sm:$0xff]
    %v608 = vlaneseq
    %v609 = vshrl.u32 %v608, 7
    %v610 = vsub.s32 4, %v609
    %v611 = vrot.slane %v606, %v610
    %v612 = vmul.f32 %v611, %v606
    %v613 = vlaneseq
    %v614 = vshrl.u32 %v613, 7
    %v615 = vsub.s32 4, %v614
    %v616 = vrot.slane %v607, %v615
    %v617 = vmul.f32 %v616, %v607
    %v618 = vadd.f32 %v612, %v617
    %v619 = vmul.f32 %v611, %v607
    %v620 = vmul.f32 %v616, %v606
    %v621 = vsub.f32 %v619, %v620
    %v622 = vld [vmem:[%s38] sm:$0xff]
    %v623 = vld [vmem:[%s38 + $0x8] sm:$0xff]
    %v624 = vlaneseq
    %v625 = vshrl.u32 %v624, 7
    %v626 = vsub.s32 4, %v625
    %v627 = vrot.slane %v622, %v626
    %v628 = vmul.f32 %v627, %v622
    %v629 = vlaneseq
    %v630 = vshrl.u32 %v629, 7
    %v631 = vsub.s32 4, %v630
    %v632 = vrot.slane %v623, %v631
    %v633 = vmul.f32 %v632, %v623
    %v634 = vadd.f32 %v628, %v633
    %v635 = vmul.f32 %v627, %v623
    %v636 = vmul.f32 %v632, %v622
    %v637 = vsub.f32 %v635, %v636
    %v638 = vadd.f32 %v618, %v634
    %v639 = vadd.f32 %v621, %v637
    %v640 = vld [vmem:[%s57] sm:$0xff]
    %v641 = vld [vmem:[%s57 + $0x8] sm:$0xff]
    %v642 = vlaneseq
    %v643 = vshrl.u32 %v642, 7
    %v644 = vsub.s32 4, %v643
    %v645 = vrot.slane %v640, %v644
    %v646 = vmul.f32 %v645, %v640
    %v647 = vlaneseq
    %v648 = vshrl.u32 %v647, 7
    %v649 = vsub.s32 4, %v648
    %v650 = vrot.slane %v641, %v649
    %v651 = vmul.f32 %v650, %v641
    %v652 = vadd.f32 %v646, %v651
    %v653 = vmul.f32 %v645, %v641
    %v654 = vmul.f32 %v650, %v640
    %v655 = vsub.f32 %v653, %v654
    %v656 = vadd.f32 %v638, %v652
    %v657 = vadd.f32 %v639, %v655
    %v658 = vld [vmem:[%s76] sm:$0xff]
    %v659 = vld [vmem:[%s76 + $0x8] sm:$0xff]
    %v660 = vlaneseq
    %v661 = vshrl.u32 %v660, 7
    %v662 = vsub.s32 4, %v661
    %v663 = vrot.slane %v658, %v662
    %v664 = vmul.f32 %v663, %v658
    %v665 = vlaneseq
    %v666 = vshrl.u32 %v665, 7
    %v667 = vsub.s32 4, %v666
    %v668 = vrot.slane %v659, %v667
    %v669 = vmul.f32 %v668, %v659
    %v670 = vadd.f32 %v664, %v669
    %v671 = vmul.f32 %v663, %v659
    %v672 = vmul.f32 %v668, %v658
    %v673 = vsub.f32 %v671, %v672
    %v674 = vadd.f32 %v656, %v670
    %v675 = vadd.f32 %v657, %v673
    %v676 = vld [vmem:[%s95] sm:$0xff]
    %v677 = vld [vmem:[%s95 + $0x8] sm:$0xff]
    %v678 = vlaneseq
    %v679 = vshrl.u32 %v678, 7
    %v680 = vsub.s32 4, %v679
    %v681 = vrot.slane %v676, %v680
    %v682 = vmul.f32 %v681, %v676
    %v683 = vlaneseq
    %v684 = vshrl.u32 %v683, 7
    %v685 = vsub.s32 4, %v684
    %v686 = vrot.slane %v677, %v685
    %v687 = vmul.f32 %v686, %v677
    %v688 = vadd.f32 %v682, %v687
    %v689 = vmul.f32 %v681, %v677
    %v690 = vmul.f32 %v686, %v676
    %v691 = vsub.f32 %v689, %v690
    %v692 = vadd.f32 %v674, %v688
    %v693 = vadd.f32 %v675, %v691
    %v694 = vld [vmem:[%s114] sm:$0xff]
    %v695 = vld [vmem:[%s114 + $0x8] sm:$0xff]
    %v696 = vlaneseq
    %v697 = vshrl.u32 %v696, 7
    %v698 = vsub.s32 4, %v697
    %v699 = vrot.slane %v694, %v698
    %v700 = vmul.f32 %v699, %v694
    %v701 = vlaneseq
    %v702 = vshrl.u32 %v701, 7
    %v703 = vsub.s32 4, %v702
    %v704 = vrot.slane %v695, %v703
    %v705 = vmul.f32 %v704, %v695
    %v706 = vadd.f32 %v700, %v705
    %v707 = vmul.f32 %v699, %v695
    %v708 = vmul.f32 %v704, %v694
    %v709 = vsub.f32 %v707, %v708
    %v710 = vadd.f32 %v692, %v706
    %v711 = vadd.f32 %v693, %v709
    %v712 = vld [vmem:[%s133] sm:$0xff]
    %v713 = vld [vmem:[%s133 + $0x8] sm:$0xff]
    %v714 = vlaneseq
    %v715 = vshrl.u32 %v714, 7
    %v716 = vsub.s32 4, %v715
    %v717 = vrot.slane %v712, %v716
    %v718 = vmul.f32 %v717, %v712
    %v719 = vlaneseq
    %v720 = vshrl.u32 %v719, 7
    %v721 = vsub.s32 4, %v720
    %v722 = vrot.slane %v713, %v721
    %v723 = vmul.f32 %v722, %v713
    %v724 = vadd.f32 %v718, %v723
    %v725 = vmul.f32 %v717, %v713
    %v726 = vmul.f32 %v722, %v712
    %v727 = vsub.f32 %v725, %v726
    %v728 = vadd.f32 %v710, %v724
    %v729 = vadd.f32 %v711, %v727
    %v730 = vld [vmem:[%s152] sm:$0xff]
    %v731 = vld [vmem:[%s152 + $0x8] sm:$0xff]
    %v732 = vlaneseq
    %v733 = vshrl.u32 %v732, 7
    %v734 = vsub.s32 4, %v733
    %v735 = vrot.slane %v730, %v734
    %v736 = vmul.f32 %v735, %v730
    %v737 = vlaneseq
    %v738 = vshrl.u32 %v737, 7
    %v739 = vsub.s32 4, %v738
    %v740 = vrot.slane %v731, %v739
    %v741 = vmul.f32 %v740, %v731
    %v742 = vadd.f32 %v736, %v741
    %v743 = vmul.f32 %v735, %v731
    %v744 = vmul.f32 %v740, %v730
    %v745 = vsub.f32 %v743, %v744
    %v746 = vadd.f32 %v728, %v742
    %v747 = vadd.f32 %v729, %v745
    %748 = vst.msk [vmem:[%s1 + $0x20] sm:$0xff] %vm171, %v746
    %749 = vst.msk [vmem:[%s1 + $0x60] sm:$0xff] %vm171, %v747
    %v750 = vld [vmem:[#allocation2] sm:$0xff]
    %v751 = vld [vmem:[#allocation2 + $0x8] sm:$0xff]
    %v752 = vlaneseq
    %v753 = vshrl.u32 %v752, 7
    %v754 = vsub.s32 5, %v753
    %v755 = vrot.slane %v750, %v754
    %v756 = vmul.f32 %v755, %v750
    %v757 = vlaneseq
    %v758 = vshrl.u32 %v757, 7
    %v759 = vsub.s32 5, %v758
    %v760 = vrot.slane %v751, %v759
    %v761 = vmul.f32 %v760, %v751
    %v762 = vadd.f32 %v756, %v761
    %v763 = vmul.f32 %v755, %v751
    %v764 = vmul.f32 %v760, %v750
    %v765 = vsub.f32 %v763, %v764
    %v766 = vld [vmem:[%s38] sm:$0xff]
    %v767 = vld [vmem:[%s38 + $0x8] sm:$0xff]
    %v768 = vlaneseq
    %v769 = vshrl.u32 %v768, 7
    %v770 = vsub.s32 5, %v769
    %v771 = vrot.slane %v766, %v770
    %v772 = vmul.f32 %v771, %v766
    %v773 = vlaneseq
    %v774 = vshrl.u32 %v773, 7
    %v775 = vsub.s32 5, %v774
    %v776 = vrot.slane %v767, %v775
    %v777 = vmul.f32 %v776, %v767
    %v778 = vadd.f32 %v772, %v777
    %v779 = vmul.f32 %v771, %v767
    %v780 = vmul.f32 %v776, %v766
    %v781 = vsub.f32 %v779, %v780
    %v782 = vadd.f32 %v762, %v778
    %v783 = vadd.f32 %v765, %v781
    %v784 = vld [vmem:[%s57] sm:$0xff]
    %v785 = vld [vmem:[%s57 + $0x8] sm:$0xff]
    %v786 = vlaneseq
    %v787 = vshrl.u32 %v786, 7
    %v788 = vsub.s32 5, %v787
    %v789 = vrot.slane %v784, %v788
    %v790 = vmul.f32 %v789, %v784
    %v791 = vlaneseq
    %v792 = vshrl.u32 %v791, 7
    %v793 = vsub.s32 5, %v792
    %v794 = vrot.slane %v785, %v793
    %v795 = vmul.f32 %v794, %v785
    %v796 = vadd.f32 %v790, %v795
    %v797 = vmul.f32 %v789, %v785
    %v798 = vmul.f32 %v794, %v784
    %v799 = vsub.f32 %v797, %v798
    %v800 = vadd.f32 %v782, %v796
    %v801 = vadd.f32 %v783, %v799
    %v802 = vld [vmem:[%s76] sm:$0xff]
    %v803 = vld [vmem:[%s76 + $0x8] sm:$0xff]
    %v804 = vlaneseq
    %v805 = vshrl.u32 %v804, 7
    %v806 = vsub.s32 5, %v805
    %v807 = vrot.slane %v802, %v806
    %v808 = vmul.f32 %v807, %v802
    %v809 = vlaneseq
    %v810 = vshrl.u32 %v809, 7
    %v811 = vsub.s32 5, %v810
    %v812 = vrot.slane %v803, %v811
    %v813 = vmul.f32 %v812, %v803
    %v814 = vadd.f32 %v808, %v813
    %v815 = vmul.f32 %v807, %v803
    %v816 = vmul.f32 %v812, %v802
    %v817 = vsub.f32 %v815, %v816
    %v818 = vadd.f32 %v800, %v814
    %v819 = vadd.f32 %v801, %v817
    %v820 = vld [vmem:[%s95] sm:$0xff]
    %v821 = vld [vmem:[%s95 + $0x8] sm:$0xff]
    %v822 = vlaneseq
    %v823 = vshrl.u32 %v822, 7
    %v824 = vsub.s32 5, %v823
    %v825 = vrot.slane %v820, %v824
    %v826 = vmul.f32 %v825, %v820
    %v827 = vlaneseq
    %v828 = vshrl.u32 %v827, 7
    %v829 = vsub.s32 5, %v828
    %v830 = vrot.slane %v821, %v829
    %v831 = vmul.f32 %v830, %v821
    %v832 = vadd.f32 %v826, %v831
    %v833 = vmul.f32 %v825, %v821
    %v834 = vmul.f32 %v830, %v820
    %v835 = vsub.f32 %v833, %v834
    %v836 = vadd.f32 %v818, %v832
    %v837 = vadd.f32 %v819, %v835
    %v838 = vld [vmem:[%s114] sm:$0xff]
    %v839 = vld [vmem:[%s114 + $0x8] sm:$0xff]
    %v840 = vlaneseq
    %v841 = vshrl.u32 %v840, 7
    %v842 = vsub.s32 5, %v841
    %v843 = vrot.slane %v838, %v842
    %v844 = vmul.f32 %v843, %v838
    %v845 = vlaneseq
    %v846 = vshrl.u32 %v845, 7
    %v847 = vsub.s32 5, %v846
    %v848 = vrot.slane %v839, %v847
    %v849 = vmul.f32 %v848, %v839
    %v850 = vadd.f32 %v844, %v849
    %v851 = vmul.f32 %v843, %v839
    %v852 = vmul.f32 %v848, %v838
    %v853 = vsub.f32 %v851, %v852
    %v854 = vadd.f32 %v836, %v850
    %v855 = vadd.f32 %v837, %v853
    %v856 = vld [vmem:[%s133] sm:$0xff]
    %v857 = vld [vmem:[%s133 + $0x8] sm:$0xff]
    %v858 = vlaneseq
    %v859 = vshrl.u32 %v858, 7
    %v860 = vsub.s32 5, %v859
    %v861 = vrot.slane %v856, %v860
    %v862 = vmul.f32 %v861, %v856
    %v863 = vlaneseq
    %v864 = vshrl.u32 %v863, 7
    %v865 = vsub.s32 5, %v864
    %v866 = vrot.slane %v857, %v865
    %v867 = vmul.f32 %v866, %v857
    %v868 = vadd.f32 %v862, %v867
    %v869 = vmul.f32 %v861, %v857
    %v870 = vmul.f32 %v866, %v856
    %v871 = vsub.f32 %v869, %v870
    %v872 = vadd.f32 %v854, %v868
    %v873 = vadd.f32 %v855, %v871
    %v874 = vld [vmem:[%s152] sm:$0xff]
    %v875 = vld [vmem:[%s152 + $0x8] sm:$0xff]
    %v876 = vlaneseq
    %v877 = vshrl.u32 %v876, 7
    %v878 = vsub.s32 5, %v877
    %v879 = vrot.slane %v874, %v878
    %v880 = vmul.f32 %v879, %v874
    %v881 = vlaneseq
    %v882 = vshrl.u32 %v881, 7
    %v883 = vsub.s32 5, %v882
    %v884 = vrot.slane %v875, %v883
    %v885 = vmul.f32 %v884, %v875
    %v886 = vadd.f32 %v880, %v885
    %v887 = vmul.f32 %v879, %v875
    %v888 = vmul.f32 %v884, %v874
    %v889 = vsub.f32 %v887, %v888
    %v890 = vadd.f32 %v872, %v886
    %v891 = vadd.f32 %v873, %v889
    %892 = vst.msk [vmem:[%s1 + $0x28] sm:$0xff] %vm171, %v890
    %893 = vst.msk [vmem:[%s1 + $0x68] sm:$0xff] %vm171, %v891
    %v894 = vld [vmem:[#allocation2] sm:$0xff]
    %v895 = vld [vmem:[#allocation2 + $0x8] sm:$0xff]
    %v896 = vlaneseq
    %v897 = vshrl.u32 %v896, 7
    %v898 = vsub.s32 6, %v897
    %v899 = vrot.slane %v894, %v898
    %v900 = vmul.f32 %v899, %v894
    %v901 = vlaneseq
    %v902 = vshrl.u32 %v901, 7
    %v903 = vsub.s32 6, %v902
    %v904 = vrot.slane %v895, %v903
    %v905 = vmul.f32 %v904, %v895
    %v906 = vadd.f32 %v900, %v905
    %v907 = vmul.f32 %v899, %v895
    %v908 = vmul.f32 %v904, %v894
    %v909 = vsub.f32 %v907, %v908
    %v910 = vld [vmem:[%s38] sm:$0xff]
    %v911 = vld [vmem:[%s38 + $0x8] sm:$0xff]
    %v912 = vlaneseq
    %v913 = vshrl.u32 %v912, 7
    %v914 = vsub.s32 6, %v913
    %v915 = vrot.slane %v910, %v914
    %v916 = vmul.f32 %v915, %v910
    %v917 = vlaneseq
    %v918 = vshrl.u32 %v917, 7
    %v919 = vsub.s32 6, %v918
    %v920 = vrot.slane %v911, %v919
    %v921 = vmul.f32 %v920, %v911
    %v922 = vadd.f32 %v916, %v921
    %v923 = vmul.f32 %v915, %v911
    %v924 = vmul.f32 %v920, %v910
    %v925 = vsub.f32 %v923, %v924
    %v926 = vadd.f32 %v906, %v922
    %v927 = vadd.f32 %v909, %v925
    %v928 = vld [vmem:[%s57] sm:$0xff]
    %v929 = vld [vmem:[%s57 + $0x8] sm:$0xff]
    %v930 = vlaneseq
    %v931 = vshrl.u32 %v930, 7
    %v932 = vsub.s32 6, %v931
    %v933 = vrot.slane %v928, %v932
    %v934 = vmul.f32 %v933, %v928
    %v935 = vlaneseq
    %v936 = vshrl.u32 %v935, 7
    %v937 = vsub.s32 6, %v936
    %v938 = vrot.slane %v929, %v937
    %v939 = vmul.f32 %v938, %v929
    %v940 = vadd.f32 %v934, %v939
    %v941 = vmul.f32 %v933, %v929
    %v942 = vmul.f32 %v938, %v928
    %v943 = vsub.f32 %v941, %v942
    %v944 = vadd.f32 %v926, %v940
    %v945 = vadd.f32 %v927, %v943
    %v946 = vld [vmem:[%s76] sm:$0xff]
    %v947 = vld [vmem:[%s76 + $0x8] sm:$0xff]
    %v948 = vlaneseq
    %v949 = vshrl.u32 %v948, 7
    %v950 = vsub.s32 6, %v949
    %v951 = vrot.slane %v946, %v950
    %v952 = vmul.f32 %v951, %v946
    %v953 = vlaneseq
    %v954 = vshrl.u32 %v953, 7
    %v955 = vsub.s32 6, %v954
    %v956 = vrot.slane %v947, %v955
    %v957 = vmul.f32 %v956, %v947
    %v958 = vadd.f32 %v952, %v957
    %v959 = vmul.f32 %v951, %v947
    %v960 = vmul.f32 %v956, %v946
    %v961 = vsub.f32 %v959, %v960
    %v962 = vadd.f32 %v944, %v958
    %v963 = vadd.f32 %v945, %v961
    %v964 = vld [vmem:[%s95] sm:$0xff]
    %v965 = vld [vmem:[%s95 + $0x8] sm:$0xff]
    %v966 = vlaneseq
    %v967 = vshrl.u32 %v966, 7
    %v968 = vsub.s32 6, %v967
    %v969 = vrot.slane %v964, %v968
    %v970 = vmul.f32 %v969, %v964
    %v971 = vlaneseq
    %v972 = vshrl.u32 %v971, 7
    %v973 = vsub.s32 6, %v972
    %v974 = vrot.slane %v965, %v973
    %v975 = vmul.f32 %v974, %v965
    %v976 = vadd.f32 %v970, %v975
    %v977 = vmul.f32 %v969, %v965
    %v978 = vmul.f32 %v974, %v964
    %v979 = vsub.f32 %v977, %v978
    %v980 = vadd.f32 %v962, %v976
    %v981 = vadd.f32 %v963, %v979
    %v982 = vld [vmem:[%s114] sm:$0xff]
    %v983 = vld [vmem:[%s114 + $0x8] sm:$0xff]
    %v984 = vlaneseq
    %v985 = vshrl.u32 %v984, 7
    %v986 = vsub.s32 6, %v985
    %v987 = vrot.slane %v982, %v986
    %v988 = vmul.f32 %v987, %v982
    %v989 = vlaneseq
    %v990 = vshrl.u32 %v989, 7
    %v991 = vsub.s32 6, %v990
    %v992 = vrot.slane %v983, %v991
    %v993 = vmul.f32 %v992, %v983
    %v994 = vadd.f32 %v988, %v993
    %v995 = vmul.f32 %v987, %v983
    %v996 = vmul.f32 %v992, %v982
    %v997 = vsub.f32 %v995, %v996
    %v998 = vadd.f32 %v980, %v994
    %v999 = vadd.f32 %v981, %v997
    %v1000 = vld [vmem:[%s133] sm:$0xff]
    %v1001 = vld [vmem:[%s133 + $0x8] sm:$0xff]
    %v1002 = vlaneseq
    %v1003 = vshrl.u32 %v1002, 7
    %v1004 = vsub.s32 6, %v1003
    %v1005 = vrot.slane %v1000, %v1004
    %v1006 = vmul.f32 %v1005, %v1000
    %v1007 = vlaneseq
    %v1008 = vshrl.u32 %v1007, 7
    %v1009 = vsub.s32 6, %v1008
    %v1010 = vrot.slane %v1001, %v1009
    %v1011 = vmul.f32 %v1010, %v1001
    %v1012 = vadd.f32 %v1006, %v1011
    %v1013 = vmul.f32 %v1005, %v1001
    %v1014 = vmul.f32 %v1010, %v1000
    %v1015 = vsub.f32 %v1013, %v1014
    %v1016 = vadd.f32 %v998, %v1012
    %v1017 = vadd.f32 %v999, %v1015
    %v1018 = vld [vmem:[%s152] sm:$0xff]
    %v1019 = vld [vmem:[%s152 + $0x8] sm:$0xff]
    %v1020 = vlaneseq
    %v1021 = vshrl.u32 %v1020, 7
    %v1022 = vsub.s32 6, %v1021
    %v1023 = vrot.slane %v1018, %v1022
    %v1024 = vmul.f32 %v1023, %v1018
    %v1025 = vlaneseq
    %v1026 = vshrl.u32 %v1025, 7
    %v1027 = vsub.s32 6, %v1026
    %v1028 = vrot.slane %v1019, %v1027
    %v1029 = vmul.f32 %v1028, %v1019
    %v1030 = vadd.f32 %v1024, %v1029
    %v1031 = vmul.f32 %v1023, %v1019
    %v1032 = vmul.f32 %v1028, %v1018
    %v1033 = vsub.f32 %v1031, %v1032
    %v1034 = vadd.f32 %v1016, %v1030
    %v1035 = vadd.f32 %v1017, %v1033
    %1036 = vst.msk [vmem:[%s1 + $0x30] sm:$0xff] %vm171, %v1034
    %1037 = vst.msk [vmem:[%s1 + $0x70] sm:$0xff] %vm171, %v1035
    %v1038 = vld [vmem:[#allocation2] sm:$0xff]
    %v1039 = vld [vmem:[#allocation2 + $0x8] sm:$0xff]
    %v1040 = vlaneseq
    %v1041 = vshrl.u32 %v1040, 7
    %v1042 = vsub.s32 7, %v1041
    %v1043 = vrot.slane %v1038, %v1042
    %v1044 = vmul.f32 %v1043, %v1038
    %v1045 = vlaneseq
    %v1046 = vshrl.u32 %v1045, 7
    %v1047 = vsub.s32 7, %v1046
    %v1048 = vrot.slane %v1039, %v1047
    %v1049 = vmul.f32 %v1048, %v1039
    %v1050 = vadd.f32 %v1044, %v1049
    %v1051 = vmul.f32 %v1043, %v1039
    %v1052 = vmul.f32 %v1048, %v1038
    %v1053 = vsub.f32 %v1051, %v1052
    %v1054 = vld [vmem:[%s38] sm:$0xff]
    %v1055 = vld [vmem:[%s38 + $0x8] sm:$0xff]
    %v1056 = vlaneseq
    %v1057 = vshrl.u32 %v1056, 7
    %v1058 = vsub.s32 7, %v1057
    %v1059 = vrot.slane %v1054, %v1058
    %v1060 = vmul.f32 %v1059, %v1054
    %v1061 = vlaneseq
    %v1062 = vshrl.u32 %v1061, 7
    %v1063 = vsub.s32 7, %v1062
    %v1064 = vrot.slane %v1055, %v1063
    %v1065 = vmul.f32 %v1064, %v1055
    %v1066 = vadd.f32 %v1060, %v1065
    %v1067 = vmul.f32 %v1059, %v1055
    %v1068 = vmul.f32 %v1064, %v1054
    %v1069 = vsub.f32 %v1067, %v1068
    %v1070 = vadd.f32 %v1050, %v1066
    %v1071 = vadd.f32 %v1053, %v1069
    %v1072 = vld [vmem:[%s57] sm:$0xff]
    %v1073 = vld [vmem:[%s57 + $0x8] sm:$0xff]
    %v1074 = vlaneseq
    %v1075 = vshrl.u32 %v1074, 7
    %v1076 = vsub.s32 7, %v1075
    %v1077 = vrot.slane %v1072, %v1076
    %v1078 = vmul.f32 %v1077, %v1072
    %v1079 = vlaneseq
    %v1080 = vshrl.u32 %v1079, 7
    %v1081 = vsub.s32 7, %v1080
    %v1082 = vrot.slane %v1073, %v1081
    %v1083 = vmul.f32 %v1082, %v1073
    %v1084 = vadd.f32 %v1078, %v1083
    %v1085 = vmul.f32 %v1077, %v1073
    %v1086 = vmul.f32 %v1082, %v1072
    %v1087 = vsub.f32 %v1085, %v1086
    %v1088 = vadd.f32 %v1070, %v1084
    %v1089 = vadd.f32 %v1071, %v1087
    %v1090 = vld [vmem:[%s76] sm:$0xff]
    %v1091 = vld [vmem:[%s76 + $0x8] sm:$0xff]
    %v1092 = vlaneseq
    %v1093 = vshrl.u32 %v1092, 7
    %v1094 = vsub.s32 7, %v1093
    %v1095 = vrot.slane %v1090, %v1094
    %v1096 = vmul.f32 %v1095, %v1090
    %v1097 = vlaneseq
    %v1098 = vshrl.u32 %v1097, 7
    %v1099 = vsub.s32 7, %v1098
    %v1100 = vrot.slane %v1091, %v1099
    %v1101 = vmul.f32 %v1100, %v1091
    %v1102 = vadd.f32 %v1096, %v1101
    %v1103 = vmul.f32 %v1095, %v1091
    %v1104 = vmul.f32 %v1100, %v1090
    %v1105 = vsub.f32 %v1103, %v1104
    %v1106 = vadd.f32 %v1088, %v1102
    %v1107 = vadd.f32 %v1089, %v1105
    %v1108 = vld [vmem:[%s95] sm:$0xff]
    %v1109 = vld [vmem:[%s95 + $0x8] sm:$0xff]
    %v1110 = vlaneseq
    %v1111 = vshrl.u32 %v1110, 7
    %v1112 = vsub.s32 7, %v1111
    %v1113 = vrot.slane %v1108, %v1112
    %v1114 = vmul.f32 %v1113, %v1108
    %v1115 = vlaneseq
    %v1116 = vshrl.u32 %v1115, 7
    %v1117 = vsub.s32 7, %v1116
    %v1118 = vrot.slane %v1109, %v1117
    %v1119 = vmul.f32 %v1118, %v1109
    %v1120 = vadd.f32 %v1114, %v1119
    %v1121 = vmul.f32 %v1113, %v1109
    %v1122 = vmul.f32 %v1118, %v1108
    %v1123 = vsub.f32 %v1121, %v1122
    %v1124 = vadd.f32 %v1106, %v1120
    %v1125 = vadd.f32 %v1107, %v1123
    %v1126 = vld [vmem:[%s114] sm:$0xff]
    %v1127 = vld [vmem:[%s114 + $0x8] sm:$0xff]
    %v1128 = vlaneseq
    %v1129 = vshrl.u32 %v1128, 7
    %v1130 = vsub.s32 7, %v1129
    %v1131 = vrot.slane %v1126, %v1130
    %v1132 = vmul.f32 %v1131, %v1126
    %v1133 = vlaneseq
    %v1134 = vshrl.u32 %v1133, 7
    %v1135 = vsub.s32 7, %v1134
    %v1136 = vrot.slane %v1127, %v1135
    %v1137 = vmul.f32 %v1136, %v1127
    %v1138 = vadd.f32 %v1132, %v1137
    %v1139 = vmul.f32 %v1131, %v1127
    %v1140 = vmul.f32 %v1136, %v1126
    %v1141 = vsub.f32 %v1139, %v1140
    %v1142 = vadd.f32 %v1124, %v1138
    %v1143 = vadd.f32 %v1125, %v1141
    %v1144 = vld [vmem:[%s133] sm:$0xff]
    %v1145 = vld [vmem:[%s133 + $0x8] sm:$0xff]
    %v1146 = vlaneseq
    %v1147 = vshrl.u32 %v1146, 7
    %v1148 = vsub.s32 7, %v1147
    %v1149 = vrot.slane %v1144, %v1148
    %v1150 = vmul.f32 %v1149, %v1144
    %v1151 = vlaneseq
    %v1152 = vshrl.u32 %v1151, 7
    %v1153 = vsub.s32 7, %v1152
    %v1154 = vrot.slane %v1145, %v1153
    %v1155 = vmul.f32 %v1154, %v1145
    %v1156 = vadd.f32 %v1150, %v1155
    %v1157 = vmul.f32 %v1149, %v1145
    %v1158 = vmul.f32 %v1154, %v1144
    %v1159 = vsub.f32 %v1157, %v1158
    %v1160 = vadd.f32 %v1142, %v1156
    %v1161 = vadd.f32 %v1143, %v1159
    %v1162 = vld [vmem:[%s152] sm:$0xff]
    %v1163 = vld [vmem:[%s152 + $0x8] sm:$0xff]
    %v1164 = vlaneseq
    %v1165 = vshrl.u32 %v1164, 7
    %v1166 = vsub.s32 7, %v1165
    %v1167 = vrot.slane %v1162, %v1166
    %v1168 = vmul.f32 %v1167, %v1162
    %v1169 = vlaneseq
    %v1170 = vshrl.u32 %v1169, 7
    %v1171 = vsub.s32 7, %v1170
    %v1172 = vrot.slane %v1163, %v1171
    %v1173 = vmul.f32 %v1172, %v1163
    %v1174 = vadd.f32 %v1168, %v1173
    %v1175 = vmul.f32 %v1167, %v1163
    %v1176 = vmul.f32 %v1172, %v1162
    %v1177 = vsub.f32 %v1175, %v1176
    %v1178 = vadd.f32 %v1160, %v1174
    %v1179 = vadd.f32 %v1161, %v1177
    %1180 = vst.msk [vmem:[%s1 + $0x38] sm:$0xff] %vm171, %v1178
    %1181 = vst.msk [vmem:[%s1 + $0x78] sm:$0xff] %vm171, %v1179
    // Predicated region
    $region10: #{tpu_custom_call.1} parent=1 // pred_check
      _
    $region11: #{tpu_custom_call.1} parent=1 // pred_check_branch
      %1183 = sbr.rel (0) target = $region13
    $region12: #{tpu_custom_call.1} parent=1 // pred_region
      _
    $region13: #{tpu_custom_call.1} parent=1 // pred_fallthru
      _
    // Predicated region
    $region14: #{tpu_custom_call.1} parent=1 // pred_check
      _
    $region15: #{tpu_custom_call.1} parent=1 // pred_check_branch
      %1185 = sbr.rel (0) target = $region17
    $region16: #{tpu_custom_call.1} parent=1 // pred_region
      _
    $region17: #{tpu_custom_call.1} parent=1 // pred_fallthru
      _
    %1186 = vsyncpa [#allocation3], 1

</llo_original>
